<compile_context>
chip_gen: v5e
topology: v5e:2x2
jax: 0.10.0
libtpu: 0.0.40
codegen_flags: <defaults>
</compile_context>

<pallas_src>
import functools

import jax
import jax.numpy as jnp
from jax.experimental import pallas as pl
from jax.experimental.pallas import tpu as pltpu

LANES = 128
_TOP = 8  # top halo rows in the input slab (one sublane tile -> aligned stores)

# tanh-GELU constants:  C0*(x + 0.044715*x^3) == x*(C0 + C1*x^2)
_C0 = 0.7978845608028654
_C1 = _C0 * 0.044715


def _round_up(x, m):
    return (x + m - 1) // m * m


# ---------------------------------------------------------------------------
# Fused Pallas kernel: pad -> conv1 -> tanh-GELU chain -> conv2 (epilogue
# pre-folded into the conv2 parameters)
# ---------------------------------------------------------------------------
def _fused_forward_kernel(x_ref, w1_ref, b1_ref, w2_ref, b2_ref, o_ref,
                          xpad_ref, *, h, w, r1, r2, lanes):
    """One batch element, fully VMEM-resident.

    x_ref   : (3, h, w)       f32 VMEM  raw (unpadded) input channels.
    w1_ref  : (48,)           f32 SMEM  conv1 weights, (cin, kh, kw) row-major.
    b1_ref  : (1,)            f32 SMEM
    w2_ref  : (50,)           f32 SMEM  conv2 weights with epilogue folded in.
    b2_ref  : (2,)            f32 SMEM  conv2 bias with epilogue folded in.
    o_ref   : (2, r2, lanes)  f32 VMEM  rows [0,H2) / lanes [0,W2) are valid.
    xpad_ref: (3, rx, lanes)  f32 VMEM  scratch: zero-halo input slab; image
                                        rows live at [_TOP, _TOP+h), cols at
                                        [0, w); everything else is zero.
    """
    # ---- build the zero-halo slab (replaces the external jnp.pad HBM pass).
    # Re-zeroed every grid step so correctness never depends on per-core
    # scratch state; all stores are sublane/lane-aligned.
    xpad_ref[...] = jnp.zeros_like(xpad_ref)
    for c in range(3):
        xpad_ref[c, _TOP:_TOP + h, :w] = x_ref[c]

    # ---- conv1 (3 -> 1, k=4, stride=1, pad=1): VPU shift-and-accumulate ----
    # v1[y, x] = sum_{c,i,j} in[y+i-1, x+j-1] * w1[c,i,j]  (zeros off-image)
    v1 = jnp.full((r1, lanes), b1_ref[0], dtype=jnp.float32)
    for c in range(3):
        base = xpad_ref[c]                                   # (rx, lanes)
        for i in range(4):
            rows = base[_TOP + i - 1:_TOP + i - 1 + r1, :]   # row shift i-1
            for j in range(4):
                s = j - 1                                    # lane shift
                if s == 0:
                    tap = rows
                elif s < 0:
                    # column x-1: roll right by 1 (lane 127 is zero pad, so
                    # lane 0 correctly sees conv1's left zero-padding).
                    tap = pltpu.roll(rows, 1, 1)
                else:
                    # column x+s: roll left by s; wrapped lanes land at
                    # x >= 128-s which are never valid output columns
                    # (requires w <= 127, asserted in the wrapper).
                    tap = pltpu.roll(rows, lanes - s, 1)
                v1 = v1 + w1_ref[c * 16 + i * 4 + j] * tap

    # ---- fused tanh-GELU chain (v2..v10 of the reference) -------------------
    v10 = (0.5 * v1) * (jnp.tanh(v1 * (_C0 + _C1 * (v1 * v1))) + 1.0)

    # ---- conv2 (1 -> 2, k=5, pad=0); `*0.060631 + 1` already folded into
    # (w2, b2).  Each shifted tap is produced once and shared by both output
    # channels (review: halves conv2's XLU work).
    acc0 = jnp.full((r2, lanes), b2_ref[0], dtype=jnp.float32)
    acc1 = jnp.full((r2, lanes), b2_ref[1], dtype=jnp.float32)
    for i in range(5):
        vi = v10[i:i + r2, :]                                # static row shift
        for j in range(5):
            tap = vi if j == 0 else pltpu.roll(vi, lanes - j, 1)
            acc0 = acc0 + w2_ref[i * 5 + j] * tap
            acc1 = acc1 + w2_ref[25 + i * 5 + j] * tap
    o_ref[0] = acc0
    o_ref[1] = acc1


# ---------------------------------------------------------------------------
# Wrappers
# ---------------------------------------------------------------------------
def prepare_params(params):
    """Offline layout plumbing: flatten conv params and fold the affine
    epilogue (v14 * 0.060631 + 1) into conv2's weights/bias."""
    w1, b1, w2, b2 = params
    return (jnp.asarray(w1, jnp.float32).reshape(-1),               # (48,)
            jnp.asarray(b1, jnp.float32).reshape(-1),               # (1,)
            (jnp.asarray(w2, jnp.float32) * 0.060631).reshape(-1),  # (50,)
            jnp.asarray(b2, jnp.float32) * 0.060631 + 1.0)          # (2,)


@jax.jit
def model_forward_padded(x, prepared_params):
    """Hot path.  Returns the lane-dense kernel output (N, 2, r2, 128);
    rows [0, H-5) and lanes [0, W-5) hold the model result.  Consumers that can
    accept this layout should use it directly (avoids an extra HBM pass)."""
    w1f, b1f, w2f, b2f = prepared_params
    n, cin, h, w = x.shape
    assert cin == 3
    # pltpu.roll lane shifts wrap through the zero-pad lanes; the right edge is
    # only correct while the image width fits strictly inside 128 lanes.
    assert w <= LANES - 1, "kernel requires W <= 127 (lane-wrap invariant)"

    h_out2 = h - 5                        # conv1 (k4,p1) then conv2 (k5,p0)
    r2 = _round_up(h_out2, 8)             # output slab rows (sublane aligned)
    r1 = r2 + 4                           # conv1/GELU slab rows (conv2 +4 rows)
    rx = _round_up(_TOP + r1 + 2, 8)      # input slab rows (top halo + conv1 +2)

    kernel = functools.partial(_fused_forward_kernel,
                               h=h, w=w, r1=r1, r2=r2, lanes=LANES)
    return pl.pallas_call(
        kernel,
        grid=(n,),
        in_specs=[
            pl.BlockSpec((None, 3, h, w), lambda b: (b, 0, 0, 0)),
            pl.BlockSpec(memory_space=pltpu.MemorySpace.SMEM),  # w1 (flat)
            pl.BlockSpec(memory_space=pltpu.MemorySpace.SMEM),  # b1
            pl.BlockSpec(memory_space=pltpu.MemorySpace.SMEM),  # w2 (folded)
            pl.BlockSpec(memory_space=pltpu.MemorySpace.SMEM),  # b2 (folded)
        ],
        out_specs=pl.BlockSpec((None, 2, r2, LANES), lambda b: (b, 0, 0, 0)),
        out_shape=jax.ShapeDtypeStruct((n, 2, r2, LANES), jnp.float32),
        scratch_shapes=[pltpu.VMEM((3, rx, LANES), jnp.float32)],
        compiler_params=pltpu.CompilerParams(
            dimension_semantics=("parallel",)),
    )(x, w1f, b1f, w2f, b2f)


def model_forward(x, prepared_params):
    """Exact NCHW result (N, 2, H-5, W-5).  The slice is layout plumbing kept
    outside the fused hot path."""
    _, _, h, w = x.shape
    return model_forward_padded(x, prepared_params)[:, :, :h - 5, :w - 5]


# ---------------------------------------------------------------------------
# Pure-JAX reference (for correctness check) and parameter init
# ---------------------------------------------------------------------------
def reference_forward(x, params):
    w1, b1, w2, b2 = params
    dn = ("NCHW", "OIHW", "NCHW")
    v1 = jax.lax.conv_general_dilated(
        x, w1, window_strides=(1, 1), padding=((1, 1), (1, 1)),
        dimension_numbers=dn) + b1.reshape(1, -1, 1, 1)
    v10 = (v1 * 0.5) * (jnp.tanh(0.7978845608028654 *
                                 (v1 + 0.044715 * v1 * v1 * v1)) + 1.0)
    v14 = jax.lax.conv_general_dilated(
        v10, w2, window_strides=(1, 1), padding=((0, 0), (0, 0)),
        dimension_numbers=dn) + b2.reshape(1, -1, 1, 1)
    return v14 * 0.060631 + 1.0


def init_params(key):
    k1, k2, k3, k4 = jax.random.split(key, 4)
    fan1 = 3 * 4 * 4
    bound1 = 1.0 / jnp.sqrt(fan1)
    w1 = jax.random.uniform(k1, (1, 3, 4, 4), jnp.float32, -bound1, bound1)
    b1 = jax.random.uniform(k2, (1,), jnp.float32, -bound1, bound1)
    fan2 = 1 * 5 * 5
    bound2 = 1.0 / jnp.sqrt(fan2)
    w2 = jax.random.uniform(k3, (2, 1, 5, 5), jnp.float32, -bound2, bound2)
    b2 = jax.random.uniform(k4, (2,), jnp.float32, -bound2, bound2)
    return w1, b1, w2, b2


if __name__ == "__main__":
    key = jax.random.PRNGKey(0)
    kx, kp = jax.random.split(key)
    x = jax.random.normal(kx, (2, 3, 64, 64), jnp.float32)   # small NCHW input
    params = init_params(kp)
    prepared = prepare_params(params)

    out = model_forward(x, prepared)
    out = jax.block_until_ready(out)
    assert out.shape == (2, 2, 59, 59), out.shape

    ref = reference_forward(x, params)
    max_err = float(jnp.max(jnp.abs(out - ref)))
    assert max_err < 1e-4, f"max abs error vs reference: {max_err}"
    print("KERNEL_OK")
</pallas_src>

<mosaic_0001>
module attributes {stable_mosaic.version = 11 : i64} {
  func.func @_fused_forward_kernel(%arg0: i32, %arg1: memref<1x3x64x64xf32, #tpu.memory_space<vmem>>, %arg2: memref<48xf32, #tpu.memory_space<smem>>, %arg3: memref<1xf32, #tpu.memory_space<smem>>, %arg4: memref<50xf32, #tpu.memory_space<smem>>, %arg5: memref<2xf32, #tpu.memory_space<smem>>, %arg6: memref<1x2x64x128xf32, #tpu.memory_space<vmem>>, %arg7: memref<3x80x128xf32, #tpu.memory_space<vmem>>) attributes {dimension_semantics = [#tpu.dimension_semantics<parallel>], iteration_bounds = array<i64: 2>, scalar_prefetch = 0 : i64, scratch_operands = 1 : i64, tpu.core_type = #tpu.core_type<tc>, window_params = [{transform_indices = @transform_0, window_bounds = array<i64: 1, 3, 64, 64>}, {transform_indices = @transform_1, window_bounds = array<i64: 48>}, {transform_indices = @transform_2, window_bounds = array<i64: 1>}, {transform_indices = @transform_3, window_bounds = array<i64: 50>}, {transform_indices = @transform_4, window_bounds = array<i64: 2>}, {transform_indices = @transform_5, window_bounds = array<i64: 1, 2, 64, 128>}]} {
    %cst = arith.constant 0.000000e+00 : f32
    %0 = vector.broadcast %cst : f32 to vector<3x80x128xf32>
    %c0 = arith.constant 0 : index
    %c0_0 = arith.constant 0 : index
    %c0_1 = arith.constant 0 : index
    %1 = vector.load %arg7[%c0, %c0_0, %c0_1] : memref<3x80x128xf32, #tpu.memory_space<vmem>>, vector<3x80x128xf32>
    tpu.vector_store %arg7[%c0, %c0_0, %c0_1], %0 {strides = array<i32>} : memref<3x80x128xf32, #tpu.memory_space<vmem>>, vector<3x80x128xf32>,
    %c0_2 = arith.constant 0 : index
    %c0_3 = arith.constant 0 : index
    %c0_4 = arith.constant 0 : index
    %c0_5 = arith.constant 0 : index
    %2 = vector.load %arg1[%c0_2, %c0_3, %c0_4, %c0_5] : memref<1x3x64x64xf32, #tpu.memory_space<vmem>>, vector<1x1x64x64xf32>
    %3 = vector.shape_cast %2 : vector<1x1x64x64xf32> to vector<64x64xf32>
    %c0_6 = arith.constant 0 : index
    %c8 = arith.constant 8 : index
    %c0_7 = arith.constant 0 : index
    %4 = vector.load %arg7[%c0_6, %c8, %c0_7] : memref<3x80x128xf32, #tpu.memory_space<vmem>>, vector<1x64x64xf32>
    %5 = vector.shape_cast %4 : vector<1x64x64xf32> to vector<64x64xf32>
    %6 = vector.shape_cast %3 : vector<64x64xf32> to vector<1x64x64xf32>
    tpu.vector_store %arg7[%c0_6, %c8, %c0_7], %6 {strides = array<i32>} : memref<3x80x128xf32, #tpu.memory_space<vmem>>, vector<1x64x64xf32>,
    %c0_8 = arith.constant 0 : index
    %c1 = arith.constant 1 : index
    %c0_9 = arith.constant 0 : index
    %c0_10 = arith.constant 0 : index
    %7 = vector.load %arg1[%c0_8, %c1, %c0_9, %c0_10] : memref<1x3x64x64xf32, #tpu.memory_space<vmem>>, vector<1x1x64x64xf32>
    %8 = vector.shape_cast %7 : vector<1x1x64x64xf32> to vector<64x64xf32>
    %c1_11 = arith.constant 1 : index
    %c8_12 = arith.constant 8 : index
    %c0_13 = arith.constant 0 : index
    %9 = vector.load %arg7[%c1_11, %c8_12, %c0_13] : memref<3x80x128xf32, #tpu.memory_space<vmem>>, vector<1x64x64xf32>
    %10 = vector.shape_cast %9 : vector<1x64x64xf32> to vector<64x64xf32>
    %11 = vector.shape_cast %8 : vector<64x64xf32> to vector<1x64x64xf32>
    tpu.vector_store %arg7[%c1_11, %c8_12, %c0_13], %11 {strides = array<i32>} : memref<3x80x128xf32, #tpu.memory_space<vmem>>, vector<1x64x64xf32>,
    %c0_14 = arith.constant 0 : index
    %c2 = arith.constant 2 : index
    %c0_15 = arith.constant 0 : index
    %c0_16 = arith.constant 0 : index
    %12 = vector.load %arg1[%c0_14, %c2, %c0_15, %c0_16] : memref<1x3x64x64xf32, #tpu.memory_space<vmem>>, vector<1x1x64x64xf32>
    %13 = vector.shape_cast %12 : vector<1x1x64x64xf32> to vector<64x64xf32>
    %c2_17 = arith.constant 2 : index
    %c8_18 = arith.constant 8 : index
    %c0_19 = arith.constant 0 : index
    %14 = vector.load %arg7[%c2_17, %c8_18, %c0_19] : memref<3x80x128xf32, #tpu.memory_space<vmem>>, vector<1x64x64xf32>
    %15 = vector.shape_cast %14 : vector<1x64x64xf32> to vector<64x64xf32>
    %16 = vector.shape_cast %13 : vector<64x64xf32> to vector<1x64x64xf32>
    tpu.vector_store %arg7[%c2_17, %c8_18, %c0_19], %16 {strides = array<i32>} : memref<3x80x128xf32, #tpu.memory_space<vmem>>, vector<1x64x64xf32>,
    %c0_20 = arith.constant 0 : index
    %17 = memref.load %arg3[%c0_20] : memref<1xf32, #tpu.memory_space<smem>>
    %18 = vector.broadcast %17 : f32 to vector<68x128xf32>
    %c0_21 = arith.constant 0 : index
    %c0_22 = arith.constant 0 : index
    %c0_23 = arith.constant 0 : index
    %19 = vector.load %arg7[%c0_21, %c0_22, %c0_23] : memref<3x80x128xf32, #tpu.memory_space<vmem>>, vector<1x80x128xf32>
    %20 = vector.shape_cast %19 : vector<1x80x128xf32> to vector<80x128xf32>
    %21 = vector.extract_strided_slice %20 {offsets = [7, 0], sizes = [68, 128], strides = [1, 1]} : vector<80x128xf32> to vector<68x128xf32>
    %c1_i32 = arith.constant 1 : i32
    %22 = tpu.dynamic_rotate %21 by %c1_i32 dim 1 : vector<68x128xf32>, i32 -> vector<68x128xf32>
    %c0_24 = arith.constant 0 : index
    %23 = memref.load %arg2[%c0_24] : memref<48xf32, #tpu.memory_space<smem>>
    %24 = vector.broadcast %23 : f32 to vector<68x128xf32>
    %25 = arith.mulf %24, %22 : vector<68x128xf32>
    %26 = arith.addf %18, %25 : vector<68x128xf32>
    %c1_25 = arith.constant 1 : index
    %27 = memref.load %arg2[%c1_25] : memref<48xf32, #tpu.memory_space<smem>>
    %28 = vector.broadcast %27 : f32 to vector<68x128xf32>
    %29 = arith.mulf %28, %21 : vector<68x128xf32>
    %30 = arith.addf %26, %29 : vector<68x128xf32>
    %c127_i32 = arith.constant 127 : i32
    %31 = tpu.dynamic_rotate %21 by %c127_i32 dim 1 : vector<68x128xf32>, i32 -> vector<68x128xf32>
    %c2_26 = arith.constant 2 : index
    %32 = memref.load %arg2[%c2_26] : memref<48xf32, #tpu.memory_space<smem>>
    %33 = vector.broadcast %32 : f32 to vector<68x128xf32>
    %34 = arith.mulf %33, %31 : vector<68x128xf32>
    %35 = arith.addf %30, %34 : vector<68x128xf32>
    %c126_i32 = arith.constant 126 : i32
    %36 = tpu.dynamic_rotate %21 by %c126_i32 dim 1 : vector<68x128xf32>, i32 -> vector<68x128xf32>
    %c3 = arith.constant 3 : index
    %37 = memref.load %arg2[%c3] : memref<48xf32, #tpu.memory_space<smem>>
    %38 = vector.broadcast %37 : f32 to vector<68x128xf32>
    %39 = arith.mulf %38, %36 : vector<68x128xf32>
    %40 = arith.addf %35, %39 : vector<68x128xf32>
    %41 = vector.extract_strided_slice %20 {offsets = [8, 0], sizes = [68, 128], strides = [1, 1]} : vector<80x128xf32> to vector<68x128xf32>
    %c1_i32_27 = arith.constant 1 : i32
    %42 = tpu.dynamic_rotate %41 by %c1_i32_27 dim 1 : vector<68x128xf32>, i32 -> vector<68x128xf32>
    %c4 = arith.constant 4 : index
    %43 = memref.load %arg2[%c4] : memref<48xf32, #tpu.memory_space<smem>>
    %44 = vector.broadcast %43 : f32 to vector<68x128xf32>
    %45 = arith.mulf %44, %42 : vector<68x128xf32>
    %46 = arith.addf %40, %45 : vector<68x128xf32>
    %c5 = arith.constant 5 : index
    %47 = memref.load %arg2[%c5] : memref<48xf32, #tpu.memory_space<smem>>
    %48 = vector.broadcast %47 : f32 to vector<68x128xf32>
    %49 = arith.mulf %48, %41 : vector<68x128xf32>
    %50 = arith.addf %46, %49 : vector<68x128xf32>
    %c127_i32_28 = arith.constant 127 : i32
    %51 = tpu.dynamic_rotate %41 by %c127_i32_28 dim 1 : vector<68x128xf32>, i32 -> vector<68x128xf32>
    %c6 = arith.constant 6 : index
    %52 = memref.load %arg2[%c6] : memref<48xf32, #tpu.memory_space<smem>>
    %53 = vector.broadcast %52 : f32 to vector<68x128xf32>
    %54 = arith.mulf %53, %51 : vector<68x128xf32>
    %55 = arith.addf %50, %54 : vector<68x128xf32>
    %c126_i32_29 = arith.constant 126 : i32
    %56 = tpu.dynamic_rotate %41 by %c126_i32_29 dim 1 : vector<68x128xf32>, i32 -> vector<68x128xf32>
    %c7 = arith.constant 7 : index
    %57 = memref.load %arg2[%c7] : memref<48xf32, #tpu.memory_space<smem>>
    %58 = vector.broadcast %57 : f32 to vector<68x128xf32>
    %59 = arith.mulf %58, %56 : vector<68x128xf32>
    %60 = arith.addf %55, %59 : vector<68x128xf32>
    %61 = vector.extract_strided_slice %20 {offsets = [9, 0], sizes = [68, 128], strides = [1, 1]} : vector<80x128xf32> to vector<68x128xf32>
    %c1_i32_30 = arith.constant 1 : i32
    %62 = tpu.dynamic_rotate %61 by %c1_i32_30 dim 1 : vector<68x128xf32>, i32 -> vector<68x128xf32>
    %c8_31 = arith.constant 8 : index
    %63 = memref.load %arg2[%c8_31] : memref<48xf32, #tpu.memory_space<smem>>
    %64 = vector.broadcast %63 : f32 to vector<68x128xf32>
    %65 = arith.mulf %64, %62 : vector<68x128xf32>
    %66 = arith.addf %60, %65 : vector<68x128xf32>
    %c9 = arith.constant 9 : index
    %67 = memref.load %arg2[%c9] : memref<48xf32, #tpu.memory_space<smem>>
    %68 = vector.broadcast %67 : f32 to vector<68x128xf32>
    %69 = arith.mulf %68, %61 : vector<68x128xf32>
    %70 = arith.addf %66, %69 : vector<68x128xf32>
    %c127_i32_32 = arith.constant 127 : i32
    %71 = tpu.dynamic_rotate %61 by %c127_i32_32 dim 1 : vector<68x128xf32>, i32 -> vector<68x128xf32>
    %c10 = arith.constant 10 : index
    %72 = memref.load %arg2[%c10] : memref<48xf32, #tpu.memory_space<smem>>
    %73 = vector.broadcast %72 : f32 to vector<68x128xf32>
    %74 = arith.mulf %73, %71 : vector<68x128xf32>
    %75 = arith.addf %70, %74 : vector<68x128xf32>
    %c126_i32_33 = arith.constant 126 : i32
    %76 = tpu.dynamic_rotate %61 by %c126_i32_33 dim 1 : vector<68x128xf32>, i32 -> vector<68x128xf32>
    %c11 = arith.constant 11 : index
    %77 = memref.load %arg2[%c11] : memref<48xf32, #tpu.memory_space<smem>>
    %78 = vector.broadcast %77 : f32 to vector<68x128xf32>
    %79 = arith.mulf %78, %76 : vector<68x128xf32>
    %80 = arith.addf %75, %79 : vector<68x128xf32>
    %81 = vector.extract_strided_slice %20 {offsets = [10, 0], sizes = [68, 128], strides = [1, 1]} : vector<80x128xf32> to vector<68x128xf32>
    %c1_i32_34 = arith.constant 1 : i32
    %82 = tpu.dynamic_rotate %81 by %c1_i32_34 dim 1 : vector<68x128xf32>, i32 -> vector<68x128xf32>
    %c12 = arith.constant 12 : index
    %83 = memref.load %arg2[%c12] : memref<48xf32, #tpu.memory_space<smem>>
    %84 = vector.broadcast %83 : f32 to vector<68x128xf32>
    %85 = arith.mulf %84, %82 : vector<68x128xf32>
    %86 = arith.addf %80, %85 : vector<68x128xf32>
    %c13 = arith.constant 13 : index
    %87 = memref.load %arg2[%c13] : memref<48xf32, #tpu.memory_space<smem>>
    %88 = vector.broadcast %87 : f32 to vector<68x128xf32>
    %89 = arith.mulf %88, %81 : vector<68x128xf32>
    %90 = arith.addf %86, %89 : vector<68x128xf32>
    %c127_i32_35 = arith.constant 127 : i32
    %91 = tpu.dynamic_rotate %81 by %c127_i32_35 dim 1 : vector<68x128xf32>, i32 -> vector<68x128xf32>
    %c14 = arith.constant 14 : index
    %92 = memref.load %arg2[%c14] : memref<48xf32, #tpu.memory_space<smem>>
    %93 = vector.broadcast %92 : f32 to vector<68x128xf32>
    %94 = arith.mulf %93, %91 : vector<68x128xf32>
    %95 = arith.addf %90, %94 : vector<68x128xf32>
    %c126_i32_36 = arith.constant 126 : i32
    %96 = tpu.dynamic_rotate %81 by %c126_i32_36 dim 1 : vector<68x128xf32>, i32 -> vector<68x128xf32>
    %c15 = arith.constant 15 : index
    %97 = memref.load %arg2[%c15] : memref<48xf32, #tpu.memory_space<smem>>
    %98 = vector.broadcast %97 : f32 to vector<68x128xf32>
    %99 = arith.mulf %98, %96 : vector<68x128xf32>
    %100 = arith.addf %95, %99 : vector<68x128xf32>
    %c1_37 = arith.constant 1 : index
    %c0_38 = arith.constant 0 : index
    %c0_39 = arith.constant 0 : index
    %101 = vector.load %arg7[%c1_37, %c0_38, %c0_39] : memref<3x80x128xf32, #tpu.memory_space<vmem>>, vector<1x80x128xf32>
    %102 = vector.shape_cast %101 : vector<1x80x128xf32> to vector<80x128xf32>
    %103 = vector.extract_strided_slice %102 {offsets = [7, 0], sizes = [68, 128], strides = [1, 1]} : vector<80x128xf32> to vector<68x128xf32>
    %c1_i32_40 = arith.constant 1 : i32
    %104 = tpu.dynamic_rotate %103 by %c1_i32_40 dim 1 : vector<68x128xf32>, i32 -> vector<68x128xf32>
    %c16 = arith.constant 16 : index
    %105 = memref.load %arg2[%c16] : memref<48xf32, #tpu.memory_space<smem>>
    %106 = vector.broadcast %105 : f32 to vector<68x128xf32>
    %107 = arith.mulf %106, %104 : vector<68x128xf32>
    %108 = arith.addf %100, %107 : vector<68x128xf32>
    %c17 = arith.constant 17 : index
    %109 = memref.load %arg2[%c17] : memref<48xf32, #tpu.memory_space<smem>>
    %110 = vector.broadcast %109 : f32 to vector<68x128xf32>
    %111 = arith.mulf %110, %103 : vector<68x128xf32>
    %112 = arith.addf %108, %111 : vector<68x128xf32>
    %c127_i32_41 = arith.constant 127 : i32
    %113 = tpu.dynamic_rotate %103 by %c127_i32_41 dim 1 : vector<68x128xf32>, i32 -> vector<68x128xf32>
    %c18 = arith.constant 18 : index
    %114 = memref.load %arg2[%c18] : memref<48xf32, #tpu.memory_space<smem>>
    %115 = vector.broadcast %114 : f32 to vector<68x128xf32>
    %116 = arith.mulf %115, %113 : vector<68x128xf32>
    %117 = arith.addf %112, %116 : vector<68x128xf32>
    %c126_i32_42 = arith.constant 126 : i32
    %118 = tpu.dynamic_rotate %103 by %c126_i32_42 dim 1 : vector<68x128xf32>, i32 -> vector<68x128xf32>
    %c19 = arith.constant 19 : index
    %119 = memref.load %arg2[%c19] : memref<48xf32, #tpu.memory_space<smem>>
    %120 = vector.broadcast %119 : f32 to vector<68x128xf32>
    %121 = arith.mulf %120, %118 : vector<68x128xf32>
    %122 = arith.addf %117, %121 : vector<68x128xf32>
    %123 = vector.extract_strided_slice %102 {offsets = [8, 0], sizes = [68, 128], strides = [1, 1]} : vector<80x128xf32> to vector<68x128xf32>
    %c1_i32_43 = arith.constant 1 : i32
    %124 = tpu.dynamic_rotate %123 by %c1_i32_43 dim 1 : vector<68x128xf32>, i32 -> vector<68x128xf32>
    %c20 = arith.constant 20 : index
    %125 = memref.load %arg2[%c20] : memref<48xf32, #tpu.memory_space<smem>>
    %126 = vector.broadcast %125 : f32 to vector<68x128xf32>
    %127 = arith.mulf %126, %124 : vector<68x128xf32>
    %128 = arith.addf %122, %127 : vector<68x128xf32>
    %c21 = arith.constant 21 : index
    %129 = memref.load %arg2[%c21] : memref<48xf32, #tpu.memory_space<smem>>
    %130 = vector.broadcast %129 : f32 to vector<68x128xf32>
    %131 = arith.mulf %130, %123 : vector<68x128xf32>
    %132 = arith.addf %128, %131 : vector<68x128xf32>
    %c127_i32_44 = arith.constant 127 : i32
    %133 = tpu.dynamic_rotate %123 by %c127_i32_44 dim 1 : vector<68x128xf32>, i32 -> vector<68x128xf32>
    %c22 = arith.constant 22 : index
    %134 = memref.load %arg2[%c22] : memref<48xf32, #tpu.memory_space<smem>>
    %135 = vector.broadcast %134 : f32 to vector<68x128xf32>
    %136 = arith.mulf %135, %133 : vector<68x128xf32>
    %137 = arith.addf %132, %136 : vector<68x128xf32>
    %c126_i32_45 = arith.constant 126 : i32
    %138 = tpu.dynamic_rotate %123 by %c126_i32_45 dim 1 : vector<68x128xf32>, i32 -> vector<68x128xf32>
    %c23 = arith.constant 23 : index
    %139 = memref.load %arg2[%c23] : memref<48xf32, #tpu.memory_space<smem>>
    %140 = vector.broadcast %139 : f32 to vector<68x128xf32>
    %141 = arith.mulf %140, %138 : vector<68x128xf32>
    %142 = arith.addf %137, %141 : vector<68x128xf32>
    %143 = vector.extract_strided_slice %102 {offsets = [9, 0], sizes = [68, 128], strides = [1, 1]} : vector<80x128xf32> to vector<68x128xf32>
    %c1_i32_46 = arith.constant 1 : i32
    %144 = tpu.dynamic_rotate %143 by %c1_i32_46 dim 1 : vector<68x128xf32>, i32 -> vector<68x128xf32>
    %c24 = arith.constant 24 : index
    %145 = memref.load %arg2[%c24] : memref<48xf32, #tpu.memory_space<smem>>
    %146 = vector.broadcast %145 : f32 to vector<68x128xf32>
    %147 = arith.mulf %146, %144 : vector<68x128xf32>
    %148 = arith.addf %142, %147 : vector<68x128xf32>
    %c25 = arith.constant 25 : index
    %149 = memref.load %arg2[%c25] : memref<48xf32, #tpu.memory_space<smem>>
    %150 = vector.broadcast %149 : f32 to vector<68x128xf32>
    %151 = arith.mulf %150, %143 : vector<68x128xf32>
    %152 = arith.addf %148, %151 : vector<68x128xf32>
    %c127_i32_47 = arith.constant 127 : i32
    %153 = tpu.dynamic_rotate %143 by %c127_i32_47 dim 1 : vector<68x128xf32>, i32 -> vector<68x128xf32>
    %c26 = arith.constant 26 : index
    %154 = memref.load %arg2[%c26] : memref<48xf32, #tpu.memory_space<smem>>
    %155 = vector.broadcast %154 : f32 to vector<68x128xf32>
    %156 = arith.mulf %155, %153 : vector<68x128xf32>
    %157 = arith.addf %152, %156 : vector<68x128xf32>
    %c126_i32_48 = arith.constant 126 : i32
    %158 = tpu.dynamic_rotate %143 by %c126_i32_48 dim 1 : vector<68x128xf32>, i32 -> vector<68x128xf32>
    %c27 = arith.constant 27 : index
    %159 = memref.load %arg2[%c27] : memref<48xf32, #tpu.memory_space<smem>>
    %160 = vector.broadcast %159 : f32 to vector<68x128xf32>
    %161 = arith.mulf %160, %158 : vector<68x128xf32>
    %162 = arith.addf %157, %161 : vector<68x128xf32>
    %163 = vector.extract_strided_slice %102 {offsets = [10, 0], sizes = [68, 128], strides = [1, 1]} : vector<80x128xf32> to vector<68x128xf32>
    %c1_i32_49 = arith.constant 1 : i32
    %164 = tpu.dynamic_rotate %163 by %c1_i32_49 dim 1 : vector<68x128xf32>, i32 -> vector<68x128xf32>
    %c28 = arith.constant 28 : index
    %165 = memref.load %arg2[%c28] : memref<48xf32, #tpu.memory_space<smem>>
    %166 = vector.broadcast %165 : f32 to vector<68x128xf32>
    %167 = arith.mulf %166, %164 : vector<68x128xf32>
    %168 = arith.addf %162, %167 : vector<68x128xf32>
    %c29 = arith.constant 29 : index
    %169 = memref.load %arg2[%c29] : memref<48xf32, #tpu.memory_space<smem>>
    %170 = vector.broadcast %169 : f32 to vector<68x128xf32>
    %171 = arith.mulf %170, %163 : vector<68x128xf32>
    %172 = arith.addf %168, %171 : vector<68x128xf32>
    %c127_i32_50 = arith.constant 127 : i32
    %173 = tpu.dynamic_rotate %163 by %c127_i32_50 dim 1 : vector<68x128xf32>, i32 -> vector<68x128xf32>
    %c30 = arith.constant 30 : index
    %174 = memref.load %arg2[%c30] : memref<48xf32, #tpu.memory_space<smem>>
    %175 = vector.broadcast %174 : f32 to vector<68x128xf32>
    %176 = arith.mulf %175, %173 : vector<68x128xf32>
    %177 = arith.addf %172, %176 : vector<68x128xf32>
    %c126_i32_51 = arith.constant 126 : i32
    %178 = tpu.dynamic_rotate %163 by %c126_i32_51 dim 1 : vector<68x128xf32>, i32 -> vector<68x128xf32>
    %c31 = arith.constant 31 : index
    %179 = memref.load %arg2[%c31] : memref<48xf32, #tpu.memory_space<smem>>
    %180 = vector.broadcast %179 : f32 to vector<68x128xf32>
    %181 = arith.mulf %180, %178 : vector<68x128xf32>
    %182 = arith.addf %177, %181 : vector<68x128xf32>
    %c2_52 = arith.constant 2 : index
    %c0_53 = arith.constant 0 : index
    %c0_54 = arith.constant 0 : index
    %183 = vector.load %arg7[%c2_52, %c0_53, %c0_54] : memref<3x80x128xf32, #tpu.memory_space<vmem>>, vector<1x80x128xf32>
    %184 = vector.shape_cast %183 : vector<1x80x128xf32> to vector<80x128xf32>
    %185 = vector.extract_strided_slice %184 {offsets = [7, 0], sizes = [68, 128], strides = [1, 1]} : vector<80x128xf32> to vector<68x128xf32>
    %c1_i32_55 = arith.constant 1 : i32
    %186 = tpu.dynamic_rotate %185 by %c1_i32_55 dim 1 : vector<68x128xf32>, i32 -> vector<68x128xf32>
    %c32 = arith.constant 32 : index
    %187 = memref.load %arg2[%c32] : memref<48xf32, #tpu.memory_space<smem>>
    %188 = vector.broadcast %187 : f32 to vector<68x128xf32>
    %189 = arith.mulf %188, %186 : vector<68x128xf32>
    %190 = arith.addf %182, %189 : vector<68x128xf32>
    %c33 = arith.constant 33 : index
    %191 = memref.load %arg2[%c33] : memref<48xf32, #tpu.memory_space<smem>>
    %192 = vector.broadcast %191 : f32 to vector<68x128xf32>
    %193 = arith.mulf %192, %185 : vector<68x128xf32>
    %194 = arith.addf %190, %193 : vector<68x128xf32>
    %c127_i32_56 = arith.constant 127 : i32
    %195 = tpu.dynamic_rotate %185 by %c127_i32_56 dim 1 : vector<68x128xf32>, i32 -> vector<68x128xf32>
    %c34 = arith.constant 34 : index
    %196 = memref.load %arg2[%c34] : memref<48xf32, #tpu.memory_space<smem>>
    %197 = vector.broadcast %196 : f32 to vector<68x128xf32>
    %198 = arith.mulf %197, %195 : vector<68x128xf32>
    %199 = arith.addf %194, %198 : vector<68x128xf32>
    %c126_i32_57 = arith.constant 126 : i32
    %200 = tpu.dynamic_rotate %185 by %c126_i32_57 dim 1 : vector<68x128xf32>, i32 -> vector<68x128xf32>
    %c35 = arith.constant 35 : index
    %201 = memref.load %arg2[%c35] : memref<48xf32, #tpu.memory_space<smem>>
    %202 = vector.broadcast %201 : f32 to vector<68x128xf32>
    %203 = arith.mulf %202, %200 : vector<68x128xf32>
    %204 = arith.addf %199, %203 : vector<68x128xf32>
    %205 = vector.extract_strided_slice %184 {offsets = [8, 0], sizes = [68, 128], strides = [1, 1]} : vector<80x128xf32> to vector<68x128xf32>
    %c1_i32_58 = arith.constant 1 : i32
    %206 = tpu.dynamic_rotate %205 by %c1_i32_58 dim 1 : vector<68x128xf32>, i32 -> vector<68x128xf32>
    %c36 = arith.constant 36 : index
    %207 = memref.load %arg2[%c36] : memref<48xf32, #tpu.memory_space<smem>>
    %208 = vector.broadcast %207 : f32 to vector<68x128xf32>
    %209 = arith.mulf %208, %206 : vector<68x128xf32>
    %210 = arith.addf %204, %209 : vector<68x128xf32>
    %c37 = arith.constant 37 : index
    %211 = memref.load %arg2[%c37] : memref<48xf32, #tpu.memory_space<smem>>
    %212 = vector.broadcast %211 : f32 to vector<68x128xf32>
    %213 = arith.mulf %212, %205 : vector<68x128xf32>
    %214 = arith.addf %210, %213 : vector<68x128xf32>
    %c127_i32_59 = arith.constant 127 : i32
    %215 = tpu.dynamic_rotate %205 by %c127_i32_59 dim 1 : vector<68x128xf32>, i32 -> vector<68x128xf32>
    %c38 = arith.constant 38 : index
    %216 = memref.load %arg2[%c38] : memref<48xf32, #tpu.memory_space<smem>>
    %217 = vector.broadcast %216 : f32 to vector<68x128xf32>
    %218 = arith.mulf %217, %215 : vector<68x128xf32>
    %219 = arith.addf %214, %218 : vector<68x128xf32>
    %c126_i32_60 = arith.constant 126 : i32
    %220 = tpu.dynamic_rotate %205 by %c126_i32_60 dim 1 : vector<68x128xf32>, i32 -> vector<68x128xf32>
    %c39 = arith.constant 39 : index
    %221 = memref.load %arg2[%c39] : memref<48xf32, #tpu.memory_space<smem>>
    %222 = vector.broadcast %221 : f32 to vector<68x128xf32>
    %223 = arith.mulf %222, %220 : vector<68x128xf32>
    %224 = arith.addf %219, %223 : vector<68x128xf32>
    %225 = vector.extract_strided_slice %184 {offsets = [9, 0], sizes = [68, 128], strides = [1, 1]} : vector<80x128xf32> to vector<68x128xf32>
    %c1_i32_61 = arith.constant 1 : i32
    %226 = tpu.dynamic_rotate %225 by %c1_i32_61 dim 1 : vector<68x128xf32>, i32 -> vector<68x128xf32>
    %c40 = arith.constant 40 : index
    %227 = memref.load %arg2[%c40] : memref<48xf32, #tpu.memory_space<smem>>
    %228 = vector.broadcast %227 : f32 to vector<68x128xf32>
    %229 = arith.mulf %228, %226 : vector<68x128xf32>
    %230 = arith.addf %224, %229 : vector<68x128xf32>
    %c41 = arith.constant 41 : index
    %231 = memref.load %arg2[%c41] : memref<48xf32, #tpu.memory_space<smem>>
    %232 = vector.broadcast %231 : f32 to vector<68x128xf32>
    %233 = arith.mulf %232, %225 : vector<68x128xf32>
    %234 = arith.addf %230, %233 : vector<68x128xf32>
    %c127_i32_62 = arith.constant 127 : i32
    %235 = tpu.dynamic_rotate %225 by %c127_i32_62 dim 1 : vector<68x128xf32>, i32 -> vector<68x128xf32>
    %c42 = arith.constant 42 : index
    %236 = memref.load %arg2[%c42] : memref<48xf32, #tpu.memory_space<smem>>
    %237 = vector.broadcast %236 : f32 to vector<68x128xf32>
    %238 = arith.mulf %237, %235 : vector<68x128xf32>
    %239 = arith.addf %234, %238 : vector<68x128xf32>
    %c126_i32_63 = arith.constant 126 : i32
    %240 = tpu.dynamic_rotate %225 by %c126_i32_63 dim 1 : vector<68x128xf32>, i32 -> vector<68x128xf32>
    %c43 = arith.constant 43 : index
    %241 = memref.load %arg2[%c43] : memref<48xf32, #tpu.memory_space<smem>>
    %242 = vector.broadcast %241 : f32 to vector<68x128xf32>
    %243 = arith.mulf %242, %240 : vector<68x128xf32>
    %244 = arith.addf %239, %243 : vector<68x128xf32>
    %245 = vector.extract_strided_slice %184 {offsets = [10, 0], sizes = [68, 128], strides = [1, 1]} : vector<80x128xf32> to vector<68x128xf32>
    %c1_i32_64 = arith.constant 1 : i32
    %246 = tpu.dynamic_rotate %245 by %c1_i32_64 dim 1 : vector<68x128xf32>, i32 -> vector<68x128xf32>
    %c44 = arith.constant 44 : index
    %247 = memref.load %arg2[%c44] : memref<48xf32, #tpu.memory_space<smem>>
    %248 = vector.broadcast %247 : f32 to vector<68x128xf32>
    %249 = arith.mulf %248, %246 : vector<68x128xf32>
    %250 = arith.addf %244, %249 : vector<68x128xf32>
    %c45 = arith.constant 45 : index
    %251 = memref.load %arg2[%c45] : memref<48xf32, #tpu.memory_space<smem>>
    %252 = vector.broadcast %251 : f32 to vector<68x128xf32>
    %253 = arith.mulf %252, %245 : vector<68x128xf32>
    %254 = arith.addf %250, %253 : vector<68x128xf32>
    %c127_i32_65 = arith.constant 127 : i32
    %255 = tpu.dynamic_rotate %245 by %c127_i32_65 dim 1 : vector<68x128xf32>, i32 -> vector<68x128xf32>
    %c46 = arith.constant 46 : index
    %256 = memref.load %arg2[%c46] : memref<48xf32, #tpu.memory_space<smem>>
    %257 = vector.broadcast %256 : f32 to vector<68x128xf32>
    %258 = arith.mulf %257, %255 : vector<68x128xf32>
    %259 = arith.addf %254, %258 : vector<68x128xf32>
    %c126_i32_66 = arith.constant 126 : i32
    %260 = tpu.dynamic_rotate %245 by %c126_i32_66 dim 1 : vector<68x128xf32>, i32 -> vector<68x128xf32>
    %c47 = arith.constant 47 : index
    %261 = memref.load %arg2[%c47] : memref<48xf32, #tpu.memory_space<smem>>
    %262 = vector.broadcast %261 : f32 to vector<68x128xf32>
    %263 = arith.mulf %262, %260 : vector<68x128xf32>
    %264 = arith.addf %259, %263 : vector<68x128xf32>
    %cst_67 = arith.constant 5.000000e-01 : f32
    %265 = vector.broadcast %cst_67 : f32 to vector<68x128xf32>
    %266 = arith.mulf %265, %264 : vector<68x128xf32>
    %267 = arith.mulf %264, %264 : vector<68x128xf32>
    %cst_68 = arith.constant 0.0356774069 : f32
    %268 = vector.broadcast %cst_68 : f32 to vector<68x128xf32>
    %269 = arith.mulf %268, %267 : vector<68x128xf32>
    %cst_69 = arith.constant 0.797884583 : f32
    %270 = vector.broadcast %cst_69 : f32 to vector<68x128xf32>
    %271 = arith.addf %270, %269 : vector<68x128xf32>
    %272 = arith.mulf %264, %271 : vector<68x128xf32>
    %273 = math.tanh %272 : vector<68x128xf32>
    %cst_70 = arith.constant 1.000000e+00 : f32
    %274 = vector.broadcast %cst_70 : f32 to vector<68x128xf32>
    %275 = arith.addf %273, %274 : vector<68x128xf32>
    %276 = arith.mulf %266, %275 : vector<68x128xf32>
    %c0_71 = arith.constant 0 : index
    %277 = memref.load %arg5[%c0_71] : memref<2xf32, #tpu.memory_space<smem>>
    %278 = vector.broadcast %277 : f32 to vector<64x128xf32>
    %c1_72 = arith.constant 1 : index
    %279 = memref.load %arg5[%c1_72] : memref<2xf32, #tpu.memory_space<smem>>
    %280 = vector.broadcast %279 : f32 to vector<64x128xf32>
    %281 = vector.extract_strided_slice %276 {offsets = [0, 0], sizes = [64, 128], strides = [1, 1]} : vector<68x128xf32> to vector<64x128xf32>
    %c0_73 = arith.constant 0 : index
    %282 = memref.load %arg4[%c0_73] : memref<50xf32, #tpu.memory_space<smem>>
    %283 = vector.broadcast %282 : f32 to vector<64x128xf32>
    %284 = arith.mulf %283, %281 : vector<64x128xf32>
    %285 = arith.addf %278, %284 : vector<64x128xf32>
    %c25_74 = arith.constant 25 : index
    %286 = memref.load %arg4[%c25_74] : memref<50xf32, #tpu.memory_space<smem>>
    %287 = vector.broadcast %286 : f32 to vector<64x128xf32>
    %288 = arith.mulf %287, %281 : vector<64x128xf32>
    %289 = arith.addf %280, %288 : vector<64x128xf32>
    %c127_i32_75 = arith.constant 127 : i32
    %290 = tpu.dynamic_rotate %281 by %c127_i32_75 dim 1 : vector<64x128xf32>, i32 -> vector<64x128xf32>
    %c1_76 = arith.constant 1 : index
    %291 = memref.load %arg4[%c1_76] : memref<50xf32, #tpu.memory_space<smem>>
    %292 = vector.broadcast %291 : f32 to vector<64x128xf32>
    %293 = arith.mulf %292, %290 : vector<64x128xf32>
    %294 = arith.addf %285, %293 : vector<64x128xf32>
    %c26_77 = arith.constant 26 : index
    %295 = memref.load %arg4[%c26_77] : memref<50xf32, #tpu.memory_space<smem>>
    %296 = vector.broadcast %295 : f32 to vector<64x128xf32>
    %297 = arith.mulf %296, %290 : vector<64x128xf32>
    %298 = arith.addf %289, %297 : vector<64x128xf32>
    %c126_i32_78 = arith.constant 126 : i32
    %299 = tpu.dynamic_rotate %281 by %c126_i32_78 dim 1 : vector<64x128xf32>, i32 -> vector<64x128xf32>
    %c2_79 = arith.constant 2 : index
    %300 = memref.load %arg4[%c2_79] : memref<50xf32, #tpu.memory_space<smem>>
    %301 = vector.broadcast %300 : f32 to vector<64x128xf32>
    %302 = arith.mulf %301, %299 : vector<64x128xf32>
    %303 = arith.addf %294, %302 : vector<64x128xf32>
    %c27_80 = arith.constant 27 : index
    %304 = memref.load %arg4[%c27_80] : memref<50xf32, #tpu.memory_space<smem>>
    %305 = vector.broadcast %304 : f32 to vector<64x128xf32>
    %306 = arith.mulf %305, %299 : vector<64x128xf32>
    %307 = arith.addf %298, %306 : vector<64x128xf32>
    %c125_i32 = arith.constant 125 : i32
    %308 = tpu.dynamic_rotate %281 by %c125_i32 dim 1 : vector<64x128xf32>, i32 -> vector<64x128xf32>
    %c3_81 = arith.constant 3 : index
    %309 = memref.load %arg4[%c3_81] : memref<50xf32, #tpu.memory_space<smem>>
    %310 = vector.broadcast %309 : f32 to vector<64x128xf32>
    %311 = arith.mulf %310, %308 : vector<64x128xf32>
    %312 = arith.addf %303, %311 : vector<64x128xf32>
    %c28_82 = arith.constant 28 : index
    %313 = memref.load %arg4[%c28_82] : memref<50xf32, #tpu.memory_space<smem>>
    %314 = vector.broadcast %313 : f32 to vector<64x128xf32>
    %315 = arith.mulf %314, %308 : vector<64x128xf32>
    %316 = arith.addf %307, %315 : vector<64x128xf32>
    %c124_i32 = arith.constant 124 : i32
    %317 = tpu.dynamic_rotate %281 by %c124_i32 dim 1 : vector<64x128xf32>, i32 -> vector<64x128xf32>
    %c4_83 = arith.constant 4 : index
    %318 = memref.load %arg4[%c4_83] : memref<50xf32, #tpu.memory_space<smem>>
    %319 = vector.broadcast %318 : f32 to vector<64x128xf32>
    %320 = arith.mulf %319, %317 : vector<64x128xf32>
    %321 = arith.addf %312, %320 : vector<64x128xf32>
    %c29_84 = arith.constant 29 : index
    %322 = memref.load %arg4[%c29_84] : memref<50xf32, #tpu.memory_space<smem>>
    %323 = vector.broadcast %322 : f32 to vector<64x128xf32>
    %324 = arith.mulf %323, %317 : vector<64x128xf32>
    %325 = arith.addf %316, %324 : vector<64x128xf32>
    %326 = vector.extract_strided_slice %276 {offsets = [1, 0], sizes = [64, 128], strides = [1, 1]} : vector<68x128xf32> to vector<64x128xf32>
    %c5_85 = arith.constant 5 : index
    %327 = memref.load %arg4[%c5_85] : memref<50xf32, #tpu.memory_space<smem>>
    %328 = vector.broadcast %327 : f32 to vector<64x128xf32>
    %329 = arith.mulf %328, %326 : vector<64x128xf32>
    %330 = arith.addf %321, %329 : vector<64x128xf32>
    %c30_86 = arith.constant 30 : index
    %331 = memref.load %arg4[%c30_86] : memref<50xf32, #tpu.memory_space<smem>>
    %332 = vector.broadcast %331 : f32 to vector<64x128xf32>
    %333 = arith.mulf %332, %326 : vector<64x128xf32>
    %334 = arith.addf %325, %333 : vector<64x128xf32>
    %c127_i32_87 = arith.constant 127 : i32
    %335 = tpu.dynamic_rotate %326 by %c127_i32_87 dim 1 : vector<64x128xf32>, i32 -> vector<64x128xf32>
    %c6_88 = arith.constant 6 : index
    %336 = memref.load %arg4[%c6_88] : memref<50xf32, #tpu.memory_space<smem>>
    %337 = vector.broadcast %336 : f32 to vector<64x128xf32>
    %338 = arith.mulf %337, %335 : vector<64x128xf32>
    %339 = arith.addf %330, %338 : vector<64x128xf32>
    %c31_89 = arith.constant 31 : index
    %340 = memref.load %arg4[%c31_89] : memref<50xf32, #tpu.memory_space<smem>>
    %341 = vector.broadcast %340 : f32 to vector<64x128xf32>
    %342 = arith.mulf %341, %335 : vector<64x128xf32>
    %343 = arith.addf %334, %342 : vector<64x128xf32>
    %c126_i32_90 = arith.constant 126 : i32
    %344 = tpu.dynamic_rotate %326 by %c126_i32_90 dim 1 : vector<64x128xf32>, i32 -> vector<64x128xf32>
    %c7_91 = arith.constant 7 : index
    %345 = memref.load %arg4[%c7_91] : memref<50xf32, #tpu.memory_space<smem>>
    %346 = vector.broadcast %345 : f32 to vector<64x128xf32>
    %347 = arith.mulf %346, %344 : vector<64x128xf32>
    %348 = arith.addf %339, %347 : vector<64x128xf32>
    %c32_92 = arith.constant 32 : index
    %349 = memref.load %arg4[%c32_92] : memref<50xf32, #tpu.memory_space<smem>>
    %350 = vector.broadcast %349 : f32 to vector<64x128xf32>
    %351 = arith.mulf %350, %344 : vector<64x128xf32>
    %352 = arith.addf %343, %351 : vector<64x128xf32>
    %c125_i32_93 = arith.constant 125 : i32
    %353 = tpu.dynamic_rotate %326 by %c125_i32_93 dim 1 : vector<64x128xf32>, i32 -> vector<64x128xf32>
    %c8_94 = arith.constant 8 : index
    %354 = memref.load %arg4[%c8_94] : memref<50xf32, #tpu.memory_space<smem>>
    %355 = vector.broadcast %354 : f32 to vector<64x128xf32>
    %356 = arith.mulf %355, %353 : vector<64x128xf32>
    %357 = arith.addf %348, %356 : vector<64x128xf32>
    %c33_95 = arith.constant 33 : index
    %358 = memref.load %arg4[%c33_95] : memref<50xf32, #tpu.memory_space<smem>>
    %359 = vector.broadcast %358 : f32 to vector<64x128xf32>
    %360 = arith.mulf %359, %353 : vector<64x128xf32>
    %361 = arith.addf %352, %360 : vector<64x128xf32>
    %c124_i32_96 = arith.constant 124 : i32
    %362 = tpu.dynamic_rotate %326 by %c124_i32_96 dim 1 : vector<64x128xf32>, i32 -> vector<64x128xf32>
    %c9_97 = arith.constant 9 : index
    %363 = memref.load %arg4[%c9_97] : memref<50xf32, #tpu.memory_space<smem>>
    %364 = vector.broadcast %363 : f32 to vector<64x128xf32>
    %365 = arith.mulf %364, %362 : vector<64x128xf32>
    %366 = arith.addf %357, %365 : vector<64x128xf32>
    %c34_98 = arith.constant 34 : index
    %367 = memref.load %arg4[%c34_98] : memref<50xf32, #tpu.memory_space<smem>>
    %368 = vector.broadcast %367 : f32 to vector<64x128xf32>
    %369 = arith.mulf %368, %362 : vector<64x128xf32>
    %370 = arith.addf %361, %369 : vector<64x128xf32>
    %371 = vector.extract_strided_slice %276 {offsets = [2, 0], sizes = [64, 128], strides = [1, 1]} : vector<68x128xf32> to vector<64x128xf32>
    %c10_99 = arith.constant 10 : index
    %372 = memref.load %arg4[%c10_99] : memref<50xf32, #tpu.memory_space<smem>>
    %373 = vector.broadcast %372 : f32 to vector<64x128xf32>
    %374 = arith.mulf %373, %371 : vector<64x128xf32>
    %375 = arith.addf %366, %374 : vector<64x128xf32>
    %c35_100 = arith.constant 35 : index
    %376 = memref.load %arg4[%c35_100] : memref<50xf32, #tpu.memory_space<smem>>
    %377 = vector.broadcast %376 : f32 to vector<64x128xf32>
    %378 = arith.mulf %377, %371 : vector<64x128xf32>
    %379 = arith.addf %370, %378 : vector<64x128xf32>
    %c127_i32_101 = arith.constant 127 : i32
    %380 = tpu.dynamic_rotate %371 by %c127_i32_101 dim 1 : vector<64x128xf32>, i32 -> vector<64x128xf32>
    %c11_102 = arith.constant 11 : index
    %381 = memref.load %arg4[%c11_102] : memref<50xf32, #tpu.memory_space<smem>>
    %382 = vector.broadcast %381 : f32 to vector<64x128xf32>
    %383 = arith.mulf %382, %380 : vector<64x128xf32>
    %384 = arith.addf %375, %383 : vector<64x128xf32>
    %c36_103 = arith.constant 36 : index
    %385 = memref.load %arg4[%c36_103] : memref<50xf32, #tpu.memory_space<smem>>
    %386 = vector.broadcast %385 : f32 to vector<64x128xf32>
    %387 = arith.mulf %386, %380 : vector<64x128xf32>
    %388 = arith.addf %379, %387 : vector<64x128xf32>
    %c126_i32_104 = arith.constant 126 : i32
    %389 = tpu.dynamic_rotate %371 by %c126_i32_104 dim 1 : vector<64x128xf32>, i32 -> vector<64x128xf32>
    %c12_105 = arith.constant 12 : index
    %390 = memref.load %arg4[%c12_105] : memref<50xf32, #tpu.memory_space<smem>>
    %391 = vector.broadcast %390 : f32 to vector<64x128xf32>
    %392 = arith.mulf %391, %389 : vector<64x128xf32>
    %393 = arith.addf %384, %392 : vector<64x128xf32>
    %c37_106 = arith.constant 37 : index
    %394 = memref.load %arg4[%c37_106] : memref<50xf32, #tpu.memory_space<smem>>
    %395 = vector.broadcast %394 : f32 to vector<64x128xf32>
    %396 = arith.mulf %395, %389 : vector<64x128xf32>
    %397 = arith.addf %388, %396 : vector<64x128xf32>
    %c125_i32_107 = arith.constant 125 : i32
    %398 = tpu.dynamic_rotate %371 by %c125_i32_107 dim 1 : vector<64x128xf32>, i32 -> vector<64x128xf32>
    %c13_108 = arith.constant 13 : index
    %399 = memref.load %arg4[%c13_108] : memref<50xf32, #tpu.memory_space<smem>>
    %400 = vector.broadcast %399 : f32 to vector<64x128xf32>
    %401 = arith.mulf %400, %398 : vector<64x128xf32>
    %402 = arith.addf %393, %401 : vector<64x128xf32>
    %c38_109 = arith.constant 38 : index
    %403 = memref.load %arg4[%c38_109] : memref<50xf32, #tpu.memory_space<smem>>
    %404 = vector.broadcast %403 : f32 to vector<64x128xf32>
    %405 = arith.mulf %404, %398 : vector<64x128xf32>
    %406 = arith.addf %397, %405 : vector<64x128xf32>
    %c124_i32_110 = arith.constant 124 : i32
    %407 = tpu.dynamic_rotate %371 by %c124_i32_110 dim 1 : vector<64x128xf32>, i32 -> vector<64x128xf32>
    %c14_111 = arith.constant 14 : index
    %408 = memref.load %arg4[%c14_111] : memref<50xf32, #tpu.memory_space<smem>>
    %409 = vector.broadcast %408 : f32 to vector<64x128xf32>
    %410 = arith.mulf %409, %407 : vector<64x128xf32>
    %411 = arith.addf %402, %410 : vector<64x128xf32>
    %c39_112 = arith.constant 39 : index
    %412 = memref.load %arg4[%c39_112] : memref<50xf32, #tpu.memory_space<smem>>
    %413 = vector.broadcast %412 : f32 to vector<64x128xf32>
    %414 = arith.mulf %413, %407 : vector<64x128xf32>
    %415 = arith.addf %406, %414 : vector<64x128xf32>
    %416 = vector.extract_strided_slice %276 {offsets = [3, 0], sizes = [64, 128], strides = [1, 1]} : vector<68x128xf32> to vector<64x128xf32>
    %c15_113 = arith.constant 15 : index
    %417 = memref.load %arg4[%c15_113] : memref<50xf32, #tpu.memory_space<smem>>
    %418 = vector.broadcast %417 : f32 to vector<64x128xf32>
    %419 = arith.mulf %418, %416 : vector<64x128xf32>
    %420 = arith.addf %411, %419 : vector<64x128xf32>
    %c40_114 = arith.constant 40 : index
    %421 = memref.load %arg4[%c40_114] : memref<50xf32, #tpu.memory_space<smem>>
    %422 = vector.broadcast %421 : f32 to vector<64x128xf32>
    %423 = arith.mulf %422, %416 : vector<64x128xf32>
    %424 = arith.addf %415, %423 : vector<64x128xf32>
    %c127_i32_115 = arith.constant 127 : i32
    %425 = tpu.dynamic_rotate %416 by %c127_i32_115 dim 1 : vector<64x128xf32>, i32 -> vector<64x128xf32>
    %c16_116 = arith.constant 16 : index
    %426 = memref.load %arg4[%c16_116] : memref<50xf32, #tpu.memory_space<smem>>
    %427 = vector.broadcast %426 : f32 to vector<64x128xf32>
    %428 = arith.mulf %427, %425 : vector<64x128xf32>
    %429 = arith.addf %420, %428 : vector<64x128xf32>
    %c41_117 = arith.constant 41 : index
    %430 = memref.load %arg4[%c41_117] : memref<50xf32, #tpu.memory_space<smem>>
    %431 = vector.broadcast %430 : f32 to vector<64x128xf32>
    %432 = arith.mulf %431, %425 : vector<64x128xf32>
    %433 = arith.addf %424, %432 : vector<64x128xf32>
    %c126_i32_118 = arith.constant 126 : i32
    %434 = tpu.dynamic_rotate %416 by %c126_i32_118 dim 1 : vector<64x128xf32>, i32 -> vector<64x128xf32>
    %c17_119 = arith.constant 17 : index
    %435 = memref.load %arg4[%c17_119] : memref<50xf32, #tpu.memory_space<smem>>
    %436 = vector.broadcast %435 : f32 to vector<64x128xf32>
    %437 = arith.mulf %436, %434 : vector<64x128xf32>
    %438 = arith.addf %429, %437 : vector<64x128xf32>
    %c42_120 = arith.constant 42 : index
    %439 = memref.load %arg4[%c42_120] : memref<50xf32, #tpu.memory_space<smem>>
    %440 = vector.broadcast %439 : f32 to vector<64x128xf32>
    %441 = arith.mulf %440, %434 : vector<64x128xf32>
    %442 = arith.addf %433, %441 : vector<64x128xf32>
    %c125_i32_121 = arith.constant 125 : i32
    %443 = tpu.dynamic_rotate %416 by %c125_i32_121 dim 1 : vector<64x128xf32>, i32 -> vector<64x128xf32>
    %c18_122 = arith.constant 18 : index
    %444 = memref.load %arg4[%c18_122] : memref<50xf32, #tpu.memory_space<smem>>
    %445 = vector.broadcast %444 : f32 to vector<64x128xf32>
    %446 = arith.mulf %445, %443 : vector<64x128xf32>
    %447 = arith.addf %438, %446 : vector<64x128xf32>
    %c43_123 = arith.constant 43 : index
    %448 = memref.load %arg4[%c43_123] : memref<50xf32, #tpu.memory_space<smem>>
    %449 = vector.broadcast %448 : f32 to vector<64x128xf32>
    %450 = arith.mulf %449, %443 : vector<64x128xf32>
    %451 = arith.addf %442, %450 : vector<64x128xf32>
    %c124_i32_124 = arith.constant 124 : i32
    %452 = tpu.dynamic_rotate %416 by %c124_i32_124 dim 1 : vector<64x128xf32>, i32 -> vector<64x128xf32>
    %c19_125 = arith.constant 19 : index
    %453 = memref.load %arg4[%c19_125] : memref<50xf32, #tpu.memory_space<smem>>
    %454 = vector.broadcast %453 : f32 to vector<64x128xf32>
    %455 = arith.mulf %454, %452 : vector<64x128xf32>
    %456 = arith.addf %447, %455 : vector<64x128xf32>
    %c44_126 = arith.constant 44 : index
    %457 = memref.load %arg4[%c44_126] : memref<50xf32, #tpu.memory_space<smem>>
    %458 = vector.broadcast %457 : f32 to vector<64x128xf32>
    %459 = arith.mulf %458, %452 : vector<64x128xf32>
    %460 = arith.addf %451, %459 : vector<64x128xf32>
    %461 = vector.extract_strided_slice %276 {offsets = [4, 0], sizes = [64, 128], strides = [1, 1]} : vector<68x128xf32> to vector<64x128xf32>
    %c20_127 = arith.constant 20 : index
    %462 = memref.load %arg4[%c20_127] : memref<50xf32, #tpu.memory_space<smem>>
    %463 = vector.broadcast %462 : f32 to vector<64x128xf32>
    %464 = arith.mulf %463, %461 : vector<64x128xf32>
    %465 = arith.addf %456, %464 : vector<64x128xf32>
    %c45_128 = arith.constant 45 : index
    %466 = memref.load %arg4[%c45_128] : memref<50xf32, #tpu.memory_space<smem>>
    %467 = vector.broadcast %466 : f32 to vector<64x128xf32>
    %468 = arith.mulf %467, %461 : vector<64x128xf32>
    %469 = arith.addf %460, %468 : vector<64x128xf32>
    %c127_i32_129 = arith.constant 127 : i32
    %470 = tpu.dynamic_rotate %461 by %c127_i32_129 dim 1 : vector<64x128xf32>, i32 -> vector<64x128xf32>
    %c21_130 = arith.constant 21 : index
    %471 = memref.load %arg4[%c21_130] : memref<50xf32, #tpu.memory_space<smem>>
    %472 = vector.broadcast %471 : f32 to vector<64x128xf32>
    %473 = arith.mulf %472, %470 : vector<64x128xf32>
    %474 = arith.addf %465, %473 : vector<64x128xf32>
    %c46_131 = arith.constant 46 : index
    %475 = memref.load %arg4[%c46_131] : memref<50xf32, #tpu.memory_space<smem>>
    %476 = vector.broadcast %475 : f32 to vector<64x128xf32>
    %477 = arith.mulf %476, %470 : vector<64x128xf32>
    %478 = arith.addf %469, %477 : vector<64x128xf32>
    %c126_i32_132 = arith.constant 126 : i32
    %479 = tpu.dynamic_rotate %461 by %c126_i32_132 dim 1 : vector<64x128xf32>, i32 -> vector<64x128xf32>
    %c22_133 = arith.constant 22 : index
    %480 = memref.load %arg4[%c22_133] : memref<50xf32, #tpu.memory_space<smem>>
    %481 = vector.broadcast %480 : f32 to vector<64x128xf32>
    %482 = arith.mulf %481, %479 : vector<64x128xf32>
    %483 = arith.addf %474, %482 : vector<64x128xf32>
    %c47_134 = arith.constant 47 : index
    %484 = memref.load %arg4[%c47_134] : memref<50xf32, #tpu.memory_space<smem>>
    %485 = vector.broadcast %484 : f32 to vector<64x128xf32>
    %486 = arith.mulf %485, %479 : vector<64x128xf32>
    %487 = arith.addf %478, %486 : vector<64x128xf32>
    %c125_i32_135 = arith.constant 125 : i32
    %488 = tpu.dynamic_rotate %461 by %c125_i32_135 dim 1 : vector<64x128xf32>, i32 -> vector<64x128xf32>
    %c23_136 = arith.constant 23 : index
    %489 = memref.load %arg4[%c23_136] : memref<50xf32, #tpu.memory_space<smem>>
    %490 = vector.broadcast %489 : f32 to vector<64x128xf32>
    %491 = arith.mulf %490, %488 : vector<64x128xf32>
    %492 = arith.addf %483, %491 : vector<64x128xf32>
    %c48 = arith.constant 48 : index
    %493 = memref.load %arg4[%c48] : memref<50xf32, #tpu.memory_space<smem>>
    %494 = vector.broadcast %493 : f32 to vector<64x128xf32>
    %495 = arith.mulf %494, %488 : vector<64x128xf32>
    %496 = arith.addf %487, %495 : vector<64x128xf32>
    %c124_i32_137 = arith.constant 124 : i32
    %497 = tpu.dynamic_rotate %461 by %c124_i32_137 dim 1 : vector<64x128xf32>, i32 -> vector<64x128xf32>
    %c24_138 = arith.constant 24 : index
    %498 = memref.load %arg4[%c24_138] : memref<50xf32, #tpu.memory_space<smem>>
    %499 = vector.broadcast %498 : f32 to vector<64x128xf32>
    %500 = arith.mulf %499, %497 : vector<64x128xf32>
    %501 = arith.addf %492, %500 : vector<64x128xf32>
    %c49 = arith.constant 49 : index
    %502 = memref.load %arg4[%c49] : memref<50xf32, #tpu.memory_space<smem>>
    %503 = vector.broadcast %502 : f32 to vector<64x128xf32>
    %504 = arith.mulf %503, %497 : vector<64x128xf32>
    %505 = arith.addf %496, %504 : vector<64x128xf32>
    %c0_139 = arith.constant 0 : index
    %c0_140 = arith.constant 0 : index
    %c0_141 = arith.constant 0 : index
    %c0_142 = arith.constant 0 : index
    %506 = vector.load %arg6[%c0_139, %c0_140, %c0_141, %c0_142] : memref<1x2x64x128xf32, #tpu.memory_space<vmem>>, vector<1x1x64x128xf32>
    %507 = vector.shape_cast %506 : vector<1x1x64x128xf32> to vector<64x128xf32>
    %508 = vector.shape_cast %501 : vector<64x128xf32> to vector<1x1x64x128xf32>
    tpu.vector_store %arg6[%c0_139, %c0_140, %c0_141, %c0_142], %508 {strides = array<i32>} : memref<1x2x64x128xf32, #tpu.memory_space<vmem>>, vector<1x1x64x128xf32>,
    %c0_143 = arith.constant 0 : index
    %c1_144 = arith.constant 1 : index
    %c0_145 = arith.constant 0 : index
    %c0_146 = arith.constant 0 : index
    %509 = vector.load %arg6[%c0_143, %c1_144, %c0_145, %c0_146] : memref<1x2x64x128xf32, #tpu.memory_space<vmem>>, vector<1x1x64x128xf32>
    %510 = vector.shape_cast %509 : vector<1x1x64x128xf32> to vector<64x128xf32>
    %511 = vector.shape_cast %505 : vector<64x128xf32> to vector<1x1x64x128xf32>
    tpu.vector_store %arg6[%c0_143, %c1_144, %c0_145, %c0_146], %511 {strides = array<i32>} : memref<1x2x64x128xf32, #tpu.memory_space<vmem>>, vector<1x1x64x128xf32>,
    return
  }
  func.func @transform_0(%arg0: i32) -> (i32, i32, i32, i32) {
    %c0_i32 = arith.constant 0 : i32
    %c0_i32_0 = arith.constant 0 : i32
    %c0_i32_1 = arith.constant 0 : i32
    %c0_i32_2 = arith.constant 0 : i32
    return %arg0, %c0_i32, %c0_i32_0, %c0_i32_1 : i32, i32, i32, i32
  }
  func.func @transform_1(%arg0: i32) -> i32 {
    %c0_i32 = arith.constant 0 : i32
    %c0_i32_0 = arith.constant 0 : i32
    return %c0_i32 : i32
  }
  func.func @transform_2(%arg0: i32) -> i32 {
    %c0_i32 = arith.constant 0 : i32
    %c0_i32_0 = arith.constant 0 : i32
    return %c0_i32 : i32
  }
  func.func @transform_3(%arg0: i32) -> i32 {
    %c0_i32 = arith.constant 0 : i32
    %c0_i32_0 = arith.constant 0 : i32
    return %c0_i32 : i32
  }
  func.func @transform_4(%arg0: i32) -> i32 {
    %c0_i32 = arith.constant 0 : i32
    %c0_i32_0 = arith.constant 0 : i32
    return %c0_i32 : i32
  }
  func.func @transform_5(%arg0: i32) -> (i32, i32, i32, i32) {
    %c0_i32 = arith.constant 0 : i32
    %c0_i32_0 = arith.constant 0 : i32
    %c0_i32_1 = arith.constant 0 : i32
    %c0_i32_2 = arith.constant 0 : i32
    return %arg0, %c0_i32, %c0_i32_0, %c0_i32_1 : i32, i32, i32, i32
  }
}

</mosaic_0001>

<llo_original>
// kernel: model_forward_padded.1
$region0: #{model_forward_padded.1}
  #allocation0 [shape = 'u32[]', space=smem, size = 0x4, offset = 0x4, fixed_abs, tag = 'smem constant byte address 0x4 - core index']
  #allocation1 [shape = 'u32[72,128]{1,0:T(1,128)}', space=vmem, size = 0x9000, scoped, tag = 'internal scratch']
  #allocation2 [shape = 'f32[3,80,128]{2,1,0:T(8,128)}', space=vmem, size = 0x1e000, scoped, tag = 'scratch operand']
  #allocation3 [shape = 'f32[1]{0:T(128)S(6)}', space=smem, size = 0x200, scoped, tag = 'scoped memory for model_forward_padded.1']
  %s0 = inlined_call_operand.hbm [shape: f32[2,3,64,64], index: 0, kind: input, shape index: {}]
  %s1 = inlined_call_operand.vmem [shape: f32[48], index: 1, kind: input, shape index: {}]
  %s2 = inlined_call_operand.<no memory space> [shape: f32[1], index: 2, kind: input, shape index: {}]
  %s3 = inlined_call_operand.vmem [shape: f32[50], index: 3, kind: input, shape index: {}]
  %s4 = inlined_call_operand.vmem [shape: f32[2], index: 4, kind: input, shape index: {}]
  %s5 = inlined_call_operand.hbm [shape: f32[2,2,64,128], index: 5, kind: output, shape index: {}]
  %s6 = sld [smem:[#allocation0]]
  $region69: #{model_forward_padded.1} parent=0
    _
  %s8 = ssub.s32 1, %s6
  %s9 = scalar_select 0, %s8, %s6
  %10 = sst [smem:[#allocation3]] %s2
  $region1: #{model_forward_padded.1} parent=0
    #allocation4 [shape = 'u8[196608]{0}', space=vmem, size = 0x30000, scoped, tag = 'input window, operand 0']
    #allocation5 [shape = 's32[2]{0}', space=sflag, size = 0x8, scoped, tag = 'scoped memory for model_forward_padded.1']
    #allocation6 [shape = 's32[2]{0}', space=sflag, size = 0x8, scoped, tag = 'scoped memory for model_forward_padded.1']
    #allocation7 [shape = 's32[2]{0}', space=sflag, size = 0x8, scoped, tag = 'scoped memory for model_forward_padded.1']
    #allocation8 [shape = 'u8[512]{0}', space=smem, size = 0x200, scoped, tag = 'input window, operand 1, single buffered']
    #allocation9 [shape = 'u8[512]{0}', space=smem, size = 0x200, scoped, tag = 'input window, operand 3, single buffered']
    #allocation10 [shape = 's32[1]{0}', space=sflag, size = 0x4, scoped, tag = 'scoped memory for model_forward_padded.1']
    #allocation11 [shape = 'u8[512]{0}', space=smem, size = 0x200, scoped, tag = 'input window, operand 4, single buffered']
    #allocation12 [shape = 'u8[131072]{0}', space=vmem, size = 0x20000, scoped, tag = 'output window, operand 0']
    %11 = vsyncpa [#allocation5], 0
    %s12 = scalar_lea.sflag [#allocation5], 1
    %13 = vsyncpa %s12, 0
    %14 = vsyncpa [#allocation7], 0
    %15 = vsyncpa [#allocation10], 0
    %16 = vsyncpa [#allocation6], 0
    %s17 = scalar_lea.sflag [#allocation6], 1
    %18 = vsyncpa %s17, 0
    loop: start=0, step=1, limit=4
    $region2: #{model_forward_padded.1} parent=1 // loop_pre_header
      _
    $region3: #{model_forward_padded.1} parent=1 // loop_header
      %s20 = sphi 0, %s24
      %p21 = scmp.ge.s32.totalorder %s20, 4
      %s30 = sphi 0, %s32
      %s33 = sphi 0, %s30
      %s34 = sphi 0, %s33
      %s50 = sphi 0, %s34
      %s54 = sphi 0, %s54
      %s56 = sphi 0, %s54
      %s57 = sphi 0, %s56
      %s71 = sphi 0, %s57
      %s75 = sphi 0, %s75
      %s77 = sphi 0, %s75
      %s78 = sphi 0, %s77
      %s92 = sphi 0, %s78
      %s96 = sphi 0, %s96
      %s98 = sphi 0, %s96
      %s99 = sphi 0, %s98
      %s113 = sphi 0, %s99
      %s117 = sphi 0, %s117
      %s119 = sphi 0, %s117
      %s120 = sphi 0, %s119
      %s134 = sphi 0, %s120
      %s140 = sphi 0, %s142
      %s143 = sphi 0, %s140
      %s144 = sphi 0, %s143
      %s160 = sphi 0, %s144
    $region4: #{model_forward_padded.1} parent=1 // loop_header_branch
      %23 = sbr.rel (%p21) target = $region8
    $region5: #{model_forward_padded.1} parent=1 // loop_body
      %s25 = ssub.s32 %s20, 1
      %s26 = ssub.s32 %s20, 2
      %s27 = sadd.s32 %s20, 1
      %s28 = ssub.s32 %s20, %s27
      %p29 = scmp.eq.s32.totalorder %s28, 0
      %s31 = sadd.s32 %s30, 1
      %s32 = scalar_select %p29, %s30, %s31
      %p35 = pneg %p29
      %p36 = scmp.eq.s32.totalorder %s20, 1
      %p37 = por %p35, %p36
      %p38 = scmp.ne.s32.totalorder %s30, %s33
      %p39 = scmp.eq.s32.totalorder %s20, 0
      %p40 = por %p38, %p39
      %p41 = scmp.ne.s32.totalorder %s30, %s33
      %p42 = scmp.eq.s32.totalorder %s25, 1
      %p43 = por %p41, %p42
      %p44 = scmp.ne.s32.totalorder %s33, %s34
      %p45 = scmp.eq.s32.totalorder %s25, 0
      %p46 = por %p44, %p45
      %p47 = scmp.ne.s32.totalorder %s33, %s34
      %p48 = scmp.eq.s32.totalorder %s26, 1
      %p49 = por %p47, %p48
      %p51 = scmp.ne.s32.totalorder %s34, %s50
      %p52 = scmp.eq.s32.totalorder %s26, 0
      %p53 = por %p51, %p52
      %s55 = sadd.s32 %s54, 1
      %p58 = scmp.eq.s32.totalorder %s20, 1
      %p59 = scmp.ne.s32.totalorder %s54, %s56
      %p60 = scmp.eq.s32.totalorder %s20, 0
      %p61 = por %p59, %p60
      %p62 = scmp.ne.s32.totalorder %s54, %s56
      %p63 = scmp.eq.s32.totalorder %s25, 1
      %p64 = por %p62, %p63
      %p65 = scmp.ne.s32.totalorder %s56, %s57
      %p66 = scmp.eq.s32.totalorder %s25, 0
      %p67 = por %p65, %p66
      %p68 = scmp.ne.s32.totalorder %s56, %s57
      %p69 = scmp.eq.s32.totalorder %s26, 1
      %p70 = por %p68, %p69
      %p72 = scmp.ne.s32.totalorder %s57, %s71
      %p73 = scmp.eq.s32.totalorder %s26, 0
      %p74 = por %p72, %p73
      %s76 = sadd.s32 %s75, 1
      %p79 = scmp.eq.s32.totalorder %s20, 1
      %p80 = scmp.ne.s32.totalorder %s75, %s77
      %p81 = scmp.eq.s32.totalorder %s20, 0
      %p82 = por %p80, %p81
      %p83 = scmp.ne.s32.totalorder %s75, %s77
      %p84 = scmp.eq.s32.totalorder %s25, 1
      %p85 = por %p83, %p84
      %p86 = scmp.ne.s32.totalorder %s77, %s78
      %p87 = scmp.eq.s32.totalorder %s25, 0
      %p88 = por %p86, %p87
      %p89 = scmp.ne.s32.totalorder %s77, %s78
      %p90 = scmp.eq.s32.totalorder %s26, 1
      %p91 = por %p89, %p90
      %p93 = scmp.ne.s32.totalorder %s78, %s92
      %p94 = scmp.eq.s32.totalorder %s26, 0
      %p95 = por %p93, %p94
      %s97 = sadd.s32 %s96, 1
      %p100 = scmp.eq.s32.totalorder %s20, 1
      %p101 = scmp.ne.s32.totalorder %s96, %s98
      %p102 = scmp.eq.s32.totalorder %s20, 0
      %p103 = por %p101, %p102
      %p104 = scmp.ne.s32.totalorder %s96, %s98
      %p105 = scmp.eq.s32.totalorder %s25, 1
      %p106 = por %p104, %p105
      %p107 = scmp.ne.s32.totalorder %s98, %s99
      %p108 = scmp.eq.s32.totalorder %s25, 0
      %p109 = por %p107, %p108
      %p110 = scmp.ne.s32.totalorder %s98, %s99
      %p111 = scmp.eq.s32.totalorder %s26, 1
      %p112 = por %p110, %p111
      %p114 = scmp.ne.s32.totalorder %s99, %s113
      %p115 = scmp.eq.s32.totalorder %s26, 0
      %p116 = por %p114, %p115
      %s118 = sadd.s32 %s117, 1
      %p121 = scmp.eq.s32.totalorder %s20, 1
      %p122 = scmp.ne.s32.totalorder %s117, %s119
      %p123 = scmp.eq.s32.totalorder %s20, 0
      %p124 = por %p122, %p123
      %p125 = scmp.ne.s32.totalorder %s117, %s119
      %p126 = scmp.eq.s32.totalorder %s25, 1
      %p127 = por %p125, %p126
      %p128 = scmp.ne.s32.totalorder %s119, %s120
      %p129 = scmp.eq.s32.totalorder %s25, 0
      %p130 = por %p128, %p129
      %p131 = scmp.ne.s32.totalorder %s119, %s120
      %p132 = scmp.eq.s32.totalorder %s26, 1
      %p133 = por %p131, %p132
      %p135 = scmp.ne.s32.totalorder %s120, %s134
      %p136 = scmp.eq.s32.totalorder %s26, 0
      %p137 = por %p135, %p136
      %s138 = ssub.s32 %s20, %s27
      %p139 = scmp.eq.s32.totalorder %s138, 0
      %s141 = sadd.s32 %s140, 1
      %s142 = scalar_select %p139, %s140, %s141
      %p145 = pneg %p139
      %p146 = scmp.eq.s32.totalorder %s20, 1
      %p147 = por %p145, %p146
      %p148 = scmp.ne.s32.totalorder %s140, %s143
      %p149 = scmp.eq.s32.totalorder %s20, 0
      %p150 = por %p148, %p149
      %p151 = scmp.ne.s32.totalorder %s140, %s143
      %p152 = scmp.eq.s32.totalorder %s25, 1
      %p153 = por %p151, %p152
      %p154 = scmp.ne.s32.totalorder %s143, %s144
      %p155 = scmp.eq.s32.totalorder %s25, 0
      %p156 = por %p154, %p155
      %p157 = scmp.ne.s32.totalorder %s143, %s144
      %p158 = scmp.eq.s32.totalorder %s26, 1
      %p159 = por %p157, %p158
      %p161 = scmp.ne.s32.totalorder %s144, %s160
      %p162 = scmp.eq.s32.totalorder %s26, 0
      %p163 = por %p161, %p162
      %p164 = scmp.le.s32.totalorder 1, %s20
      %p165 = scmp.lt.s32.totalorder %s20, 3
      %p166 = pnand %p164, %p165
      %p167 = pneg %p166
      // Predicated region
      $region9: #{model_forward_padded.1} parent=5 // pred_check
        _
      $region10: #{model_forward_padded.1} parent=5 // pred_check_branch
        %169 = sbr.rel (%p166) target = $region12
      $region11: #{model_forward_padded.1} parent=5 // pred_region
        %s170 = ssub.s32 %s20, 1
        // Predicated region
        $region13: #{model_forward_padded.1} parent=11 // pred_check
          %p171 = pneg %p67
        $region14: #{model_forward_padded.1} parent=11 // pred_check_branch
          %173 = sbr.rel (%p171) target = $region16
        $region15: #{model_forward_padded.1} parent=11 // pred_region
          %175 = vsyncadd [#allocation7], 0
          %s177 = sshll.u32 %s1, 4
          %s178 = int_to_ptr.vmem [resolvable:$true] %s177
          %180 = dma.vmem_to_smem %s178, 16, [#allocation8], [#allocation7]
        $region16: #{model_forward_padded.1} parent=11 // pred_fallthru
          _
        // Predicated region
        $region17: #{model_forward_padded.1} parent=11 // pred_check
          %p181 = pneg %p88
        $region18: #{model_forward_padded.1} parent=11 // pred_check_branch
          %183 = sbr.rel (%p181) target = $region20
        $region19: #{model_forward_padded.1} parent=11 // pred_region
          _
        $region20: #{model_forward_padded.1} parent=11 // pred_fallthru
          _
        // Predicated region
        $region21: #{model_forward_padded.1} parent=11 // pred_check
          %p184 = pneg %p109
        $region22: #{model_forward_padded.1} parent=11 // pred_check_branch
          %186 = sbr.rel (%p184) target = $region24
        $region23: #{model_forward_padded.1} parent=11 // pred_region
          %188 = vsyncadd [#allocation10], 0
          %s190 = sshll.u32 %s3, 4
          %s191 = int_to_ptr.vmem [resolvable:$true] %s190
          %193 = dma.vmem_to_smem %s191, 16, [#allocation9], [#allocation10]
        $region24: #{model_forward_padded.1} parent=11 // pred_fallthru
          _
        // Predicated region
        $region25: #{model_forward_padded.1} parent=11 // pred_check
          %p194 = pneg %p130
        $region26: #{model_forward_padded.1} parent=11 // pred_check_branch
          %196 = sbr.rel (%p194) target = $region28
        $region27: #{model_forward_padded.1} parent=11 // pred_region
          %198 = vsyncadd [#allocation10], 0
          %s200 = sshll.u32 %s4, 4
          %s201 = int_to_ptr.vmem [resolvable:$true] %s200
          %203 = dma.vmem_to_smem %s201, 16, [#allocation11], [#allocation10]
        $region28: #{model_forward_padded.1} parent=11 // pred_fallthru
          _
      $region12: #{model_forward_padded.1} parent=5 // pred_fallthru
        _
      %p204 = scmp.lt.s32.totalorder %s20, 2
      // Predicated region
      $region29: #{model_forward_padded.1} parent=5 // pred_check
        %p205 = pneg %p204
      $region30: #{model_forward_padded.1} parent=5 // pred_check_branch
        %207 = sbr.rel (%p205) target = $region32
      $region31: #{model_forward_padded.1} parent=5 // pred_region
        // Predicated region
        $region33: #{model_forward_padded.1} parent=31 // pred_check
          %p208 = pneg %p40
        $region34: #{model_forward_padded.1} parent=31 // pred_check_branch
          %210 = sbr.rel (%p208) target = $region36
        $region35: #{model_forward_padded.1} parent=31 // pred_region
          %s211 = sand.u32 %s30, 1
          %s212 = scalar_lea.sflag [#allocation5], %s211
          %s213 = sand.u32 %s30, 1
          %s214 = smul.addr %s213, 192
          %s215 = scalar_lea.vmem [#allocation4], %s214
          %217 = vsyncadd %s212, 0
          %s218 = smul.addr %s20, 24
          %s219 = smul.addr %s218, 8
          %s220 = scalar_lea.hbm %s0, %s219
          %s221 = sshll.u32 %s220, 4
          %s222 = int_to_ptr.hbm [resolvable:$true] %s221
          %s223 = sshll.u32 %s215, 4
          %s224 = int_to_ptr.vmem [resolvable:$true] %s223
          %229 = dma.hbm_to_vmem [thread:$0]  %s222, 3072, %s224, %s212, 128, 128, 8
        $region36: #{model_forward_padded.1} parent=31 // pred_fallthru
          _
      $region32: #{model_forward_padded.1} parent=5 // pred_fallthru
        _
      %p230 = scmp.le.s32.totalorder 1, %s20
      %p231 = scmp.lt.s32.totalorder %s20, 3
      %p232 = pnand %p230, %p231
      %p233 = pneg %p232
      // Predicated region
      $region37: #{model_forward_padded.1} parent=5 // pred_check
        _
      $region38: #{model_forward_padded.1} parent=5 // pred_check_branch
        %235 = sbr.rel (%p232) target = $region40
      $region39: #{model_forward_padded.1} parent=5 // pred_region
        %s236 = ssub.s32 %s20, 1
        %s237 = sand.u32 %s33, 1
        %s238 = scalar_lea.sflag [#allocation5], %s237
        %s239 = sand.u32 %s33, 1
        %s240 = smul.addr %s239, 192
        %s241 = scalar_lea.vmem [#allocation4], %s240
        // Predicated region
        $region41: #{model_forward_padded.1} parent=39 // pred_check
          %p242 = pneg %p46
        $region42: #{model_forward_padded.1} parent=39 // pred_check_branch
          %244 = sbr.rel (%p242) target = $region44
        $region43: #{model_forward_padded.1} parent=39 // pred_region
          %246 = dma.done %s238, 3072
        $region44: #{model_forward_padded.1} parent=39 // pred_fallthru
          _
        // Predicated region
        $region45: #{model_forward_padded.1} parent=39 // pred_check
          %p247 = pneg %p67
        $region46: #{model_forward_padded.1} parent=39 // pred_check_branch
          %249 = sbr.rel (%p247) target = $region48
        $region47: #{model_forward_padded.1} parent=39 // pred_region
          %251 = dma.done [#allocation7], 16
        $region48: #{model_forward_padded.1} parent=39 // pred_fallthru
          _
        // Predicated region
        $region49: #{model_forward_padded.1} parent=39 // pred_check
          %p252 = pneg %p109
        $region50: #{model_forward_padded.1} parent=39 // pred_check_branch
          %254 = sbr.rel (%p252) target = $region52
        $region51: #{model_forward_padded.1} parent=39 // pred_region
          %256 = dma.done [#allocation10], 16
        $region52: #{model_forward_padded.1} parent=39 // pred_fallthru
          _
        // Predicated region
        $region53: #{model_forward_padded.1} parent=39 // pred_check
          %p257 = pneg %p130
        $region54: #{model_forward_padded.1} parent=39 // pred_check_branch
          %259 = sbr.rel (%p257) target = $region56
        $region55: #{model_forward_padded.1} parent=39 // pred_region
          %261 = dma.done [#allocation10], 16
        $region56: #{model_forward_padded.1} parent=39 // pred_fallthru
          _
        %262 = sfence
        %s263 = sand.u32 %s33, 1
        %s264 = scalar_lea.sflag [#allocation5], %s263
        %s265 = sand.u32 %s33, 1
        %s266 = smul.addr %s265, 192
        %s267 = scalar_lea.vmem [#allocation4], %s266
        %p268 = pneg %p46
        %p269 = pneg %p43
        %p270 = pneg %p67
        %p271 = pneg %p64
        %p272 = pneg %p88
        %p273 = pneg %p85
        %p274 = pneg %p109
        %p275 = pneg %p106
        %p276 = pneg %p130
        %p277 = pneg %p127
        %p278 = pneg %p156
        %p279 = pneg %p153
        %s280 = sand.u32 %s143, 1
        %s281 = scalar_lea.sflag [#allocation6], %s280
        %s282 = sand.u32 %s143, 1
        %s283 = smul.addr %s282, 128
        %s284 = scalar_lea.vmem [#allocation12], %s283
        %285 = vst [vmem:[#allocation2] sm:$0xff] 0.0
        %286 = vst [vmem:[#allocation2 + $0x8] sm:$0xff] 0.0
        %287 = vst [vmem:[#allocation2 + $0x10] sm:$0xff] 0.0
        %288 = vst [vmem:[#allocation2 + $0x18] sm:$0xff] 0.0
        %289 = vst [vmem:[#allocation2 + $0x20] sm:$0xff] 0.0
        %290 = vst [vmem:[#allocation2 + $0x28] sm:$0xff] 0.0
        %291 = vst [vmem:[#allocation2 + $0x30] sm:$0xff] 0.0
        %292 = vst [vmem:[#allocation2 + $0x38] sm:$0xff] 0.0
        %293 = vst [vmem:[#allocation2 + $0x40] sm:$0xff] 0.0
        %294 = vst [vmem:[#allocation2 + $0x48] sm:$0xff] 0.0
        %295 = vst [vmem:[#allocation2 + $0x50] sm:$0xff] 0.0
        %296 = vst [vmem:[#allocation2 + $0x58] sm:$0xff] 0.0
        %297 = vst [vmem:[#allocation2 + $0x60] sm:$0xff] 0.0
        %298 = vst [vmem:[#allocation2 + $0x68] sm:$0xff] 0.0
        %299 = vst [vmem:[#allocation2 + $0x70] sm:$0xff] 0.0
        %300 = vst [vmem:[#allocation2 + $0x78] sm:$0xff] 0.0
        %301 = vst [vmem:[#allocation2 + $0x80] sm:$0xff] 0.0
        %302 = vst [vmem:[#allocation2 + $0x88] sm:$0xff] 0.0
        %303 = vst [vmem:[#allocation2 + $0x90] sm:$0xff] 0.0
        %304 = vst [vmem:[#allocation2 + $0x98] sm:$0xff] 0.0
        %305 = vst [vmem:[#allocation2 + $0xa0] sm:$0xff] 0.0
        %306 = vst [vmem:[#allocation2 + $0xa8] sm:$0xff] 0.0
        %307 = vst [vmem:[#allocation2 + $0xb0] sm:$0xff] 0.0
        %308 = vst [vmem:[#allocation2 + $0xb8] sm:$0xff] 0.0
        %309 = vst [vmem:[#allocation2 + $0xc0] sm:$0xff] 0.0
        %310 = vst [vmem:[#allocation2 + $0xc8] sm:$0xff] 0.0
        %311 = vst [vmem:[#allocation2 + $0xd0] sm:$0xff] 0.0
        %312 = vst [vmem:[#allocation2 + $0xd8] sm:$0xff] 0.0
        %313 = vst [vmem:[#allocation2 + $0xe0] sm:$0xff] 0.0
        %314 = vst [vmem:[#allocation2 + $0xe8] sm:$0xff] 0.0
        %v315 = vld [vmem:[%s241] sm:$0xff]
        %v316 = vld [vmem:[%s241 + $0x8] sm:$0xff]
        %v317 = vld [vmem:[%s241 + $0x10] sm:$0xff]
        %v318 = vld [vmem:[%s241 + $0x18] sm:$0xff]
        %v319 = vld [vmem:[%s241 + $0x20] sm:$0xff]
        %v320 = vld [vmem:[%s241 + $0x28] sm:$0xff]
        %v321 = vld [vmem:[%s241 + $0x30] sm:$0xff]
        %v322 = vld [vmem:[%s241 + $0x38] sm:$0xff]
        %vm323 = vcmask 523264
        %324 = vst.msk [vmem:[#allocation2 + $0x8] sm:$0xff] %vm323, %v315
        %325 = vst.msk [vmem:[#allocation2 + $0x10] sm:$0xff] %vm323, %v316
        %326 = vst.msk [vmem:[#allocation2 + $0x18] sm:$0xff] %vm323, %v317
        %327 = vst.msk [vmem:[#allocation2 + $0x20] sm:$0xff] %vm323, %v318
        %328 = vst.msk [vmem:[#allocation2 + $0x28] sm:$0xff] %vm323, %v319
        %329 = vst.msk [vmem:[#allocation2 + $0x30] sm:$0xff] %vm323, %v320
        %330 = vst.msk [vmem:[#allocation2 + $0x38] sm:$0xff] %vm323, %v321
        %331 = vst.msk [vmem:[#allocation2 + $0x40] sm:$0xff] %vm323, %v322
        %s332 = scalar_lea.vmem %s241, 64 [#allocation4]
        %v333 = vld [vmem:[%s332] sm:$0xff]
        %v334 = vld [vmem:[%s332 + $0x8] sm:$0xff]
        %v335 = vld [vmem:[%s332 + $0x10] sm:$0xff]
        %v336 = vld [vmem:[%s332 + $0x18] sm:$0xff]
        %v337 = vld [vmem:[%s332 + $0x20] sm:$0xff]
        %v338 = vld [vmem:[%s332 + $0x28] sm:$0xff]
        %v339 = vld [vmem:[%s332 + $0x30] sm:$0xff]
        %v340 = vld [vmem:[%s332 + $0x38] sm:$0xff]
        %s341 = scalar_lea.vmem [#allocation2], 80
        %342 = vst.msk [vmem:[%s341 + $0x8] sm:$0xff] %vm323, %v333
        %343 = vst.msk [vmem:[%s341 + $0x10] sm:$0xff] %vm323, %v334
        %344 = vst.msk [vmem:[%s341 + $0x18] sm:$0xff] %vm323, %v335
        %345 = vst.msk [vmem:[%s341 + $0x20] sm:$0xff] %vm323, %v336
        %346 = vst.msk [vmem:[%s341 + $0x28] sm:$0xff] %vm323, %v337
        %347 = vst.msk [vmem:[%s341 + $0x30] sm:$0xff] %vm323, %v338
        %348 = vst.msk [vmem:[%s341 + $0x38] sm:$0xff] %vm323, %v339
        %349 = vst.msk [vmem:[%s341 + $0x40] sm:$0xff] %vm323, %v340
        %s350 = scalar_lea.vmem %s241, 128 [#allocation4]
        %v351 = vld [vmem:[%s350] sm:$0xff]
        %v352 = vld [vmem:[%s350 + $0x8] sm:$0xff]
        %v353 = vld [vmem:[%s350 + $0x10] sm:$0xff]
        %v354 = vld [vmem:[%s350 + $0x18] sm:$0xff]
        %v355 = vld [vmem:[%s350 + $0x20] sm:$0xff]
        %v356 = vld [vmem:[%s350 + $0x28] sm:$0xff]
        %v357 = vld [vmem:[%s350 + $0x30] sm:$0xff]
        %v358 = vld [vmem:[%s350 + $0x38] sm:$0xff]
        %s359 = scalar_lea.vmem [#allocation2], 160
        %360 = vst.msk [vmem:[%s359 + $0x8] sm:$0xff] %vm323, %v351
        %361 = vst.msk [vmem:[%s359 + $0x10] sm:$0xff] %vm323, %v352
        %362 = vst.msk [vmem:[%s359 + $0x18] sm:$0xff] %vm323, %v353
        %363 = vst.msk [vmem:[%s359 + $0x20] sm:$0xff] %vm323, %v354
        %364 = vst.msk [vmem:[%s359 + $0x28] sm:$0xff] %vm323, %v355
        %365 = vst.msk [vmem:[%s359 + $0x30] sm:$0xff] %vm323, %v356
        %366 = vst.msk [vmem:[%s359 + $0x38] sm:$0xff] %vm323, %v357
        %367 = vst.msk [vmem:[%s359 + $0x40] sm:$0xff] %vm323, %v358
        %s368 = sld [smem:[#allocation3]]
        %v369 = vstv %s368
        %v370 = vld [vmem:[#allocation2] sm:$0xff]
        %v371 = vld [vmem:[#allocation2 + $0x8] sm:$0xff]
        %v372 = vld [vmem:[#allocation2 + $0x10] sm:$0xff]
        %v373 = vld [vmem:[#allocation2 + $0x18] sm:$0xff]
        %v374 = vld [vmem:[#allocation2 + $0x20] sm:$0xff]
        %v375 = vld [vmem:[#allocation2 + $0x28] sm:$0xff]
        %v376 = vld [vmem:[#allocation2 + $0x30] sm:$0xff]
        %v377 = vld [vmem:[#allocation2 + $0x38] sm:$0xff]
        %v378 = vld [vmem:[#allocation2 + $0x40] sm:$0xff]
        %v379 = vld [vmem:[#allocation2 + $0x48] sm:$0xff]
        %vm390 = vcmask 1040384
        %v391 = vrot.slane %v370, 7
        %v392 = vrot.slane %v371, 7
        %v393 = vsel %vm390, %v391, %v392
        %v394 = vrot.slane %v372, 7
        %v395 = vsel %vm390, %v392, %v394
        %v396 = vrot.slane %v373, 7
        %v397 = vsel %vm390, %v394, %v396
        %v398 = vrot.slane %v374, 7
        %v399 = vsel %vm390, %v396, %v398
        %v400 = vrot.slane %v375, 7
        %v401 = vsel %vm390, %v398, %v400
        %v402 = vrot.slane %v376, 7
        %v403 = vsel %vm390, %v400, %v402
        %v404 = vrot.slane %v377, 7
        %v405 = vsel %vm390, %v402, %v404
        %v406 = vrot.slane %v378, 7
        %v407 = vsel %vm390, %v404, %v406
        %v408 = vrot.slane %v379, 7
        %v409 = vsel %vm390, %v406, %v408
        %419 = vrot.lane.b32.xlu0 %v393, 1
        %v420 = vpop.permute.xlu0 %419
        %421 = vrot.lane.b32.xlu0 %v395, 1
        %v422 = vpop.permute.xlu0 %421
        %423 = vrot.lane.b32.xlu0 %v397, 1
        %v424 = vpop.permute.xlu0 %423
        %425 = vrot.lane.b32.xlu0 %v399, 1
        %v426 = vpop.permute.xlu0 %425
        %427 = vrot.lane.b32.xlu0 %v401, 1
        %v428 = vpop.permute.xlu0 %427
        %429 = vrot.lane.b32.xlu0 %v403, 1
        %v430 = vpop.permute.xlu0 %429
        %431 = vrot.lane.b32.xlu0 %v405, 1
        %v432 = vpop.permute.xlu0 %431
        %433 = vrot.lane.b32.xlu0 %v407, 1
        %v434 = vpop.permute.xlu0 %433
        %435 = vrot.lane.b32.xlu0 %v409, 1
        %v436 = vpop.permute.xlu0 %435
        %s437 = sld [smem:[#allocation8]]
        %v438 = vstv %s437
        %v439 = vmul.f32 %v438, %v420
        %v440 = vmul.f32 %v438, %v422
        %v441 = vmul.f32 %v438, %v424
        %v442 = vmul.f32 %v438, %v426
        %v443 = vmul.f32 %v438, %v428
        %v444 = vmul.f32 %v438, %v430
        %v445 = vmul.f32 %v438, %v432
        %v446 = vmul.f32 %v438, %v434
        %v447 = vmul.f32 %v438, %v436
        %v448 = vadd.f32 %v369, %v439
        %v449 = vadd.f32 %v369, %v440
        %v450 = vadd.f32 %v369, %v441
        %v451 = vadd.f32 %v369, %v442
        %v452 = vadd.f32 %v369, %v443
        %v453 = vadd.f32 %v369, %v444
        %v454 = vadd.f32 %v369, %v445
        %v455 = vadd.f32 %v369, %v446
        %v456 = vadd.f32 %v369, %v447
        %s457 = sld [smem:[#allocation8 + $0x1]]
        %v458 = vstv %s457
        %v459 = vmul.f32 %v458, %v370
        %v460 = vmul.f32 %v458, %v371
        %v461 = vmul.f32 %v458, %v372
        %v462 = vmul.f32 %v458, %v373
        %v463 = vmul.f32 %v458, %v374
        %v464 = vmul.f32 %v458, %v375
        %v465 = vmul.f32 %v458, %v376
        %v466 = vmul.f32 %v458, %v377
        %v467 = vmul.f32 %v458, %v378
        %v468 = vmul.f32 %v458, %v379
        %v479 = vrot.slane %v459, 7
        %v480 = vrot.slane %v460, 7
        %v481 = vsel %vm390, %v479, %v480
        %v482 = vrot.slane %v461, 7
        %v483 = vsel %vm390, %v480, %v482
        %v484 = vrot.slane %v462, 7
        %v485 = vsel %vm390, %v482, %v484
        %v486 = vrot.slane %v463, 7
        %v487 = vsel %vm390, %v484, %v486
        %v488 = vrot.slane %v464, 7
        %v489 = vsel %vm390, %v486, %v488
        %v490 = vrot.slane %v465, 7
        %v491 = vsel %vm390, %v488, %v490
        %v492 = vrot.slane %v466, 7
        %v493 = vsel %vm390, %v490, %v492
        %v494 = vrot.slane %v467, 7
        %v495 = vsel %vm390, %v492, %v494
        %v496 = vrot.slane %v468, 7
        %v497 = vsel %vm390, %v494, %v496
        %v507 = vadd.f32 %v448, %v481
        %v508 = vadd.f32 %v449, %v483
        %v509 = vadd.f32 %v450, %v485
        %v510 = vadd.f32 %v451, %v487
        %v511 = vadd.f32 %v452, %v489
        %v512 = vadd.f32 %v453, %v491
        %v513 = vadd.f32 %v454, %v493
        %v514 = vadd.f32 %v455, %v495
        %v515 = vadd.f32 %v456, %v497
        %516 = vrot.lane.b32.xlu0 %v393, 127
        %v517 = vpop.permute.xlu0 %516
        %518 = vrot.lane.b32.xlu0 %v395, 127
        %v519 = vpop.permute.xlu0 %518
        %520 = vrot.lane.b32.xlu0 %v397, 127
        %v521 = vpop.permute.xlu0 %520
        %522 = vrot.lane.b32.xlu0 %v399, 127
        %v523 = vpop.permute.xlu0 %522
        %524 = vrot.lane.b32.xlu0 %v401, 127
        %v525 = vpop.permute.xlu0 %524
        %526 = vrot.lane.b32.xlu0 %v403, 127
        %v527 = vpop.permute.xlu0 %526
        %528 = vrot.lane.b32.xlu0 %v405, 127
        %v529 = vpop.permute.xlu0 %528
        %530 = vrot.lane.b32.xlu0 %v407, 127
        %v531 = vpop.permute.xlu0 %530
        %532 = vrot.lane.b32.xlu0 %v409, 127
        %v533 = vpop.permute.xlu0 %532
        %s534 = sld [smem:[#allocation8 + $0x2]]
        %v535 = vstv %s534
        %v536 = vmul.f32 %v535, %v517
        %v537 = vmul.f32 %v535, %v519
        %v538 = vmul.f32 %v535, %v521
        %v539 = vmul.f32 %v535, %v523
        %v540 = vmul.f32 %v535, %v525
        %v541 = vmul.f32 %v535, %v527
        %v542 = vmul.f32 %v535, %v529
        %v543 = vmul.f32 %v535, %v531
        %v544 = vmul.f32 %v535, %v533
        %v545 = vadd.f32 %v507, %v536
        %v546 = vadd.f32 %v508, %v537
        %v547 = vadd.f32 %v509, %v538
        %v548 = vadd.f32 %v510, %v539
        %v549 = vadd.f32 %v511, %v540
        %v550 = vadd.f32 %v512, %v541
        %v551 = vadd.f32 %v513, %v542
        %v552 = vadd.f32 %v514, %v543
        %v553 = vadd.f32 %v515, %v544
        %554 = vrot.lane.b32.xlu0 %v393, 126
        %v555 = vpop.permute.xlu0 %554
        %556 = vrot.lane.b32.xlu0 %v395, 126
        %v557 = vpop.permute.xlu0 %556
        %558 = vrot.lane.b32.xlu0 %v397, 126
        %v559 = vpop.permute.xlu0 %558
        %560 = vrot.lane.b32.xlu0 %v399, 126
        %v561 = vpop.permute.xlu0 %560
        %562 = vrot.lane.b32.xlu0 %v401, 126
        %v563 = vpop.permute.xlu0 %562
        %564 = vrot.lane.b32.xlu0 %v403, 126
        %v565 = vpop.permute.xlu0 %564
        %566 = vrot.lane.b32.xlu0 %v405, 126
        %v567 = vpop.permute.xlu0 %566
        %568 = vrot.lane.b32.xlu0 %v407, 126
        %v569 = vpop.permute.xlu0 %568
        %570 = vrot.lane.b32.xlu0 %v409, 126
        %v571 = vpop.permute.xlu0 %570
        %s572 = sld [smem:[#allocation8 + $0x3]]
        %v573 = vstv %s572
        %v574 = vmul.f32 %v573, %v555
        %v575 = vmul.f32 %v573, %v557
        %v576 = vmul.f32 %v573, %v559
        %v577 = vmul.f32 %v573, %v561
        %v578 = vmul.f32 %v573, %v563
        %v579 = vmul.f32 %v573, %v565
        %v580 = vmul.f32 %v573, %v567
        %v581 = vmul.f32 %v573, %v569
        %v582 = vmul.f32 %v573, %v571
        %v583 = vadd.f32 %v545, %v574
        %v584 = vadd.f32 %v546, %v575
        %v585 = vadd.f32 %v547, %v576
        %v586 = vadd.f32 %v548, %v577
        %v587 = vadd.f32 %v549, %v578
        %v588 = vadd.f32 %v550, %v579
        %v589 = vadd.f32 %v551, %v580
        %v590 = vadd.f32 %v552, %v581
        %v591 = vadd.f32 %v553, %v582
        %592 = vrot.lane.b32.xlu0 %v371, 1
        %v593 = vpop.permute.xlu0 %592
        %594 = vrot.lane.b32.xlu0 %v372, 1
        %v595 = vpop.permute.xlu0 %594
        %596 = vrot.lane.b32.xlu0 %v373, 1
        %v597 = vpop.permute.xlu0 %596
        %598 = vrot.lane.b32.xlu0 %v374, 1
        %v599 = vpop.permute.xlu0 %598
        %600 = vrot.lane.b32.xlu0 %v375, 1
        %v601 = vpop.permute.xlu0 %600
        %602 = vrot.lane.b32.xlu0 %v376, 1
        %v603 = vpop.permute.xlu0 %602
        %604 = vrot.lane.b32.xlu0 %v377, 1
        %v605 = vpop.permute.xlu0 %604
        %606 = vrot.lane.b32.xlu0 %v378, 1
        %v607 = vpop.permute.xlu0 %606
        %608 = vrot.lane.b32.xlu0 %v379, 1
        %v609 = vpop.permute.xlu0 %608
        %s610 = sld [smem:[#allocation8 + $0x4]]
        %v611 = vstv %s610
        %v612 = vmul.f32 %v611, %v593
        %v613 = vmul.f32 %v611, %v595
        %v614 = vmul.f32 %v611, %v597
        %v615 = vmul.f32 %v611, %v599
        %v616 = vmul.f32 %v611, %v601
        %v617 = vmul.f32 %v611, %v603
        %v618 = vmul.f32 %v611, %v605
        %v619 = vmul.f32 %v611, %v607
        %v620 = vmul.f32 %v611, %v609
        %v621 = vadd.f32 %v583, %v612
        %v622 = vadd.f32 %v584, %v613
        %v623 = vadd.f32 %v585, %v614
        %v624 = vadd.f32 %v586, %v615
        %v625 = vadd.f32 %v587, %v616
        %v626 = vadd.f32 %v588, %v617
        %v627 = vadd.f32 %v589, %v618
        %v628 = vadd.f32 %v590, %v619
        %v629 = vadd.f32 %v591, %v620
        %s630 = sld [smem:[#allocation8 + $0x5]]
        %v631 = vstv %s630
        %v632 = vmul.f32 %v631, %v371
        %v633 = vmul.f32 %v631, %v372
        %v634 = vmul.f32 %v631, %v373
        %v635 = vmul.f32 %v631, %v374
        %v636 = vmul.f32 %v631, %v375
        %v637 = vmul.f32 %v631, %v376
        %v638 = vmul.f32 %v631, %v377
        %v639 = vmul.f32 %v631, %v378
        %v640 = vmul.f32 %v631, %v379
        %v641 = vadd.f32 %v621, %v632
        %v642 = vadd.f32 %v622, %v633
        %v643 = vadd.f32 %v623, %v634
        %v644 = vadd.f32 %v624, %v635
        %v645 = vadd.f32 %v625, %v636
        %v646 = vadd.f32 %v626, %v637
        %v647 = vadd.f32 %v627, %v638
        %v648 = vadd.f32 %v628, %v639
        %v649 = vadd.f32 %v629, %v640
        %650 = vrot.lane.b32.xlu0 %v371, 127
        %v651 = vpop.permute.xlu0 %650
        %652 = vrot.lane.b32.xlu0 %v372, 127
        %v653 = vpop.permute.xlu0 %652
        %654 = vrot.lane.b32.xlu0 %v373, 127
        %v655 = vpop.permute.xlu0 %654
        %656 = vrot.lane.b32.xlu0 %v374, 127
        %v657 = vpop.permute.xlu0 %656
        %658 = vrot.lane.b32.xlu0 %v375, 127
        %v659 = vpop.permute.xlu0 %658
        %660 = vrot.lane.b32.xlu0 %v376, 127
        %v661 = vpop.permute.xlu0 %660
        %662 = vrot.lane.b32.xlu0 %v377, 127
        %v663 = vpop.permute.xlu0 %662
        %664 = vrot.lane.b32.xlu0 %v378, 127
        %v665 = vpop.permute.xlu0 %664
        %666 = vrot.lane.b32.xlu0 %v379, 127
        %v667 = vpop.permute.xlu0 %666
        %s668 = sld [smem:[#allocation8 + $0x6]]
        %v669 = vstv %s668
        %v670 = vmul.f32 %v669, %v651
        %v671 = vmul.f32 %v669, %v653
        %v672 = vmul.f32 %v669, %v655
        %v673 = vmul.f32 %v669, %v657
        %v674 = vmul.f32 %v669, %v659
        %v675 = vmul.f32 %v669, %v661
        %v676 = vmul.f32 %v669, %v663
        %v677 = vmul.f32 %v669, %v665
        %v678 = vmul.f32 %v669, %v667
        %v679 = vadd.f32 %v641, %v670
        %v680 = vadd.f32 %v642, %v671
        %v681 = vadd.f32 %v643, %v672
        %v682 = vadd.f32 %v644, %v673
        %v683 = vadd.f32 %v645, %v674
        %v684 = vadd.f32 %v646, %v675
        %v685 = vadd.f32 %v647, %v676
        %v686 = vadd.f32 %v648, %v677
        %v687 = vadd.f32 %v649, %v678
        %688 = vrot.lane.b32.xlu0 %v371, 126
        %v689 = vpop.permute.xlu0 %688
        %690 = vrot.lane.b32.xlu0 %v372, 126
        %v691 = vpop.permute.xlu0 %690
        %692 = vrot.lane.b32.xlu0 %v373, 126
        %v693 = vpop.permute.xlu0 %692
        %694 = vrot.lane.b32.xlu0 %v374, 126
        %v695 = vpop.permute.xlu0 %694
        %696 = vrot.lane.b32.xlu0 %v375, 126
        %v697 = vpop.permute.xlu0 %696
        %698 = vrot.lane.b32.xlu0 %v376, 126
        %v699 = vpop.permute.xlu0 %698
        %700 = vrot.lane.b32.xlu0 %v377, 126
        %v701 = vpop.permute.xlu0 %700
        %702 = vrot.lane.b32.xlu0 %v378, 126
        %v703 = vpop.permute.xlu0 %702
        %704 = vrot.lane.b32.xlu0 %v379, 126
        %v705 = vpop.permute.xlu0 %704
        %s706 = sld [smem:[#allocation8 + $0x7]]
        %v707 = vstv %s706
        %v708 = vmul.f32 %v707, %v689
        %v709 = vmul.f32 %v707, %v691
        %v710 = vmul.f32 %v707, %v693
        %v711 = vmul.f32 %v707, %v695
        %v712 = vmul.f32 %v707, %v697
        %v713 = vmul.f32 %v707, %v699
        %v714 = vmul.f32 %v707, %v701
        %v715 = vmul.f32 %v707, %v703
        %v716 = vmul.f32 %v707, %v705
        %v717 = vadd.f32 %v679, %v708
        %v718 = vadd.f32 %v680, %v709
        %v719 = vadd.f32 %v681, %v710
        %v720 = vadd.f32 %v682, %v711
        %v721 = vadd.f32 %v683, %v712
        %v722 = vadd.f32 %v684, %v713
        %v723 = vadd.f32 %v685, %v714
        %v724 = vadd.f32 %v686, %v715
        %v725 = vadd.f32 %v687, %v716
        %vm726 = vcmask 1046528
        %v727 = vrot.slane %v371, 1
        %v728 = vrot.slane %v372, 1
        %v729 = vsel %vm726, %v727, %v728
        %v730 = vrot.slane %v373, 1
        %v731 = vsel %vm726, %v728, %v730
        %v732 = vrot.slane %v374, 1
        %v733 = vsel %vm726, %v730, %v732
        %v734 = vrot.slane %v375, 1
        %v735 = vsel %vm726, %v732, %v734
        %v736 = vrot.slane %v376, 1
        %v737 = vsel %vm726, %v734, %v736
        %v738 = vrot.slane %v377, 1
        %v739 = vsel %vm726, %v736, %v738
        %v740 = vrot.slane %v378, 1
        %v741 = vsel %vm726, %v738, %v740
        %v742 = vrot.slane %v379, 1
        %v743 = vsel %vm726, %v740, %v742
        %753 = vrot.lane.b32.xlu0 %v729, 1
        %v754 = vpop.permute.xlu0 %753
        %755 = vrot.lane.b32.xlu0 %v731, 1
        %v756 = vpop.permute.xlu0 %755
        %757 = vrot.lane.b32.xlu0 %v733, 1
        %v758 = vpop.permute.xlu0 %757
        %759 = vrot.lane.b32.xlu0 %v735, 1
        %v760 = vpop.permute.xlu0 %759
        %761 = vrot.lane.b32.xlu0 %v737, 1
        %v762 = vpop.permute.xlu0 %761
        %763 = vrot.lane.b32.xlu0 %v739, 1
        %v764 = vpop.permute.xlu0 %763
        %765 = vrot.lane.b32.xlu0 %v741, 1
        %v766 = vpop.permute.xlu0 %765
        %767 = vrot.lane.b32.xlu0 %v743, 1
        %v768 = vpop.permute.xlu0 %767
        %769 = vrot.lane.b32.xlu0 %v742, 1
        %v770 = vpop.permute.xlu0 %769
        %s771 = sld [smem:[#allocation8 + $0x8]]
        %v772 = vstv %s771
        %v773 = vmul.f32 %v772, %v754
        %v774 = vmul.f32 %v772, %v756
        %v775 = vmul.f32 %v772, %v758
        %v776 = vmul.f32 %v772, %v760
        %v777 = vmul.f32 %v772, %v762
        %v778 = vmul.f32 %v772, %v764
        %v779 = vmul.f32 %v772, %v766
        %v780 = vmul.f32 %v772, %v768
        %v781 = vmul.f32 %v772, %v770
        %v782 = vadd.f32 %v717, %v773
        %v783 = vadd.f32 %v718, %v774
        %v784 = vadd.f32 %v719, %v775
        %v785 = vadd.f32 %v720, %v776
        %v786 = vadd.f32 %v721, %v777
        %v787 = vadd.f32 %v722, %v778
        %v788 = vadd.f32 %v723, %v779
        %v789 = vadd.f32 %v724, %v780
        %v790 = vadd.f32 %v725, %v781
        %s791 = sld [smem:[#allocation8 + $0x9]]
        %v792 = vstv %s791
        %v793 = vmul.f32 %v792, %v371
        %v794 = vmul.f32 %v792, %v372
        %v795 = vmul.f32 %v792, %v373
        %v796 = vmul.f32 %v792, %v374
        %v797 = vmul.f32 %v792, %v375
        %v798 = vmul.f32 %v792, %v376
        %v799 = vmul.f32 %v792, %v377
        %v800 = vmul.f32 %v792, %v378
        %v801 = vmul.f32 %v792, %v379
        %v811 = vrot.slane %v793, 1
        %v812 = vrot.slane %v794, 1
        %v813 = vsel %vm726, %v811, %v812
        %v814 = vrot.slane %v795, 1
        %v815 = vsel %vm726, %v812, %v814
        %v816 = vrot.slane %v796, 1
        %v817 = vsel %vm726, %v814, %v816
        %v818 = vrot.slane %v797, 1
        %v819 = vsel %vm726, %v816, %v818
        %v820 = vrot.slane %v798, 1
        %v821 = vsel %vm726, %v818, %v820
        %v822 = vrot.slane %v799, 1
        %v823 = vsel %vm726, %v820, %v822
        %v824 = vrot.slane %v800, 1
        %v825 = vsel %vm726, %v822, %v824
        %v826 = vrot.slane %v801, 1
        %v827 = vsel %vm726, %v824, %v826
        %v837 = vadd.f32 %v782, %v813
        %v838 = vadd.f32 %v783, %v815
        %v839 = vadd.f32 %v784, %v817
        %v840 = vadd.f32 %v785, %v819
        %v841 = vadd.f32 %v786, %v821
        %v842 = vadd.f32 %v787, %v823
        %v843 = vadd.f32 %v788, %v825
        %v844 = vadd.f32 %v789, %v827
        %v845 = vadd.f32 %v790, %v826
        %846 = vrot.lane.b32.xlu0 %v729, 127
        %v847 = vpop.permute.xlu0 %846
        %848 = vrot.lane.b32.xlu0 %v731, 127
        %v849 = vpop.permute.xlu0 %848
        %850 = vrot.lane.b32.xlu0 %v733, 127
        %v851 = vpop.permute.xlu0 %850
        %852 = vrot.lane.b32.xlu0 %v735, 127
        %v853 = vpop.permute.xlu0 %852
        %854 = vrot.lane.b32.xlu0 %v737, 127
        %v855 = vpop.permute.xlu0 %854
        %856 = vrot.lane.b32.xlu0 %v739, 127
        %v857 = vpop.permute.xlu0 %856
        %858 = vrot.lane.b32.xlu0 %v741, 127
        %v859 = vpop.permute.xlu0 %858
        %860 = vrot.lane.b32.xlu0 %v743, 127
        %v861 = vpop.permute.xlu0 %860
        %862 = vrot.lane.b32.xlu0 %v742, 127
        %v863 = vpop.permute.xlu0 %862
        %s864 = sld [smem:[#allocation8 + $0xa]]
        %v865 = vstv %s864
        %v866 = vmul.f32 %v865, %v847
        %v867 = vmul.f32 %v865, %v849
        %v868 = vmul.f32 %v865, %v851
        %v869 = vmul.f32 %v865, %v853
        %v870 = vmul.f32 %v865, %v855
        %v871 = vmul.f32 %v865, %v857
        %v872 = vmul.f32 %v865, %v859
        %v873 = vmul.f32 %v865, %v861
        %v874 = vmul.f32 %v865, %v863
        %v875 = vadd.f32 %v837, %v866
        %v876 = vadd.f32 %v838, %v867
        %v877 = vadd.f32 %v839, %v868
        %v878 = vadd.f32 %v840, %v869
        %v879 = vadd.f32 %v841, %v870
        %v880 = vadd.f32 %v842, %v871
        %v881 = vadd.f32 %v843, %v872
        %v882 = vadd.f32 %v844, %v873
        %v883 = vadd.f32 %v845, %v874
        %884 = vrot.lane.b32.xlu0 %v729, 126
        %v885 = vpop.permute.xlu0 %884
        %886 = vrot.lane.b32.xlu0 %v731, 126
        %v887 = vpop.permute.xlu0 %886
        %888 = vrot.lane.b32.xlu0 %v733, 126
        %v889 = vpop.permute.xlu0 %888
        %890 = vrot.lane.b32.xlu0 %v735, 126
        %v891 = vpop.permute.xlu0 %890
        %892 = vrot.lane.b32.xlu0 %v737, 126
        %v893 = vpop.permute.xlu0 %892
        %894 = vrot.lane.b32.xlu0 %v739, 126
        %v895 = vpop.permute.xlu0 %894
        %896 = vrot.lane.b32.xlu0 %v741, 126
        %v897 = vpop.permute.xlu0 %896
        %898 = vrot.lane.b32.xlu0 %v743, 126
        %v899 = vpop.permute.xlu0 %898
        %900 = vrot.lane.b32.xlu0 %v742, 126
        %v901 = vpop.permute.xlu0 %900
        %s902 = sld [smem:[#allocation8 + $0xb]]
        %v903 = vstv %s902
        %v904 = vmul.f32 %v903, %v885
        %v905 = vmul.f32 %v903, %v887
        %v906 = vmul.f32 %v903, %v889
        %v907 = vmul.f32 %v903, %v891
        %v908 = vmul.f32 %v903, %v893
        %v909 = vmul.f32 %v903, %v895
        %v910 = vmul.f32 %v903, %v897
        %v911 = vmul.f32 %v903, %v899
        %v912 = vmul.f32 %v903, %v901
        %v913 = vadd.f32 %v875, %v904
        %v914 = vadd.f32 %v876, %v905
        %v915 = vadd.f32 %v877, %v906
        %v916 = vadd.f32 %v878, %v907
        %v917 = vadd.f32 %v879, %v908
        %v918 = vadd.f32 %v880, %v909
        %v919 = vadd.f32 %v881, %v910
        %v920 = vadd.f32 %v882, %v911
        %v921 = vadd.f32 %v883, %v912
        %vm922 = vcmask 1045504
        %v923 = vrot.slane %v371, 2
        %v924 = vrot.slane %v372, 2
        %v925 = vsel %vm922, %v923, %v924
        %v926 = vrot.slane %v373, 2
        %v927 = vsel %vm922, %v924, %v926
        %v928 = vrot.slane %v374, 2
        %v929 = vsel %vm922, %v926, %v928
        %v930 = vrot.slane %v375, 2
        %v931 = vsel %vm922, %v928, %v930
        %v932 = vrot.slane %v376, 2
        %v933 = vsel %vm922, %v930, %v932
        %v934 = vrot.slane %v377, 2
        %v935 = vsel %vm922, %v932, %v934
        %v936 = vrot.slane %v378, 2
        %v937 = vsel %vm922, %v934, %v936
        %v938 = vrot.slane %v379, 2
        %v939 = vsel %vm922, %v936, %v938
        %949 = vrot.lane.b32.xlu0 %v925, 1
        %v950 = vpop.permute.xlu0 %949
        %951 = vrot.lane.b32.xlu0 %v927, 1
        %v952 = vpop.permute.xlu0 %951
        %953 = vrot.lane.b32.xlu0 %v929, 1
        %v954 = vpop.permute.xlu0 %953
        %955 = vrot.lane.b32.xlu0 %v931, 1
        %v956 = vpop.permute.xlu0 %955
        %957 = vrot.lane.b32.xlu0 %v933, 1
        %v958 = vpop.permute.xlu0 %957
        %959 = vrot.lane.b32.xlu0 %v935, 1
        %v960 = vpop.permute.xlu0 %959
        %961 = vrot.lane.b32.xlu0 %v937, 1
        %v962 = vpop.permute.xlu0 %961
        %963 = vrot.lane.b32.xlu0 %v939, 1
        %v964 = vpop.permute.xlu0 %963
        %965 = vrot.lane.b32.xlu0 %v938, 1
        %v966 = vpop.permute.xlu0 %965
        %s967 = sld [smem:[#allocation8 + $0xc]]
        %v968 = vstv %s967
        %v969 = vmul.f32 %v968, %v950
        %v970 = vmul.f32 %v968, %v952
        %v971 = vmul.f32 %v968, %v954
        %v972 = vmul.f32 %v968, %v956
        %v973 = vmul.f32 %v968, %v958
        %v974 = vmul.f32 %v968, %v960
        %v975 = vmul.f32 %v968, %v962
        %v976 = vmul.f32 %v968, %v964
        %v977 = vmul.f32 %v968, %v966
        %v978 = vadd.f32 %v913, %v969
        %v979 = vadd.f32 %v914, %v970
        %v980 = vadd.f32 %v915, %v971
        %v981 = vadd.f32 %v916, %v972
        %v982 = vadd.f32 %v917, %v973
        %v983 = vadd.f32 %v918, %v974
        %v984 = vadd.f32 %v919, %v975
        %v985 = vadd.f32 %v920, %v976
        %v986 = vadd.f32 %v921, %v977
        %s987 = sld [smem:[#allocation8 + $0xd]]
        %v988 = vstv %s987
        %v989 = vmul.f32 %v988, %v371
        %v990 = vmul.f32 %v988, %v372
        %v991 = vmul.f32 %v988, %v373
        %v992 = vmul.f32 %v988, %v374
        %v993 = vmul.f32 %v988, %v375
        %v994 = vmul.f32 %v988, %v376
        %v995 = vmul.f32 %v988, %v377
        %v996 = vmul.f32 %v988, %v378
        %v997 = vmul.f32 %v988, %v379
        %v1007 = vrot.slane %v989, 2
        %v1008 = vrot.slane %v990, 2
        %v1009 = vsel %vm922, %v1007, %v1008
        %v1010 = vrot.slane %v991, 2
        %v1011 = vsel %vm922, %v1008, %v1010
        %v1012 = vrot.slane %v992, 2
        %v1013 = vsel %vm922, %v1010, %v1012
        %v1014 = vrot.slane %v993, 2
        %v1015 = vsel %vm922, %v1012, %v1014
        %v1016 = vrot.slane %v994, 2
        %v1017 = vsel %vm922, %v1014, %v1016
        %v1018 = vrot.slane %v995, 2
        %v1019 = vsel %vm922, %v1016, %v1018
        %v1020 = vrot.slane %v996, 2
        %v1021 = vsel %vm922, %v1018, %v1020
        %v1022 = vrot.slane %v997, 2
        %v1023 = vsel %vm922, %v1020, %v1022
        %v1033 = vadd.f32 %v978, %v1009
        %v1034 = vadd.f32 %v979, %v1011
        %v1035 = vadd.f32 %v980, %v1013
        %v1036 = vadd.f32 %v981, %v1015
        %v1037 = vadd.f32 %v982, %v1017
        %v1038 = vadd.f32 %v983, %v1019
        %v1039 = vadd.f32 %v984, %v1021
        %v1040 = vadd.f32 %v985, %v1023
        %v1041 = vadd.f32 %v986, %v1022
        %1042 = vrot.lane.b32.xlu0 %v925, 127
        %v1043 = vpop.permute.xlu0 %1042
        %1044 = vrot.lane.b32.xlu0 %v927, 127
        %v1045 = vpop.permute.xlu0 %1044
        %1046 = vrot.lane.b32.xlu0 %v929, 127
        %v1047 = vpop.permute.xlu0 %1046
        %1048 = vrot.lane.b32.xlu0 %v931, 127
        %v1049 = vpop.permute.xlu0 %1048
        %1050 = vrot.lane.b32.xlu0 %v933, 127
        %v1051 = vpop.permute.xlu0 %1050
        %1052 = vrot.lane.b32.xlu0 %v935, 127
        %v1053 = vpop.permute.xlu0 %1052
        %1054 = vrot.lane.b32.xlu0 %v937, 127
        %v1055 = vpop.permute.xlu0 %1054
        %1056 = vrot.lane.b32.xlu0 %v939, 127
        %v1057 = vpop.permute.xlu0 %1056
        %1058 = vrot.lane.b32.xlu0 %v938, 127
        %v1059 = vpop.permute.xlu0 %1058
        %s1060 = sld [smem:[#allocation8 + $0xe]]
        %v1061 = vstv %s1060
        %v1062 = vmul.f32 %v1061, %v1043
        %v1063 = vmul.f32 %v1061, %v1045
        %v1064 = vmul.f32 %v1061, %v1047
        %v1065 = vmul.f32 %v1061, %v1049
        %v1066 = vmul.f32 %v1061, %v1051
        %v1067 = vmul.f32 %v1061, %v1053
        %v1068 = vmul.f32 %v1061, %v1055
        %v1069 = vmul.f32 %v1061, %v1057
        %v1070 = vmul.f32 %v1061, %v1059
        %v1071 = vadd.f32 %v1033, %v1062
        %v1072 = vadd.f32 %v1034, %v1063
        %v1073 = vadd.f32 %v1035, %v1064
        %v1074 = vadd.f32 %v1036, %v1065
        %v1075 = vadd.f32 %v1037, %v1066
        %v1076 = vadd.f32 %v1038, %v1067
        %v1077 = vadd.f32 %v1039, %v1068
        %v1078 = vadd.f32 %v1040, %v1069
        %v1079 = vadd.f32 %v1041, %v1070
        %1080 = vrot.lane.b32.xlu0 %v925, 126
        %v1081 = vpop.permute.xlu0 %1080
        %1082 = vrot.lane.b32.xlu0 %v927, 126
        %v1083 = vpop.permute.xlu0 %1082
        %1084 = vrot.lane.b32.xlu0 %v929, 126
        %v1085 = vpop.permute.xlu0 %1084
        %1086 = vrot.lane.b32.xlu0 %v931, 126
        %v1087 = vpop.permute.xlu0 %1086
        %1088 = vrot.lane.b32.xlu0 %v933, 126
        %v1089 = vpop.permute.xlu0 %1088
        %1090 = vrot.lane.b32.xlu0 %v935, 126
        %v1091 = vpop.permute.xlu0 %1090
        %1092 = vrot.lane.b32.xlu0 %v937, 126
        %v1093 = vpop.permute.xlu0 %1092
        %1094 = vrot.lane.b32.xlu0 %v939, 126
        %v1095 = vpop.permute.xlu0 %1094
        %1096 = vrot.lane.b32.xlu0 %v938, 126
        %v1097 = vpop.permute.xlu0 %1096
        %s1098 = sld [smem:[#allocation8 + $0xf]]
        %v1099 = vstv %s1098
        %v1100 = vmul.f32 %v1099, %v1081
        %v1101 = vmul.f32 %v1099, %v1083
        %v1102 = vmul.f32 %v1099, %v1085
        %v1103 = vmul.f32 %v1099, %v1087
        %v1104 = vmul.f32 %v1099, %v1089
        %v1105 = vmul.f32 %v1099, %v1091
        %v1106 = vmul.f32 %v1099, %v1093
        %v1107 = vmul.f32 %v1099, %v1095
        %v1108 = vmul.f32 %v1099, %v1097
        %v1109 = vadd.f32 %v1071, %v1100
        %v1110 = vadd.f32 %v1072, %v1101
        %v1111 = vadd.f32 %v1073, %v1102
        %v1112 = vadd.f32 %v1074, %v1103
        %v1113 = vadd.f32 %v1075, %v1104
        %v1114 = vadd.f32 %v1076, %v1105
        %v1115 = vadd.f32 %v1077, %v1106
        %v1116 = vadd.f32 %v1078, %v1107
        %v1117 = vadd.f32 %v1079, %v1108
        %v1118 = vld [vmem:[%s341] sm:$0xff]
        %v1119 = vld [vmem:[%s341 + $0x8] sm:$0xff]
        %v1120 = vld [vmem:[%s341 + $0x10] sm:$0xff]
        %v1121 = vld [vmem:[%s341 + $0x18] sm:$0xff]
        %v1122 = vld [vmem:[%s341 + $0x20] sm:$0xff]
        %v1123 = vld [vmem:[%s341 + $0x28] sm:$0xff]
        %v1124 = vld [vmem:[%s341 + $0x30] sm:$0xff]
        %v1125 = vld [vmem:[%s341 + $0x38] sm:$0xff]
        %v1126 = vld [vmem:[%s341 + $0x40] sm:$0xff]
        %v1127 = vld [vmem:[%s341 + $0x48] sm:$0xff]
        %v1138 = vrot.slane %v1118, 7
        %v1139 = vrot.slane %v1119, 7
        %v1140 = vsel %vm390, %v1138, %v1139
        %v1141 = vrot.slane %v1120, 7
        %v1142 = vsel %vm390, %v1139, %v1141
        %v1143 = vrot.slane %v1121, 7
        %v1144 = vsel %vm390, %v1141, %v1143
        %v1145 = vrot.slane %v1122, 7
        %v1146 = vsel %vm390, %v1143, %v1145
        %v1147 = vrot.slane %v1123, 7
        %v1148 = vsel %vm390, %v1145, %v1147
        %v1149 = vrot.slane %v1124, 7
        %v1150 = vsel %vm390, %v1147, %v1149
        %v1151 = vrot.slane %v1125, 7
        %v1152 = vsel %vm390, %v1149, %v1151
        %v1153 = vrot.slane %v1126, 7
        %v1154 = vsel %vm390, %v1151, %v1153
        %v1155 = vrot.slane %v1127, 7
        %v1156 = vsel %vm390, %v1153, %v1155
        %1166 = vrot.lane.b32.xlu0 %v1140, 1
        %v1167 = vpop.permute.xlu0 %1166
        %1168 = vrot.lane.b32.xlu0 %v1142, 1
        %v1169 = vpop.permute.xlu0 %1168
        %1170 = vrot.lane.b32.xlu0 %v1144, 1
        %v1171 = vpop.permute.xlu0 %1170
        %1172 = vrot.lane.b32.xlu0 %v1146, 1
        %v1173 = vpop.permute.xlu0 %1172
        %1174 = vrot.lane.b32.xlu0 %v1148, 1
        %v1175 = vpop.permute.xlu0 %1174
        %1176 = vrot.lane.b32.xlu0 %v1150, 1
        %v1177 = vpop.permute.xlu0 %1176
        %1178 = vrot.lane.b32.xlu0 %v1152, 1
        %v1179 = vpop.permute.xlu0 %1178
        %1180 = vrot.lane.b32.xlu0 %v1154, 1
        %v1181 = vpop.permute.xlu0 %1180
        %1182 = vrot.lane.b32.xlu0 %v1156, 1
        %v1183 = vpop.permute.xlu0 %1182
        %s1184 = sld [smem:[#allocation8 + $0x10]]
        %v1185 = vstv %s1184
        %v1186 = vmul.f32 %v1185, %v1167
        %v1187 = vmul.f32 %v1185, %v1169
        %v1188 = vmul.f32 %v1185, %v1171
        %v1189 = vmul.f32 %v1185, %v1173
        %v1190 = vmul.f32 %v1185, %v1175
        %v1191 = vmul.f32 %v1185, %v1177
        %v1192 = vmul.f32 %v1185, %v1179
        %v1193 = vmul.f32 %v1185, %v1181
        %v1194 = vmul.f32 %v1185, %v1183
        %v1195 = vadd.f32 %v1109, %v1186
        %v1196 = vadd.f32 %v1110, %v1187
        %v1197 = vadd.f32 %v1111, %v1188
        %v1198 = vadd.f32 %v1112, %v1189
        %v1199 = vadd.f32 %v1113, %v1190
        %v1200 = vadd.f32 %v1114, %v1191
        %v1201 = vadd.f32 %v1115, %v1192
        %v1202 = vadd.f32 %v1116, %v1193
        %v1203 = vadd.f32 %v1117, %v1194
        %s1204 = sld [smem:[#allocation8 + $0x11]]
        %v1205 = vstv %s1204
        %v1206 = vmul.f32 %v1205, %v1118
        %v1207 = vmul.f32 %v1205, %v1119
        %v1208 = vmul.f32 %v1205, %v1120
        %v1209 = vmul.f32 %v1205, %v1121
        %v1210 = vmul.f32 %v1205, %v1122
        %v1211 = vmul.f32 %v1205, %v1123
        %v1212 = vmul.f32 %v1205, %v1124
        %v1213 = vmul.f32 %v1205, %v1125
        %v1214 = vmul.f32 %v1205, %v1126
        %v1215 = vmul.f32 %v1205, %v1127
        %v1226 = vrot.slane %v1206, 7
        %v1227 = vrot.slane %v1207, 7
        %v1228 = vsel %vm390, %v1226, %v1227
        %v1229 = vrot.slane %v1208, 7
        %v1230 = vsel %vm390, %v1227, %v1229
        %v1231 = vrot.slane %v1209, 7
        %v1232 = vsel %vm390, %v1229, %v1231
        %v1233 = vrot.slane %v1210, 7
        %v1234 = vsel %vm390, %v1231, %v1233
        %v1235 = vrot.slane %v1211, 7
        %v1236 = vsel %vm390, %v1233, %v1235
        %v1237 = vrot.slane %v1212, 7
        %v1238 = vsel %vm390, %v1235, %v1237
        %v1239 = vrot.slane %v1213, 7
        %v1240 = vsel %vm390, %v1237, %v1239
        %v1241 = vrot.slane %v1214, 7
        %v1242 = vsel %vm390, %v1239, %v1241
        %v1243 = vrot.slane %v1215, 7
        %v1244 = vsel %vm390, %v1241, %v1243
        %v1254 = vadd.f32 %v1195, %v1228
        %v1255 = vadd.f32 %v1196, %v1230
        %v1256 = vadd.f32 %v1197, %v1232
        %v1257 = vadd.f32 %v1198, %v1234
        %v1258 = vadd.f32 %v1199, %v1236
        %v1259 = vadd.f32 %v1200, %v1238
        %v1260 = vadd.f32 %v1201, %v1240
        %v1261 = vadd.f32 %v1202, %v1242
        %v1262 = vadd.f32 %v1203, %v1244
        %1263 = vrot.lane.b32.xlu0 %v1140, 127
        %v1264 = vpop.permute.xlu0 %1263
        %1265 = vrot.lane.b32.xlu0 %v1142, 127
        %v1266 = vpop.permute.xlu0 %1265
        %1267 = vrot.lane.b32.xlu0 %v1144, 127
        %v1268 = vpop.permute.xlu0 %1267
        %1269 = vrot.lane.b32.xlu0 %v1146, 127
        %v1270 = vpop.permute.xlu0 %1269
        %1271 = vrot.lane.b32.xlu0 %v1148, 127
        %v1272 = vpop.permute.xlu0 %1271
        %1273 = vrot.lane.b32.xlu0 %v1150, 127
        %v1274 = vpop.permute.xlu0 %1273
        %1275 = vrot.lane.b32.xlu0 %v1152, 127
        %v1276 = vpop.permute.xlu0 %1275
        %1277 = vrot.lane.b32.xlu0 %v1154, 127
        %v1278 = vpop.permute.xlu0 %1277
        %1279 = vrot.lane.b32.xlu0 %v1156, 127
        %v1280 = vpop.permute.xlu0 %1279
        %s1281 = sld [smem:[#allocation8 + $0x12]]
        %v1282 = vstv %s1281
        %v1283 = vmul.f32 %v1282, %v1264
        %v1284 = vmul.f32 %v1282, %v1266
        %v1285 = vmul.f32 %v1282, %v1268
        %v1286 = vmul.f32 %v1282, %v1270
        %v1287 = vmul.f32 %v1282, %v1272
        %v1288 = vmul.f32 %v1282, %v1274
        %v1289 = vmul.f32 %v1282, %v1276
        %v1290 = vmul.f32 %v1282, %v1278
        %v1291 = vmul.f32 %v1282, %v1280
        %v1292 = vadd.f32 %v1254, %v1283
        %v1293 = vadd.f32 %v1255, %v1284
        %v1294 = vadd.f32 %v1256, %v1285
        %v1295 = vadd.f32 %v1257, %v1286
        %v1296 = vadd.f32 %v1258, %v1287
        %v1297 = vadd.f32 %v1259, %v1288
        %v1298 = vadd.f32 %v1260, %v1289
        %v1299 = vadd.f32 %v1261, %v1290
        %v1300 = vadd.f32 %v1262, %v1291
        %1301 = vrot.lane.b32.xlu0 %v1140, 126
        %v1302 = vpop.permute.xlu0 %1301
        %1303 = vrot.lane.b32.xlu0 %v1142, 126
        %v1304 = vpop.permute.xlu0 %1303
        %1305 = vrot.lane.b32.xlu0 %v1144, 126
        %v1306 = vpop.permute.xlu0 %1305
        %1307 = vrot.lane.b32.xlu0 %v1146, 126
        %v1308 = vpop.permute.xlu0 %1307
        %1309 = vrot.lane.b32.xlu0 %v1148, 126
        %v1310 = vpop.permute.xlu0 %1309
        %1311 = vrot.lane.b32.xlu0 %v1150, 126
        %v1312 = vpop.permute.xlu0 %1311
        %1313 = vrot.lane.b32.xlu0 %v1152, 126
        %v1314 = vpop.permute.xlu0 %1313
        %1315 = vrot.lane.b32.xlu0 %v1154, 126
        %v1316 = vpop.permute.xlu0 %1315
        %1317 = vrot.lane.b32.xlu0 %v1156, 126
        %v1318 = vpop.permute.xlu0 %1317
        %s1319 = sld [smem:[#allocation8 + $0x13]]
        %v1320 = vstv %s1319
        %v1321 = vmul.f32 %v1320, %v1302
        %v1322 = vmul.f32 %v1320, %v1304
        %v1323 = vmul.f32 %v1320, %v1306
        %v1324 = vmul.f32 %v1320, %v1308
        %v1325 = vmul.f32 %v1320, %v1310
        %v1326 = vmul.f32 %v1320, %v1312
        %v1327 = vmul.f32 %v1320, %v1314
        %v1328 = vmul.f32 %v1320, %v1316
        %v1329 = vmul.f32 %v1320, %v1318
        %v1330 = vadd.f32 %v1292, %v1321
        %v1331 = vadd.f32 %v1293, %v1322
        %v1332 = vadd.f32 %v1294, %v1323
        %v1333 = vadd.f32 %v1295, %v1324
        %v1334 = vadd.f32 %v1296, %v1325
        %v1335 = vadd.f32 %v1297, %v1326
        %v1336 = vadd.f32 %v1298, %v1327
        %v1337 = vadd.f32 %v1299, %v1328
        %v1338 = vadd.f32 %v1300, %v1329
        %1339 = vrot.lane.b32.xlu0 %v1119, 1
        %v1340 = vpop.permute.xlu0 %1339
        %1341 = vrot.lane.b32.xlu0 %v1120, 1
        %v1342 = vpop.permute.xlu0 %1341
        %1343 = vrot.lane.b32.xlu0 %v1121, 1
        %v1344 = vpop.permute.xlu0 %1343
        %1345 = vrot.lane.b32.xlu0 %v1122, 1
        %v1346 = vpop.permute.xlu0 %1345
        %1347 = vrot.lane.b32.xlu0 %v1123, 1
        %v1348 = vpop.permute.xlu0 %1347
        %1349 = vrot.lane.b32.xlu0 %v1124, 1
        %v1350 = vpop.permute.xlu0 %1349
        %1351 = vrot.lane.b32.xlu0 %v1125, 1
        %v1352 = vpop.permute.xlu0 %1351
        %1353 = vrot.lane.b32.xlu0 %v1126, 1
        %v1354 = vpop.permute.xlu0 %1353
        %1355 = vrot.lane.b32.xlu0 %v1127, 1
        %v1356 = vpop.permute.xlu0 %1355
        %s1357 = sld [smem:[#allocation8 + $0x14]]
        %v1358 = vstv %s1357
        %v1359 = vmul.f32 %v1358, %v1340
        %v1360 = vmul.f32 %v1358, %v1342
        %v1361 = vmul.f32 %v1358, %v1344
        %v1362 = vmul.f32 %v1358, %v1346
        %v1363 = vmul.f32 %v1358, %v1348
        %v1364 = vmul.f32 %v1358, %v1350
        %v1365 = vmul.f32 %v1358, %v1352
        %v1366 = vmul.f32 %v1358, %v1354
        %v1367 = vmul.f32 %v1358, %v1356
        %v1368 = vadd.f32 %v1330, %v1359
        %v1369 = vadd.f32 %v1331, %v1360
        %v1370 = vadd.f32 %v1332, %v1361
        %v1371 = vadd.f32 %v1333, %v1362
        %v1372 = vadd.f32 %v1334, %v1363
        %v1373 = vadd.f32 %v1335, %v1364
        %v1374 = vadd.f32 %v1336, %v1365
        %v1375 = vadd.f32 %v1337, %v1366
        %v1376 = vadd.f32 %v1338, %v1367
        %s1377 = sld [smem:[#allocation8 + $0x15]]
        %v1378 = vstv %s1377
        %v1379 = vmul.f32 %v1378, %v1119
        %v1380 = vmul.f32 %v1378, %v1120
        %v1381 = vmul.f32 %v1378, %v1121
        %v1382 = vmul.f32 %v1378, %v1122
        %v1383 = vmul.f32 %v1378, %v1123
        %v1384 = vmul.f32 %v1378, %v1124
        %v1385 = vmul.f32 %v1378, %v1125
        %v1386 = vmul.f32 %v1378, %v1126
        %v1387 = vmul.f32 %v1378, %v1127
        %v1388 = vadd.f32 %v1368, %v1379
        %v1389 = vadd.f32 %v1369, %v1380
        %v1390 = vadd.f32 %v1370, %v1381
        %v1391 = vadd.f32 %v1371, %v1382
        %v1392 = vadd.f32 %v1372, %v1383
        %v1393 = vadd.f32 %v1373, %v1384
        %v1394 = vadd.f32 %v1374, %v1385
        %v1395 = vadd.f32 %v1375, %v1386
        %v1396 = vadd.f32 %v1376, %v1387
        %1397 = vrot.lane.b32.xlu0 %v1119, 127
        %v1398 = vpop.permute.xlu0 %1397
        %1399 = vrot.lane.b32.xlu0 %v1120, 127
        %v1400 = vpop.permute.xlu0 %1399
        %1401 = vrot.lane.b32.xlu0 %v1121, 127
        %v1402 = vpop.permute.xlu0 %1401
        %1403 = vrot.lane.b32.xlu0 %v1122, 127
        %v1404 = vpop.permute.xlu0 %1403
        %1405 = vrot.lane.b32.xlu0 %v1123, 127
        %v1406 = vpop.permute.xlu0 %1405
        %1407 = vrot.lane.b32.xlu0 %v1124, 127
        %v1408 = vpop.permute.xlu0 %1407
        %1409 = vrot.lane.b32.xlu0 %v1125, 127
        %v1410 = vpop.permute.xlu0 %1409
        %1411 = vrot.lane.b32.xlu0 %v1126, 127
        %v1412 = vpop.permute.xlu0 %1411
        %1413 = vrot.lane.b32.xlu0 %v1127, 127
        %v1414 = vpop.permute.xlu0 %1413
        %s1415 = sld [smem:[#allocation8 + $0x16]]
        %v1416 = vstv %s1415
        %v1417 = vmul.f32 %v1416, %v1398
        %v1418 = vmul.f32 %v1416, %v1400
        %v1419 = vmul.f32 %v1416, %v1402
        %v1420 = vmul.f32 %v1416, %v1404
        %v1421 = vmul.f32 %v1416, %v1406
        %v1422 = vmul.f32 %v1416, %v1408
        %v1423 = vmul.f32 %v1416, %v1410
        %v1424 = vmul.f32 %v1416, %v1412
        %v1425 = vmul.f32 %v1416, %v1414
        %v1426 = vadd.f32 %v1388, %v1417
        %v1427 = vadd.f32 %v1389, %v1418
        %v1428 = vadd.f32 %v1390, %v1419
        %v1429 = vadd.f32 %v1391, %v1420
        %v1430 = vadd.f32 %v1392, %v1421
        %v1431 = vadd.f32 %v1393, %v1422
        %v1432 = vadd.f32 %v1394, %v1423
        %v1433 = vadd.f32 %v1395, %v1424
        %v1434 = vadd.f32 %v1396, %v1425
        %1435 = vrot.lane.b32.xlu0 %v1119, 126
        %v1436 = vpop.permute.xlu0 %1435
        %1437 = vrot.lane.b32.xlu0 %v1120, 126
        %v1438 = vpop.permute.xlu0 %1437
        %1439 = vrot.lane.b32.xlu0 %v1121, 126
        %v1440 = vpop.permute.xlu0 %1439
        %1441 = vrot.lane.b32.xlu0 %v1122, 126
        %v1442 = vpop.permute.xlu0 %1441
        %1443 = vrot.lane.b32.xlu0 %v1123, 126
        %v1444 = vpop.permute.xlu0 %1443
        %1445 = vrot.lane.b32.xlu0 %v1124, 126
        %v1446 = vpop.permute.xlu0 %1445
        %1447 = vrot.lane.b32.xlu0 %v1125, 126
        %v1448 = vpop.permute.xlu0 %1447
        %1449 = vrot.lane.b32.xlu0 %v1126, 126
        %v1450 = vpop.permute.xlu0 %1449
        %1451 = vrot.lane.b32.xlu0 %v1127, 126
        %v1452 = vpop.permute.xlu0 %1451
        %s1453 = sld [smem:[#allocation8 + $0x17]]
        %v1454 = vstv %s1453
        %v1455 = vmul.f32 %v1454, %v1436
        %v1456 = vmul.f32 %v1454, %v1438
        %v1457 = vmul.f32 %v1454, %v1440
        %v1458 = vmul.f32 %v1454, %v1442
        %v1459 = vmul.f32 %v1454, %v1444
        %v1460 = vmul.f32 %v1454, %v1446
        %v1461 = vmul.f32 %v1454, %v1448
        %v1462 = vmul.f32 %v1454, %v1450
        %v1463 = vmul.f32 %v1454, %v1452
        %v1464 = vadd.f32 %v1426, %v1455
        %v1465 = vadd.f32 %v1427, %v1456
        %v1466 = vadd.f32 %v1428, %v1457
        %v1467 = vadd.f32 %v1429, %v1458
        %v1468 = vadd.f32 %v1430, %v1459
        %v1469 = vadd.f32 %v1431, %v1460
        %v1470 = vadd.f32 %v1432, %v1461
        %v1471 = vadd.f32 %v1433, %v1462
        %v1472 = vadd.f32 %v1434, %v1463
        %v1473 = vrot.slane %v1119, 1
        %v1474 = vrot.slane %v1120, 1
        %v1475 = vsel %vm726, %v1473, %v1474
        %v1476 = vrot.slane %v1121, 1
        %v1477 = vsel %vm726, %v1474, %v1476
        %v1478 = vrot.slane %v1122, 1
        %v1479 = vsel %vm726, %v1476, %v1478
        %v1480 = vrot.slane %v1123, 1
        %v1481 = vsel %vm726, %v1478, %v1480
        %v1482 = vrot.slane %v1124, 1
        %v1483 = vsel %vm726, %v1480, %v1482
        %v1484 = vrot.slane %v1125, 1
        %v1485 = vsel %vm726, %v1482, %v1484
        %v1486 = vrot.slane %v1126, 1
        %v1487 = vsel %vm726, %v1484, %v1486
        %v1488 = vrot.slane %v1127, 1
        %v1489 = vsel %vm726, %v1486, %v1488
        %1499 = vrot.lane.b32.xlu0 %v1475, 1
        %v1500 = vpop.permute.xlu0 %1499
        %1501 = vrot.lane.b32.xlu0 %v1477, 1
        %v1502 = vpop.permute.xlu0 %1501
        %1503 = vrot.lane.b32.xlu0 %v1479, 1
        %v1504 = vpop.permute.xlu0 %1503
        %1505 = vrot.lane.b32.xlu0 %v1481, 1
        %v1506 = vpop.permute.xlu0 %1505
        %1507 = vrot.lane.b32.xlu0 %v1483, 1
        %v1508 = vpop.permute.xlu0 %1507
        %1509 = vrot.lane.b32.xlu0 %v1485, 1
        %v1510 = vpop.permute.xlu0 %1509
        %1511 = vrot.lane.b32.xlu0 %v1487, 1
        %v1512 = vpop.permute.xlu0 %1511
        %1513 = vrot.lane.b32.xlu0 %v1489, 1
        %v1514 = vpop.permute.xlu0 %1513
        %1515 = vrot.lane.b32.xlu0 %v1488, 1
        %v1516 = vpop.permute.xlu0 %1515
        %s1517 = sld [smem:[#allocation8 + $0x18]]
        %v1518 = vstv %s1517
        %v1519 = vmul.f32 %v1518, %v1500
        %v1520 = vmul.f32 %v1518, %v1502
        %v1521 = vmul.f32 %v1518, %v1504
        %v1522 = vmul.f32 %v1518, %v1506
        %v1523 = vmul.f32 %v1518, %v1508
        %v1524 = vmul.f32 %v1518, %v1510
        %v1525 = vmul.f32 %v1518, %v1512
        %v1526 = vmul.f32 %v1518, %v1514
        %v1527 = vmul.f32 %v1518, %v1516
        %v1528 = vadd.f32 %v1464, %v1519
        %v1529 = vadd.f32 %v1465, %v1520
        %v1530 = vadd.f32 %v1466, %v1521
        %v1531 = vadd.f32 %v1467, %v1522
        %v1532 = vadd.f32 %v1468, %v1523
        %v1533 = vadd.f32 %v1469, %v1524
        %v1534 = vadd.f32 %v1470, %v1525
        %v1535 = vadd.f32 %v1471, %v1526
        %v1536 = vadd.f32 %v1472, %v1527
        %s1537 = sld [smem:[#allocation8 + $0x19]]
        %v1538 = vstv %s1537
        %v1539 = vmul.f32 %v1538, %v1119
        %v1540 = vmul.f32 %v1538, %v1120
        %v1541 = vmul.f32 %v1538, %v1121
        %v1542 = vmul.f32 %v1538, %v1122
        %v1543 = vmul.f32 %v1538, %v1123
        %v1544 = vmul.f32 %v1538, %v1124
        %v1545 = vmul.f32 %v1538, %v1125
        %v1546 = vmul.f32 %v1538, %v1126
        %v1547 = vmul.f32 %v1538, %v1127
        %v1557 = vrot.slane %v1539, 1
        %v1558 = vrot.slane %v1540, 1
        %v1559 = vsel %vm726, %v1557, %v1558
        %v1560 = vrot.slane %v1541, 1
        %v1561 = vsel %vm726, %v1558, %v1560
        %v1562 = vrot.slane %v1542, 1
        %v1563 = vsel %vm726, %v1560, %v1562
        %v1564 = vrot.slane %v1543, 1
        %v1565 = vsel %vm726, %v1562, %v1564
        %v1566 = vrot.slane %v1544, 1
        %v1567 = vsel %vm726, %v1564, %v1566
        %v1568 = vrot.slane %v1545, 1
        %v1569 = vsel %vm726, %v1566, %v1568
        %v1570 = vrot.slane %v1546, 1
        %v1571 = vsel %vm726, %v1568, %v1570
        %v1572 = vrot.slane %v1547, 1
        %v1573 = vsel %vm726, %v1570, %v1572
        %v1583 = vadd.f32 %v1528, %v1559
        %v1584 = vadd.f32 %v1529, %v1561
        %v1585 = vadd.f32 %v1530, %v1563
        %v1586 = vadd.f32 %v1531, %v1565
        %v1587 = vadd.f32 %v1532, %v1567
        %v1588 = vadd.f32 %v1533, %v1569
        %v1589 = vadd.f32 %v1534, %v1571
        %v1590 = vadd.f32 %v1535, %v1573
        %v1591 = vadd.f32 %v1536, %v1572
        %1592 = vrot.lane.b32.xlu0 %v1475, 127
        %v1593 = vpop.permute.xlu0 %1592
        %1594 = vrot.lane.b32.xlu0 %v1477, 127
        %v1595 = vpop.permute.xlu0 %1594
        %1596 = vrot.lane.b32.xlu0 %v1479, 127
        %v1597 = vpop.permute.xlu0 %1596
        %1598 = vrot.lane.b32.xlu0 %v1481, 127
        %v1599 = vpop.permute.xlu0 %1598
        %1600 = vrot.lane.b32.xlu0 %v1483, 127
        %v1601 = vpop.permute.xlu0 %1600
        %1602 = vrot.lane.b32.xlu0 %v1485, 127
        %v1603 = vpop.permute.xlu0 %1602
        %1604 = vrot.lane.b32.xlu0 %v1487, 127
        %v1605 = vpop.permute.xlu0 %1604
        %1606 = vrot.lane.b32.xlu0 %v1489, 127
        %v1607 = vpop.permute.xlu0 %1606
        %1608 = vrot.lane.b32.xlu0 %v1488, 127
        %v1609 = vpop.permute.xlu0 %1608
        %s1610 = sld [smem:[#allocation8 + $0x1a]]
        %v1611 = vstv %s1610
        %v1612 = vmul.f32 %v1611, %v1593
        %v1613 = vmul.f32 %v1611, %v1595
        %v1614 = vmul.f32 %v1611, %v1597
        %v1615 = vmul.f32 %v1611, %v1599
        %v1616 = vmul.f32 %v1611, %v1601
        %v1617 = vmul.f32 %v1611, %v1603
        %v1618 = vmul.f32 %v1611, %v1605
        %v1619 = vmul.f32 %v1611, %v1607
        %v1620 = vmul.f32 %v1611, %v1609
        %v1621 = vadd.f32 %v1583, %v1612
        %v1622 = vadd.f32 %v1584, %v1613
        %v1623 = vadd.f32 %v1585, %v1614
        %v1624 = vadd.f32 %v1586, %v1615
        %v1625 = vadd.f32 %v1587, %v1616
        %v1626 = vadd.f32 %v1588, %v1617
        %v1627 = vadd.f32 %v1589, %v1618
        %v1628 = vadd.f32 %v1590, %v1619
        %v1629 = vadd.f32 %v1591, %v1620
        %1630 = vrot.lane.b32.xlu0 %v1475, 126
        %v1631 = vpop.permute.xlu0 %1630
        %1632 = vrot.lane.b32.xlu0 %v1477, 126
        %v1633 = vpop.permute.xlu0 %1632
        %1634 = vrot.lane.b32.xlu0 %v1479, 126
        %v1635 = vpop.permute.xlu0 %1634
        %1636 = vrot.lane.b32.xlu0 %v1481, 126
        %v1637 = vpop.permute.xlu0 %1636
        %1638 = vrot.lane.b32.xlu0 %v1483, 126
        %v1639 = vpop.permute.xlu0 %1638
        %1640 = vrot.lane.b32.xlu0 %v1485, 126
        %v1641 = vpop.permute.xlu0 %1640
        %1642 = vrot.lane.b32.xlu0 %v1487, 126
        %v1643 = vpop.permute.xlu0 %1642
        %1644 = vrot.lane.b32.xlu0 %v1489, 126
        %v1645 = vpop.permute.xlu0 %1644
        %1646 = vrot.lane.b32.xlu0 %v1488, 126
        %v1647 = vpop.permute.xlu0 %1646
        %s1648 = sld [smem:[#allocation8 + $0x1b]]
        %v1649 = vstv %s1648
        %v1650 = vmul.f32 %v1649, %v1631
        %v1651 = vmul.f32 %v1649, %v1633
        %v1652 = vmul.f32 %v1649, %v1635
        %v1653 = vmul.f32 %v1649, %v1637
        %v1654 = vmul.f32 %v1649, %v1639
        %v1655 = vmul.f32 %v1649, %v1641
        %v1656 = vmul.f32 %v1649, %v1643
        %v1657 = vmul.f32 %v1649, %v1645
        %v1658 = vmul.f32 %v1649, %v1647
        %v1659 = vadd.f32 %v1621, %v1650
        %v1660 = vadd.f32 %v1622, %v1651
        %v1661 = vadd.f32 %v1623, %v1652
        %v1662 = vadd.f32 %v1624, %v1653
        %v1663 = vadd.f32 %v1625, %v1654
        %v1664 = vadd.f32 %v1626, %v1655
        %v1665 = vadd.f32 %v1627, %v1656
        %v1666 = vadd.f32 %v1628, %v1657
        %v1667 = vadd.f32 %v1629, %v1658
        %v1668 = vrot.slane %v1119, 2
        %v1669 = vrot.slane %v1120, 2
        %v1670 = vsel %vm922, %v1668, %v1669
        %v1671 = vrot.slane %v1121, 2
        %v1672 = vsel %vm922, %v1669, %v1671
        %v1673 = vrot.slane %v1122, 2
        %v1674 = vsel %vm922, %v1671, %v1673
        %v1675 = vrot.slane %v1123, 2
        %v1676 = vsel %vm922, %v1673, %v1675
        %v1677 = vrot.slane %v1124, 2
        %v1678 = vsel %vm922, %v1675, %v1677
        %v1679 = vrot.slane %v1125, 2
        %v1680 = vsel %vm922, %v1677, %v1679
        %v1681 = vrot.slane %v1126, 2
        %v1682 = vsel %vm922, %v1679, %v1681
        %v1683 = vrot.slane %v1127, 2
        %v1684 = vsel %vm922, %v1681, %v1683
        %1694 = vrot.lane.b32.xlu0 %v1670, 1
        %v1695 = vpop.permute.xlu0 %1694
        %1696 = vrot.lane.b32.xlu0 %v1672, 1
        %v1697 = vpop.permute.xlu0 %1696
        %1698 = vrot.lane.b32.xlu0 %v1674, 1
        %v1699 = vpop.permute.xlu0 %1698
        %1700 = vrot.lane.b32.xlu0 %v1676, 1
        %v1701 = vpop.permute.xlu0 %1700
        %1702 = vrot.lane.b32.xlu0 %v1678, 1
        %v1703 = vpop.permute.xlu0 %1702
        %1704 = vrot.lane.b32.xlu0 %v1680, 1
        %v1705 = vpop.permute.xlu0 %1704
        %1706 = vrot.lane.b32.xlu0 %v1682, 1
        %v1707 = vpop.permute.xlu0 %1706
        %1708 = vrot.lane.b32.xlu0 %v1684, 1
        %v1709 = vpop.permute.xlu0 %1708
        %1710 = vrot.lane.b32.xlu0 %v1683, 1
        %v1711 = vpop.permute.xlu0 %1710
        %s1712 = sld [smem:[#allocation8 + $0x1c]]
        %v1713 = vstv %s1712
        %v1714 = vmul.f32 %v1713, %v1695
        %v1715 = vmul.f32 %v1713, %v1697
        %v1716 = vmul.f32 %v1713, %v1699
        %v1717 = vmul.f32 %v1713, %v1701
        %v1718 = vmul.f32 %v1713, %v1703
        %v1719 = vmul.f32 %v1713, %v1705
        %v1720 = vmul.f32 %v1713, %v1707
        %v1721 = vmul.f32 %v1713, %v1709
        %v1722 = vmul.f32 %v1713, %v1711
        %v1723 = vadd.f32 %v1659, %v1714
        %v1724 = vadd.f32 %v1660, %v1715
        %v1725 = vadd.f32 %v1661, %v1716
        %v1726 = vadd.f32 %v1662, %v1717
        %v1727 = vadd.f32 %v1663, %v1718
        %v1728 = vadd.f32 %v1664, %v1719
        %v1729 = vadd.f32 %v1665, %v1720
        %v1730 = vadd.f32 %v1666, %v1721
        %v1731 = vadd.f32 %v1667, %v1722
        %s1732 = sld [smem:[#allocation8 + $0x1d]]
        %v1733 = vstv %s1732
        %v1734 = vmul.f32 %v1733, %v1119
        %v1735 = vmul.f32 %v1733, %v1120
        %v1736 = vmul.f32 %v1733, %v1121
        %v1737 = vmul.f32 %v1733, %v1122
        %v1738 = vmul.f32 %v1733, %v1123
        %v1739 = vmul.f32 %v1733, %v1124
        %v1740 = vmul.f32 %v1733, %v1125
        %v1741 = vmul.f32 %v1733, %v1126
        %v1742 = vmul.f32 %v1733, %v1127
        %v1752 = vrot.slane %v1734, 2
        %v1753 = vrot.slane %v1735, 2
        %v1754 = vsel %vm922, %v1752, %v1753
        %v1755 = vrot.slane %v1736, 2
        %v1756 = vsel %vm922, %v1753, %v1755
        %v1757 = vrot.slane %v1737, 2
        %v1758 = vsel %vm922, %v1755, %v1757
        %v1759 = vrot.slane %v1738, 2
        %v1760 = vsel %vm922, %v1757, %v1759
        %v1761 = vrot.slane %v1739, 2
        %v1762 = vsel %vm922, %v1759, %v1761
        %v1763 = vrot.slane %v1740, 2
        %v1764 = vsel %vm922, %v1761, %v1763
        %v1765 = vrot.slane %v1741, 2
        %v1766 = vsel %vm922, %v1763, %v1765
        %v1767 = vrot.slane %v1742, 2
        %v1768 = vsel %vm922, %v1765, %v1767
        %v1778 = vadd.f32 %v1723, %v1754
        %v1779 = vadd.f32 %v1724, %v1756
        %v1780 = vadd.f32 %v1725, %v1758
        %v1781 = vadd.f32 %v1726, %v1760
        %v1782 = vadd.f32 %v1727, %v1762
        %v1783 = vadd.f32 %v1728, %v1764
        %v1784 = vadd.f32 %v1729, %v1766
        %v1785 = vadd.f32 %v1730, %v1768
        %v1786 = vadd.f32 %v1731, %v1767
        %1787 = vrot.lane.b32.xlu0 %v1670, 127
        %v1788 = vpop.permute.xlu0 %1787
        %1789 = vrot.lane.b32.xlu0 %v1672, 127
        %v1790 = vpop.permute.xlu0 %1789
        %1791 = vrot.lane.b32.xlu0 %v1674, 127
        %v1792 = vpop.permute.xlu0 %1791
        %1793 = vrot.lane.b32.xlu0 %v1676, 127
        %v1794 = vpop.permute.xlu0 %1793
        %1795 = vrot.lane.b32.xlu0 %v1678, 127
        %v1796 = vpop.permute.xlu0 %1795
        %1797 = vrot.lane.b32.xlu0 %v1680, 127
        %v1798 = vpop.permute.xlu0 %1797
        %1799 = vrot.lane.b32.xlu0 %v1682, 127
        %v1800 = vpop.permute.xlu0 %1799
        %1801 = vrot.lane.b32.xlu0 %v1684, 127
        %v1802 = vpop.permute.xlu0 %1801
        %1803 = vrot.lane.b32.xlu0 %v1683, 127
        %v1804 = vpop.permute.xlu0 %1803
        %s1805 = sld [smem:[#allocation8 + $0x1e]]
        %v1806 = vstv %s1805
        %v1807 = vmul.f32 %v1806, %v1788
        %v1808 = vmul.f32 %v1806, %v1790
        %v1809 = vmul.f32 %v1806, %v1792
        %v1810 = vmul.f32 %v1806, %v1794
        %v1811 = vmul.f32 %v1806, %v1796
        %v1812 = vmul.f32 %v1806, %v1798
        %v1813 = vmul.f32 %v1806, %v1800
        %v1814 = vmul.f32 %v1806, %v1802
        %v1815 = vmul.f32 %v1806, %v1804
        %v1816 = vadd.f32 %v1778, %v1807
        %v1817 = vadd.f32 %v1779, %v1808
        %v1818 = vadd.f32 %v1780, %v1809
        %v1819 = vadd.f32 %v1781, %v1810
        %v1820 = vadd.f32 %v1782, %v1811
        %v1821 = vadd.f32 %v1783, %v1812
        %v1822 = vadd.f32 %v1784, %v1813
        %v1823 = vadd.f32 %v1785, %v1814
        %v1824 = vadd.f32 %v1786, %v1815
        %1825 = vrot.lane.b32.xlu0 %v1670, 126
        %v1826 = vpop.permute.xlu0 %1825
        %1827 = vrot.lane.b32.xlu0 %v1672, 126
        %v1828 = vpop.permute.xlu0 %1827
        %1829 = vrot.lane.b32.xlu0 %v1674, 126
        %v1830 = vpop.permute.xlu0 %1829
        %1831 = vrot.lane.b32.xlu0 %v1676, 126
        %v1832 = vpop.permute.xlu0 %1831
        %1833 = vrot.lane.b32.xlu0 %v1678, 126
        %v1834 = vpop.permute.xlu0 %1833
        %1835 = vrot.lane.b32.xlu0 %v1680, 126
        %v1836 = vpop.permute.xlu0 %1835
        %1837 = vrot.lane.b32.xlu0 %v1682, 126
        %v1838 = vpop.permute.xlu0 %1837
        %1839 = vrot.lane.b32.xlu0 %v1684, 126
        %v1840 = vpop.permute.xlu0 %1839
        %1841 = vrot.lane.b32.xlu0 %v1683, 126
        %v1842 = vpop.permute.xlu0 %1841
        %s1843 = sld [smem:[#allocation8 + $0x1f]]
        %v1844 = vstv %s1843
        %v1845 = vmul.f32 %v1844, %v1826
        %v1846 = vmul.f32 %v1844, %v1828
        %v1847 = vmul.f32 %v1844, %v1830
        %v1848 = vmul.f32 %v1844, %v1832
        %v1849 = vmul.f32 %v1844, %v1834
        %v1850 = vmul.f32 %v1844, %v1836
        %v1851 = vmul.f32 %v1844, %v1838
        %v1852 = vmul.f32 %v1844, %v1840
        %v1853 = vmul.f32 %v1844, %v1842
        %v1854 = vadd.f32 %v1816, %v1845
        %v1855 = vadd.f32 %v1817, %v1846
        %v1856 = vadd.f32 %v1818, %v1847
        %v1857 = vadd.f32 %v1819, %v1848
        %v1858 = vadd.f32 %v1820, %v1849
        %v1859 = vadd.f32 %v1821, %v1850
        %v1860 = vadd.f32 %v1822, %v1851
        %v1861 = vadd.f32 %v1823, %v1852
        %v1862 = vadd.f32 %v1824, %v1853
        %v1863 = vld [vmem:[%s359] sm:$0xff]
        %v1864 = vld [vmem:[%s359 + $0x8] sm:$0xff]
        %v1865 = vld [vmem:[%s359 + $0x10] sm:$0xff]
        %v1866 = vld [vmem:[%s359 + $0x18] sm:$0xff]
        %v1867 = vld [vmem:[%s359 + $0x20] sm:$0xff]
        %v1868 = vld [vmem:[%s359 + $0x28] sm:$0xff]
        %v1869 = vld [vmem:[%s359 + $0x30] sm:$0xff]
        %v1870 = vld [vmem:[%s359 + $0x38] sm:$0xff]
        %v1871 = vld [vmem:[%s359 + $0x40] sm:$0xff]
        %v1872 = vld [vmem:[%s359 + $0x48] sm:$0xff]
        %v1883 = vrot.slane %v1863, 7
        %v1884 = vrot.slane %v1864, 7
        %v1885 = vsel %vm390, %v1883, %v1884
        %v1886 = vrot.slane %v1865, 7
        %v1887 = vsel %vm390, %v1884, %v1886
        %v1888 = vrot.slane %v1866, 7
        %v1889 = vsel %vm390, %v1886, %v1888
        %v1890 = vrot.slane %v1867, 7
        %v1891 = vsel %vm390, %v1888, %v1890
        %v1892 = vrot.slane %v1868, 7
        %v1893 = vsel %vm390, %v1890, %v1892
        %v1894 = vrot.slane %v1869, 7
        %v1895 = vsel %vm390, %v1892, %v1894
        %v1896 = vrot.slane %v1870, 7
        %v1897 = vsel %vm390, %v1894, %v1896
        %v1898 = vrot.slane %v1871, 7
        %v1899 = vsel %vm390, %v1896, %v1898
        %v1900 = vrot.slane %v1872, 7
        %v1901 = vsel %vm390, %v1898, %v1900
        %1911 = vrot.lane.b32.xlu0 %v1885, 1
        %v1912 = vpop.permute.xlu0 %1911
        %1913 = vrot.lane.b32.xlu0 %v1887, 1
        %v1914 = vpop.permute.xlu0 %1913
        %1915 = vrot.lane.b32.xlu0 %v1889, 1
        %v1916 = vpop.permute.xlu0 %1915
        %1917 = vrot.lane.b32.xlu0 %v1891, 1
        %v1918 = vpop.permute.xlu0 %1917
        %1919 = vrot.lane.b32.xlu0 %v1893, 1
        %v1920 = vpop.permute.xlu0 %1919
        %1921 = vrot.lane.b32.xlu0 %v1895, 1
        %v1922 = vpop.permute.xlu0 %1921
        %1923 = vrot.lane.b32.xlu0 %v1897, 1
        %v1924 = vpop.permute.xlu0 %1923
        %1925 = vrot.lane.b32.xlu0 %v1899, 1
        %v1926 = vpop.permute.xlu0 %1925
        %1927 = vrot.lane.b32.xlu0 %v1901, 1
        %v1928 = vpop.permute.xlu0 %1927
        %s1929 = sld [smem:[#allocation8 + $0x20]]
        %v1930 = vstv %s1929
        %v1931 = vmul.f32 %v1930, %v1912
        %v1932 = vmul.f32 %v1930, %v1914
        %v1933 = vmul.f32 %v1930, %v1916
        %v1934 = vmul.f32 %v1930, %v1918
        %v1935 = vmul.f32 %v1930, %v1920
        %v1936 = vmul.f32 %v1930, %v1922
        %v1937 = vmul.f32 %v1930, %v1924
        %v1938 = vmul.f32 %v1930, %v1926
        %v1939 = vmul.f32 %v1930, %v1928
        %v1940 = vadd.f32 %v1854, %v1931
        %v1941 = vadd.f32 %v1855, %v1932
        %v1942 = vadd.f32 %v1856, %v1933
        %v1943 = vadd.f32 %v1857, %v1934
        %v1944 = vadd.f32 %v1858, %v1935
        %v1945 = vadd.f32 %v1859, %v1936
        %v1946 = vadd.f32 %v1860, %v1937
        %v1947 = vadd.f32 %v1861, %v1938
        %v1948 = vadd.f32 %v1862, %v1939
        %s1949 = sld [smem:[#allocation8 + $0x21]]
        %v1950 = vstv %s1949
        %v1951 = vmul.f32 %v1950, %v1863
        %v1952 = vmul.f32 %v1950, %v1864
        %v1953 = vmul.f32 %v1950, %v1865
        %v1954 = vmul.f32 %v1950, %v1866
        %v1955 = vmul.f32 %v1950, %v1867
        %v1956 = vmul.f32 %v1950, %v1868
        %v1957 = vmul.f32 %v1950, %v1869
        %v1958 = vmul.f32 %v1950, %v1870
        %v1959 = vmul.f32 %v1950, %v1871
        %v1960 = vmul.f32 %v1950, %v1872
        %v1971 = vrot.slane %v1951, 7
        %v1972 = vrot.slane %v1952, 7
        %v1973 = vsel %vm390, %v1971, %v1972
        %v1974 = vrot.slane %v1953, 7
        %v1975 = vsel %vm390, %v1972, %v1974
        %v1976 = vrot.slane %v1954, 7
        %v1977 = vsel %vm390, %v1974, %v1976
        %v1978 = vrot.slane %v1955, 7
        %v1979 = vsel %vm390, %v1976, %v1978
        %v1980 = vrot.slane %v1956, 7
        %v1981 = vsel %vm390, %v1978, %v1980
        %v1982 = vrot.slane %v1957, 7
        %v1983 = vsel %vm390, %v1980, %v1982
        %v1984 = vrot.slane %v1958, 7
        %v1985 = vsel %vm390, %v1982, %v1984
        %v1986 = vrot.slane %v1959, 7
        %v1987 = vsel %vm390, %v1984, %v1986
        %v1988 = vrot.slane %v1960, 7
        %v1989 = vsel %vm390, %v1986, %v1988
        %v1999 = vadd.f32 %v1940, %v1973
        %v2000 = vadd.f32 %v1941, %v1975
        %v2001 = vadd.f32 %v1942, %v1977
        %v2002 = vadd.f32 %v1943, %v1979
        %v2003 = vadd.f32 %v1944, %v1981
        %v2004 = vadd.f32 %v1945, %v1983
        %v2005 = vadd.f32 %v1946, %v1985
        %v2006 = vadd.f32 %v1947, %v1987
        %v2007 = vadd.f32 %v1948, %v1989
        %2008 = vrot.lane.b32.xlu0 %v1885, 127
        %v2009 = vpop.permute.xlu0 %2008
        %2010 = vrot.lane.b32.xlu0 %v1887, 127
        %v2011 = vpop.permute.xlu0 %2010
        %2012 = vrot.lane.b32.xlu0 %v1889, 127
        %v2013 = vpop.permute.xlu0 %2012
        %2014 = vrot.lane.b32.xlu0 %v1891, 127
        %v2015 = vpop.permute.xlu0 %2014
        %2016 = vrot.lane.b32.xlu0 %v1893, 127
        %v2017 = vpop.permute.xlu0 %2016
        %2018 = vrot.lane.b32.xlu0 %v1895, 127
        %v2019 = vpop.permute.xlu0 %2018
        %2020 = vrot.lane.b32.xlu0 %v1897, 127
        %v2021 = vpop.permute.xlu0 %2020
        %2022 = vrot.lane.b32.xlu0 %v1899, 127
        %v2023 = vpop.permute.xlu0 %2022
        %2024 = vrot.lane.b32.xlu0 %v1901, 127
        %v2025 = vpop.permute.xlu0 %2024
        %s2026 = sld [smem:[#allocation8 + $0x22]]
        %v2027 = vstv %s2026
        %v2028 = vmul.f32 %v2027, %v2009
        %v2029 = vmul.f32 %v2027, %v2011
        %v2030 = vmul.f32 %v2027, %v2013
        %v2031 = vmul.f32 %v2027, %v2015
        %v2032 = vmul.f32 %v2027, %v2017
        %v2033 = vmul.f32 %v2027, %v2019
        %v2034 = vmul.f32 %v2027, %v2021
        %v2035 = vmul.f32 %v2027, %v2023
        %v2036 = vmul.f32 %v2027, %v2025
        %v2037 = vadd.f32 %v1999, %v2028
        %v2038 = vadd.f32 %v2000, %v2029
        %v2039 = vadd.f32 %v2001, %v2030
        %v2040 = vadd.f32 %v2002, %v2031
        %v2041 = vadd.f32 %v2003, %v2032
        %v2042 = vadd.f32 %v2004, %v2033
        %v2043 = vadd.f32 %v2005, %v2034
        %v2044 = vadd.f32 %v2006, %v2035
        %v2045 = vadd.f32 %v2007, %v2036
        %2046 = vrot.lane.b32.xlu0 %v1885, 126
        %v2047 = vpop.permute.xlu0 %2046
        %2048 = vrot.lane.b32.xlu0 %v1887, 126
        %v2049 = vpop.permute.xlu0 %2048
        %2050 = vrot.lane.b32.xlu0 %v1889, 126
        %v2051 = vpop.permute.xlu0 %2050
        %2052 = vrot.lane.b32.xlu0 %v1891, 126
        %v2053 = vpop.permute.xlu0 %2052
        %2054 = vrot.lane.b32.xlu0 %v1893, 126
        %v2055 = vpop.permute.xlu0 %2054
        %2056 = vrot.lane.b32.xlu0 %v1895, 126
        %v2057 = vpop.permute.xlu0 %2056
        %2058 = vrot.lane.b32.xlu0 %v1897, 126
        %v2059 = vpop.permute.xlu0 %2058
        %2060 = vrot.lane.b32.xlu0 %v1899, 126
        %v2061 = vpop.permute.xlu0 %2060
        %2062 = vrot.lane.b32.xlu0 %v1901, 126
        %v2063 = vpop.permute.xlu0 %2062
        %s2064 = sld [smem:[#allocation8 + $0x23]]
        %v2065 = vstv %s2064
        %v2066 = vmul.f32 %v2065, %v2047
        %v2067 = vmul.f32 %v2065, %v2049
        %v2068 = vmul.f32 %v2065, %v2051
        %v2069 = vmul.f32 %v2065, %v2053
        %v2070 = vmul.f32 %v2065, %v2055
        %v2071 = vmul.f32 %v2065, %v2057
        %v2072 = vmul.f32 %v2065, %v2059
        %v2073 = vmul.f32 %v2065, %v2061
        %v2074 = vmul.f32 %v2065, %v2063
        %v2075 = vadd.f32 %v2037, %v2066
        %v2076 = vadd.f32 %v2038, %v2067
        %v2077 = vadd.f32 %v2039, %v2068
        %v2078 = vadd.f32 %v2040, %v2069
        %v2079 = vadd.f32 %v2041, %v2070
        %v2080 = vadd.f32 %v2042, %v2071
        %v2081 = vadd.f32 %v2043, %v2072
        %v2082 = vadd.f32 %v2044, %v2073
        %v2083 = vadd.f32 %v2045, %v2074
        %2084 = vrot.lane.b32.xlu0 %v1864, 1
        %v2085 = vpop.permute.xlu0 %2084
        %2086 = vrot.lane.b32.xlu0 %v1865, 1
        %v2087 = vpop.permute.xlu0 %2086
        %2088 = vrot.lane.b32.xlu0 %v1866, 1
        %v2089 = vpop.permute.xlu0 %2088
        %2090 = vrot.lane.b32.xlu0 %v1867, 1
        %v2091 = vpop.permute.xlu0 %2090
        %2092 = vrot.lane.b32.xlu0 %v1868, 1
        %v2093 = vpop.permute.xlu0 %2092
        %2094 = vrot.lane.b32.xlu0 %v1869, 1
        %v2095 = vpop.permute.xlu0 %2094
        %2096 = vrot.lane.b32.xlu0 %v1870, 1
        %v2097 = vpop.permute.xlu0 %2096
        %2098 = vrot.lane.b32.xlu0 %v1871, 1
        %v2099 = vpop.permute.xlu0 %2098
        %2100 = vrot.lane.b32.xlu0 %v1872, 1
        %v2101 = vpop.permute.xlu0 %2100
        %s2102 = sld [smem:[#allocation8 + $0x24]]
        %v2103 = vstv %s2102
        %v2104 = vmul.f32 %v2103, %v2085
        %v2105 = vmul.f32 %v2103, %v2087
        %v2106 = vmul.f32 %v2103, %v2089
        %v2107 = vmul.f32 %v2103, %v2091
        %v2108 = vmul.f32 %v2103, %v2093
        %v2109 = vmul.f32 %v2103, %v2095
        %v2110 = vmul.f32 %v2103, %v2097
        %v2111 = vmul.f32 %v2103, %v2099
        %v2112 = vmul.f32 %v2103, %v2101
        %v2113 = vadd.f32 %v2075, %v2104
        %v2114 = vadd.f32 %v2076, %v2105
        %v2115 = vadd.f32 %v2077, %v2106
        %v2116 = vadd.f32 %v2078, %v2107
        %v2117 = vadd.f32 %v2079, %v2108
        %v2118 = vadd.f32 %v2080, %v2109
        %v2119 = vadd.f32 %v2081, %v2110
        %v2120 = vadd.f32 %v2082, %v2111
        %v2121 = vadd.f32 %v2083, %v2112
        %s2122 = sld [smem:[#allocation8 + $0x25]]
        %v2123 = vstv %s2122
        %v2124 = vmul.f32 %v2123, %v1864
        %v2125 = vmul.f32 %v2123, %v1865
        %v2126 = vmul.f32 %v2123, %v1866
        %v2127 = vmul.f32 %v2123, %v1867
        %v2128 = vmul.f32 %v2123, %v1868
        %v2129 = vmul.f32 %v2123, %v1869
        %v2130 = vmul.f32 %v2123, %v1870
        %v2131 = vmul.f32 %v2123, %v1871
        %v2132 = vmul.f32 %v2123, %v1872
        %v2133 = vadd.f32 %v2113, %v2124
        %v2134 = vadd.f32 %v2114, %v2125
        %v2135 = vadd.f32 %v2115, %v2126
        %v2136 = vadd.f32 %v2116, %v2127
        %v2137 = vadd.f32 %v2117, %v2128
        %v2138 = vadd.f32 %v2118, %v2129
        %v2139 = vadd.f32 %v2119, %v2130
        %v2140 = vadd.f32 %v2120, %v2131
        %v2141 = vadd.f32 %v2121, %v2132
        %2142 = vrot.lane.b32.xlu0 %v1864, 127
        %v2143 = vpop.permute.xlu0 %2142
        %2144 = vrot.lane.b32.xlu0 %v1865, 127
        %v2145 = vpop.permute.xlu0 %2144
        %2146 = vrot.lane.b32.xlu0 %v1866, 127
        %v2147 = vpop.permute.xlu0 %2146
        %2148 = vrot.lane.b32.xlu0 %v1867, 127
        %v2149 = vpop.permute.xlu0 %2148
        %2150 = vrot.lane.b32.xlu0 %v1868, 127
        %v2151 = vpop.permute.xlu0 %2150
        %2152 = vrot.lane.b32.xlu0 %v1869, 127
        %v2153 = vpop.permute.xlu0 %2152
        %2154 = vrot.lane.b32.xlu0 %v1870, 127
        %v2155 = vpop.permute.xlu0 %2154
        %2156 = vrot.lane.b32.xlu0 %v1871, 127
        %v2157 = vpop.permute.xlu0 %2156
        %2158 = vrot.lane.b32.xlu0 %v1872, 127
        %v2159 = vpop.permute.xlu0 %2158
        %s2160 = sld [smem:[#allocation8 + $0x26]]
        %v2161 = vstv %s2160
        %v2162 = vmul.f32 %v2161, %v2143
        %v2163 = vmul.f32 %v2161, %v2145
        %v2164 = vmul.f32 %v2161, %v2147
        %v2165 = vmul.f32 %v2161, %v2149
        %v2166 = vmul.f32 %v2161, %v2151
        %v2167 = vmul.f32 %v2161, %v2153
        %v2168 = vmul.f32 %v2161, %v2155
        %v2169 = vmul.f32 %v2161, %v2157
        %v2170 = vmul.f32 %v2161, %v2159
        %v2171 = vadd.f32 %v2133, %v2162
        %v2172 = vadd.f32 %v2134, %v2163
        %v2173 = vadd.f32 %v2135, %v2164
        %v2174 = vadd.f32 %v2136, %v2165
        %v2175 = vadd.f32 %v2137, %v2166
        %v2176 = vadd.f32 %v2138, %v2167
        %v2177 = vadd.f32 %v2139, %v2168
        %v2178 = vadd.f32 %v2140, %v2169
        %v2179 = vadd.f32 %v2141, %v2170
        %2180 = vrot.lane.b32.xlu0 %v1864, 126
        %v2181 = vpop.permute.xlu0 %2180
        %2182 = vrot.lane.b32.xlu0 %v1865, 126
        %v2183 = vpop.permute.xlu0 %2182
        %2184 = vrot.lane.b32.xlu0 %v1866, 126
        %v2185 = vpop.permute.xlu0 %2184
        %2186 = vrot.lane.b32.xlu0 %v1867, 126
        %v2187 = vpop.permute.xlu0 %2186
        %2188 = vrot.lane.b32.xlu0 %v1868, 126
        %v2189 = vpop.permute.xlu0 %2188
        %2190 = vrot.lane.b32.xlu0 %v1869, 126
        %v2191 = vpop.permute.xlu0 %2190
        %2192 = vrot.lane.b32.xlu0 %v1870, 126
        %v2193 = vpop.permute.xlu0 %2192
        %2194 = vrot.lane.b32.xlu0 %v1871, 126
        %v2195 = vpop.permute.xlu0 %2194
        %2196 = vrot.lane.b32.xlu0 %v1872, 126
        %v2197 = vpop.permute.xlu0 %2196
        %s2198 = sld [smem:[#allocation8 + $0x27]]
        %v2199 = vstv %s2198
        %v2200 = vmul.f32 %v2199, %v2181
        %v2201 = vmul.f32 %v2199, %v2183
        %v2202 = vmul.f32 %v2199, %v2185
        %v2203 = vmul.f32 %v2199, %v2187
        %v2204 = vmul.f32 %v2199, %v2189
        %v2205 = vmul.f32 %v2199, %v2191
        %v2206 = vmul.f32 %v2199, %v2193
        %v2207 = vmul.f32 %v2199, %v2195
        %v2208 = vmul.f32 %v2199, %v2197
        %v2209 = vadd.f32 %v2171, %v2200
        %v2210 = vadd.f32 %v2172, %v2201
        %v2211 = vadd.f32 %v2173, %v2202
        %v2212 = vadd.f32 %v2174, %v2203
        %v2213 = vadd.f32 %v2175, %v2204
        %v2214 = vadd.f32 %v2176, %v2205
        %v2215 = vadd.f32 %v2177, %v2206
        %v2216 = vadd.f32 %v2178, %v2207
        %v2217 = vadd.f32 %v2179, %v2208
        %v2218 = vrot.slane %v1864, 1
        %v2219 = vrot.slane %v1865, 1
        %v2220 = vsel %vm726, %v2218, %v2219
        %v2221 = vrot.slane %v1866, 1
        %v2222 = vsel %vm726, %v2219, %v2221
        %v2223 = vrot.slane %v1867, 1
        %v2224 = vsel %vm726, %v2221, %v2223
        %v2225 = vrot.slane %v1868, 1
        %v2226 = vsel %vm726, %v2223, %v2225
        %v2227 = vrot.slane %v1869, 1
        %v2228 = vsel %vm726, %v2225, %v2227
        %v2229 = vrot.slane %v1870, 1
        %v2230 = vsel %vm726, %v2227, %v2229
        %v2231 = vrot.slane %v1871, 1
        %v2232 = vsel %vm726, %v2229, %v2231
        %v2233 = vrot.slane %v1872, 1
        %v2234 = vsel %vm726, %v2231, %v2233
        %2244 = vrot.lane.b32.xlu0 %v2220, 1
        %v2245 = vpop.permute.xlu0 %2244
        %2246 = vrot.lane.b32.xlu0 %v2222, 1
        %v2247 = vpop.permute.xlu0 %2246
        %2248 = vrot.lane.b32.xlu0 %v2224, 1
        %v2249 = vpop.permute.xlu0 %2248
        %2250 = vrot.lane.b32.xlu0 %v2226, 1
        %v2251 = vpop.permute.xlu0 %2250
        %2252 = vrot.lane.b32.xlu0 %v2228, 1
        %v2253 = vpop.permute.xlu0 %2252
        %2254 = vrot.lane.b32.xlu0 %v2230, 1
        %v2255 = vpop.permute.xlu0 %2254
        %2256 = vrot.lane.b32.xlu0 %v2232, 1
        %v2257 = vpop.permute.xlu0 %2256
        %2258 = vrot.lane.b32.xlu0 %v2234, 1
        %v2259 = vpop.permute.xlu0 %2258
        %2260 = vrot.lane.b32.xlu0 %v2233, 1
        %v2261 = vpop.permute.xlu0 %2260
        %s2262 = sld [smem:[#allocation8 + $0x28]]
        %v2263 = vstv %s2262
        %v2264 = vmul.f32 %v2263, %v2245
        %v2265 = vmul.f32 %v2263, %v2247
        %v2266 = vmul.f32 %v2263, %v2249
        %v2267 = vmul.f32 %v2263, %v2251
        %v2268 = vmul.f32 %v2263, %v2253
        %v2269 = vmul.f32 %v2263, %v2255
        %v2270 = vmul.f32 %v2263, %v2257
        %v2271 = vmul.f32 %v2263, %v2259
        %v2272 = vmul.f32 %v2263, %v2261
        %v2273 = vadd.f32 %v2209, %v2264
        %v2274 = vadd.f32 %v2210, %v2265
        %v2275 = vadd.f32 %v2211, %v2266
        %v2276 = vadd.f32 %v2212, %v2267
        %v2277 = vadd.f32 %v2213, %v2268
        %v2278 = vadd.f32 %v2214, %v2269
        %v2279 = vadd.f32 %v2215, %v2270
        %v2280 = vadd.f32 %v2216, %v2271
        %v2281 = vadd.f32 %v2217, %v2272
        %s2282 = sld [smem:[#allocation8 + $0x29]]
        %v2283 = vstv %s2282
        %v2284 = vmul.f32 %v2283, %v1864
        %v2285 = vmul.f32 %v2283, %v1865
        %v2286 = vmul.f32 %v2283, %v1866
        %v2287 = vmul.f32 %v2283, %v1867
        %v2288 = vmul.f32 %v2283, %v1868
        %v2289 = vmul.f32 %v2283, %v1869
        %v2290 = vmul.f32 %v2283, %v1870
        %v2291 = vmul.f32 %v2283, %v1871
        %v2292 = vmul.f32 %v2283, %v1872
        %v2302 = vrot.slane %v2284, 1
        %v2303 = vrot.slane %v2285, 1
        %v2304 = vsel %vm726, %v2302, %v2303
        %v2305 = vrot.slane %v2286, 1
        %v2306 = vsel %vm726, %v2303, %v2305
        %v2307 = vrot.slane %v2287, 1
        %v2308 = vsel %vm726, %v2305, %v2307
        %v2309 = vrot.slane %v2288, 1
        %v2310 = vsel %vm726, %v2307, %v2309
        %v2311 = vrot.slane %v2289, 1
        %v2312 = vsel %vm726, %v2309, %v2311
        %v2313 = vrot.slane %v2290, 1
        %v2314 = vsel %vm726, %v2311, %v2313
        %v2315 = vrot.slane %v2291, 1
        %v2316 = vsel %vm726, %v2313, %v2315
        %v2317 = vrot.slane %v2292, 1
        %v2318 = vsel %vm726, %v2315, %v2317
        %v2328 = vadd.f32 %v2273, %v2304
        %v2329 = vadd.f32 %v2274, %v2306
        %v2330 = vadd.f32 %v2275, %v2308
        %v2331 = vadd.f32 %v2276, %v2310
        %v2332 = vadd.f32 %v2277, %v2312
        %v2333 = vadd.f32 %v2278, %v2314
        %v2334 = vadd.f32 %v2279, %v2316
        %v2335 = vadd.f32 %v2280, %v2318
        %v2336 = vadd.f32 %v2281, %v2317
        %2337 = vrot.lane.b32.xlu0 %v2220, 127
        %v2338 = vpop.permute.xlu0 %2337
        %2339 = vrot.lane.b32.xlu0 %v2222, 127
        %v2340 = vpop.permute.xlu0 %2339
        %2341 = vrot.lane.b32.xlu0 %v2224, 127
        %v2342 = vpop.permute.xlu0 %2341
        %2343 = vrot.lane.b32.xlu0 %v2226, 127
        %v2344 = vpop.permute.xlu0 %2343
        %2345 = vrot.lane.b32.xlu0 %v2228, 127
        %v2346 = vpop.permute.xlu0 %2345
        %2347 = vrot.lane.b32.xlu0 %v2230, 127
        %v2348 = vpop.permute.xlu0 %2347
        %2349 = vrot.lane.b32.xlu0 %v2232, 127
        %v2350 = vpop.permute.xlu0 %2349
        %2351 = vrot.lane.b32.xlu0 %v2234, 127
        %v2352 = vpop.permute.xlu0 %2351
        %2353 = vrot.lane.b32.xlu0 %v2233, 127
        %v2354 = vpop.permute.xlu0 %2353
        %s2355 = sld [smem:[#allocation8 + $0x2a]]
        %v2356 = vstv %s2355
        %v2357 = vmul.f32 %v2356, %v2338
        %v2358 = vmul.f32 %v2356, %v2340
        %v2359 = vmul.f32 %v2356, %v2342
        %v2360 = vmul.f32 %v2356, %v2344
        %v2361 = vmul.f32 %v2356, %v2346
        %v2362 = vmul.f32 %v2356, %v2348
        %v2363 = vmul.f32 %v2356, %v2350
        %v2364 = vmul.f32 %v2356, %v2352
        %v2365 = vmul.f32 %v2356, %v2354
        %v2366 = vadd.f32 %v2328, %v2357
        %v2367 = vadd.f32 %v2329, %v2358
        %v2368 = vadd.f32 %v2330, %v2359
        %v2369 = vadd.f32 %v2331, %v2360
        %v2370 = vadd.f32 %v2332, %v2361
        %v2371 = vadd.f32 %v2333, %v2362
        %v2372 = vadd.f32 %v2334, %v2363
        %v2373 = vadd.f32 %v2335, %v2364
        %v2374 = vadd.f32 %v2336, %v2365
        %2375 = vrot.lane.b32.xlu0 %v2220, 126
        %v2376 = vpop.permute.xlu0 %2375
        %2377 = vrot.lane.b32.xlu0 %v2222, 126
        %v2378 = vpop.permute.xlu0 %2377
        %2379 = vrot.lane.b32.xlu0 %v2224, 126
        %v2380 = vpop.permute.xlu0 %2379
        %2381 = vrot.lane.b32.xlu0 %v2226, 126
        %v2382 = vpop.permute.xlu0 %2381
        %2383 = vrot.lane.b32.xlu0 %v2228, 126
        %v2384 = vpop.permute.xlu0 %2383
        %2385 = vrot.lane.b32.xlu0 %v2230, 126
        %v2386 = vpop.permute.xlu0 %2385
        %2387 = vrot.lane.b32.xlu0 %v2232, 126
        %v2388 = vpop.permute.xlu0 %2387
        %2389 = vrot.lane.b32.xlu0 %v2234, 126
        %v2390 = vpop.permute.xlu0 %2389
        %2391 = vrot.lane.b32.xlu0 %v2233, 126
        %v2392 = vpop.permute.xlu0 %2391
        %s2393 = sld [smem:[#allocation8 + $0x2b]]
        %v2394 = vstv %s2393
        %v2395 = vmul.f32 %v2394, %v2376
        %v2396 = vmul.f32 %v2394, %v2378
        %v2397 = vmul.f32 %v2394, %v2380
        %v2398 = vmul.f32 %v2394, %v2382
        %v2399 = vmul.f32 %v2394, %v2384
        %v2400 = vmul.f32 %v2394, %v2386
        %v2401 = vmul.f32 %v2394, %v2388
        %v2402 = vmul.f32 %v2394, %v2390
        %v2403 = vmul.f32 %v2394, %v2392
        %v2404 = vadd.f32 %v2366, %v2395
        %v2405 = vadd.f32 %v2367, %v2396
        %v2406 = vadd.f32 %v2368, %v2397
        %v2407 = vadd.f32 %v2369, %v2398
        %v2408 = vadd.f32 %v2370, %v2399
        %v2409 = vadd.f32 %v2371, %v2400
        %v2410 = vadd.f32 %v2372, %v2401
        %v2411 = vadd.f32 %v2373, %v2402
        %v2412 = vadd.f32 %v2374, %v2403
        %v2413 = vrot.slane %v1864, 2
        %v2414 = vrot.slane %v1865, 2
        %v2415 = vsel %vm922, %v2413, %v2414
        %v2416 = vrot.slane %v1866, 2
        %v2417 = vsel %vm922, %v2414, %v2416
        %v2418 = vrot.slane %v1867, 2
        %v2419 = vsel %vm922, %v2416, %v2418
        %v2420 = vrot.slane %v1868, 2
        %v2421 = vsel %vm922, %v2418, %v2420
        %v2422 = vrot.slane %v1869, 2
        %v2423 = vsel %vm922, %v2420, %v2422
        %v2424 = vrot.slane %v1870, 2
        %v2425 = vsel %vm922, %v2422, %v2424
        %v2426 = vrot.slane %v1871, 2
        %v2427 = vsel %vm922, %v2424, %v2426
        %v2428 = vrot.slane %v1872, 2
        %v2429 = vsel %vm922, %v2426, %v2428
        %2439 = vrot.lane.b32.xlu0 %v2415, 1
        %v2440 = vpop.permute.xlu0 %2439
        %2441 = vrot.lane.b32.xlu0 %v2417, 1
        %v2442 = vpop.permute.xlu0 %2441
        %2443 = vrot.lane.b32.xlu0 %v2419, 1
        %v2444 = vpop.permute.xlu0 %2443
        %2445 = vrot.lane.b32.xlu0 %v2421, 1
        %v2446 = vpop.permute.xlu0 %2445
        %2447 = vrot.lane.b32.xlu0 %v2423, 1
        %v2448 = vpop.permute.xlu0 %2447
        %2449 = vrot.lane.b32.xlu0 %v2425, 1
        %v2450 = vpop.permute.xlu0 %2449
        %2451 = vrot.lane.b32.xlu0 %v2427, 1
        %v2452 = vpop.permute.xlu0 %2451
        %2453 = vrot.lane.b32.xlu0 %v2429, 1
        %v2454 = vpop.permute.xlu0 %2453
        %2455 = vrot.lane.b32.xlu0 %v2428, 1
        %v2456 = vpop.permute.xlu0 %2455
        %s2457 = sld [smem:[#allocation8 + $0x2c]]
        %v2458 = vstv %s2457
        %v2459 = vmul.f32 %v2458, %v2440
        %v2460 = vmul.f32 %v2458, %v2442
        %v2461 = vmul.f32 %v2458, %v2444
        %v2462 = vmul.f32 %v2458, %v2446
        %v2463 = vmul.f32 %v2458, %v2448
        %v2464 = vmul.f32 %v2458, %v2450
        %v2465 = vmul.f32 %v2458, %v2452
        %v2466 = vmul.f32 %v2458, %v2454
        %v2467 = vmul.f32 %v2458, %v2456
        %v2468 = vadd.f32 %v2404, %v2459
        %v2469 = vadd.f32 %v2405, %v2460
        %v2470 = vadd.f32 %v2406, %v2461
        %v2471 = vadd.f32 %v2407, %v2462
        %v2472 = vadd.f32 %v2408, %v2463
        %v2473 = vadd.f32 %v2409, %v2464
        %v2474 = vadd.f32 %v2410, %v2465
        %v2475 = vadd.f32 %v2411, %v2466
        %v2476 = vadd.f32 %v2412, %v2467
        %s2477 = sld [smem:[#allocation8 + $0x2d]]
        %v2478 = vstv %s2477
        %v2479 = vmul.f32 %v2478, %v1864
        %v2480 = vmul.f32 %v2478, %v1865
        %v2481 = vmul.f32 %v2478, %v1866
        %v2482 = vmul.f32 %v2478, %v1867
        %v2483 = vmul.f32 %v2478, %v1868
        %v2484 = vmul.f32 %v2478, %v1869
        %v2485 = vmul.f32 %v2478, %v1870
        %v2486 = vmul.f32 %v2478, %v1871
        %v2487 = vmul.f32 %v2478, %v1872
        %v2497 = vrot.slane %v2479, 2
        %v2498 = vrot.slane %v2480, 2
        %v2499 = vsel %vm922, %v2497, %v2498
        %v2500 = vrot.slane %v2481, 2
        %v2501 = vsel %vm922, %v2498, %v2500
        %v2502 = vrot.slane %v2482, 2
        %v2503 = vsel %vm922, %v2500, %v2502
        %v2504 = vrot.slane %v2483, 2
        %v2505 = vsel %vm922, %v2502, %v2504
        %v2506 = vrot.slane %v2484, 2
        %v2507 = vsel %vm922, %v2504, %v2506
        %v2508 = vrot.slane %v2485, 2
        %v2509 = vsel %vm922, %v2506, %v2508
        %v2510 = vrot.slane %v2486, 2
        %v2511 = vsel %vm922, %v2508, %v2510
        %v2512 = vrot.slane %v2487, 2
        %v2513 = vsel %vm922, %v2510, %v2512
        %v2523 = vadd.f32 %v2468, %v2499
        %v2524 = vadd.f32 %v2469, %v2501
        %v2525 = vadd.f32 %v2470, %v2503
        %v2526 = vadd.f32 %v2471, %v2505
        %v2527 = vadd.f32 %v2472, %v2507
        %v2528 = vadd.f32 %v2473, %v2509
        %v2529 = vadd.f32 %v2474, %v2511
        %v2530 = vadd.f32 %v2475, %v2513
        %v2531 = vadd.f32 %v2476, %v2512
        %2532 = vrot.lane.b32.xlu0 %v2415, 127
        %v2533 = vpop.permute.xlu0 %2532
        %2534 = vrot.lane.b32.xlu0 %v2417, 127
        %v2535 = vpop.permute.xlu0 %2534
        %2536 = vrot.lane.b32.xlu0 %v2419, 127
        %v2537 = vpop.permute.xlu0 %2536
        %2538 = vrot.lane.b32.xlu0 %v2421, 127
        %v2539 = vpop.permute.xlu0 %2538
        %2540 = vrot.lane.b32.xlu0 %v2423, 127
        %v2541 = vpop.permute.xlu0 %2540
        %2542 = vrot.lane.b32.xlu0 %v2425, 127
        %v2543 = vpop.permute.xlu0 %2542
        %2544 = vrot.lane.b32.xlu0 %v2427, 127
        %v2545 = vpop.permute.xlu0 %2544
        %2546 = vrot.lane.b32.xlu0 %v2429, 127
        %v2547 = vpop.permute.xlu0 %2546
        %2548 = vrot.lane.b32.xlu0 %v2428, 127
        %v2549 = vpop.permute.xlu0 %2548
        %s2550 = sld [smem:[#allocation8 + $0x2e]]
        %v2551 = vstv %s2550
        %v2552 = vmul.f32 %v2551, %v2533
        %v2553 = vmul.f32 %v2551, %v2535
        %v2554 = vmul.f32 %v2551, %v2537
        %v2555 = vmul.f32 %v2551, %v2539
        %v2556 = vmul.f32 %v2551, %v2541
        %v2557 = vmul.f32 %v2551, %v2543
        %v2558 = vmul.f32 %v2551, %v2545
        %v2559 = vmul.f32 %v2551, %v2547
        %v2560 = vmul.f32 %v2551, %v2549
        %v2561 = vadd.f32 %v2523, %v2552
        %v2562 = vadd.f32 %v2524, %v2553
        %v2563 = vadd.f32 %v2525, %v2554
        %v2564 = vadd.f32 %v2526, %v2555
        %v2565 = vadd.f32 %v2527, %v2556
        %v2566 = vadd.f32 %v2528, %v2557
        %v2567 = vadd.f32 %v2529, %v2558
        %v2568 = vadd.f32 %v2530, %v2559
        %v2569 = vadd.f32 %v2531, %v2560
        %2570 = vrot.lane.b32.xlu0 %v2415, 126
        %v2571 = vpop.permute.xlu0 %2570
        %2572 = vrot.lane.b32.xlu0 %v2417, 126
        %v2573 = vpop.permute.xlu0 %2572
        %2574 = vrot.lane.b32.xlu0 %v2419, 126
        %v2575 = vpop.permute.xlu0 %2574
        %2576 = vrot.lane.b32.xlu0 %v2421, 126
        %v2577 = vpop.permute.xlu0 %2576
        %2578 = vrot.lane.b32.xlu0 %v2423, 126
        %v2579 = vpop.permute.xlu0 %2578
        %2580 = vrot.lane.b32.xlu0 %v2425, 126
        %v2581 = vpop.permute.xlu0 %2580
        %2582 = vrot.lane.b32.xlu0 %v2427, 126
        %v2583 = vpop.permute.xlu0 %2582
        %2584 = vrot.lane.b32.xlu0 %v2429, 126
        %v2585 = vpop.permute.xlu0 %2584
        %2586 = vrot.lane.b32.xlu0 %v2428, 126
        %v2587 = vpop.permute.xlu0 %2586
        %s2588 = sld [smem:[#allocation8 + $0x2f]]
        %v2589 = vstv %s2588
        %v2590 = vmul.f32 %v2589, %v2571
        %v2591 = vmul.f32 %v2589, %v2573
        %v2592 = vmul.f32 %v2589, %v2575
        %v2593 = vmul.f32 %v2589, %v2577
        %v2594 = vmul.f32 %v2589, %v2579
        %v2595 = vmul.f32 %v2589, %v2581
        %v2596 = vmul.f32 %v2589, %v2583
        %v2597 = vmul.f32 %v2589, %v2585
        %v2598 = vmul.f32 %v2589, %v2587
        %v2599 = vadd.f32 %v2561, %v2590
        %v2600 = vadd.f32 %v2562, %v2591
        %v2601 = vadd.f32 %v2563, %v2592
        %v2602 = vadd.f32 %v2564, %v2593
        %v2603 = vadd.f32 %v2565, %v2594
        %v2604 = vadd.f32 %v2566, %v2595
        %v2605 = vadd.f32 %v2567, %v2596
        %v2606 = vadd.f32 %v2568, %v2597
        %v2607 = vadd.f32 %v2569, %v2598
        %v2608 = vmul.f32 %v2599, 0.5
        %v2609 = vmul.f32 %v2600, 0.5
        %v2610 = vmul.f32 %v2601, 0.5
        %v2611 = vmul.f32 %v2602, 0.5
        %v2612 = vmul.f32 %v2603, 0.5
        %v2613 = vmul.f32 %v2604, 0.5
        %v2614 = vmul.f32 %v2605, 0.5
        %v2615 = vmul.f32 %v2606, 0.5
        %v2616 = vmul.f32 %v2607, 0.5
        %v2617 = vmul.f32 %v2599, %v2599
        %v2618 = vmul.f32 %v2600, %v2600
        %v2619 = vmul.f32 %v2601, %v2601
        %v2620 = vmul.f32 %v2602, %v2602
        %v2621 = vmul.f32 %v2603, %v2603
        %v2622 = vmul.f32 %v2604, %v2604
        %v2623 = vmul.f32 %v2605, %v2605
        %v2624 = vmul.f32 %v2606, %v2606
        %v2625 = vmul.f32 %v2607, %v2607
        %v2626 = vmul.f32 %v2617, 0.035677407
        %v2627 = vmul.f32 %v2618, 0.035677407
        %v2628 = vmul.f32 %v2619, 0.035677407
        %v2629 = vmul.f32 %v2620, 0.035677407
        %v2630 = vmul.f32 %v2621, 0.035677407
        %v2631 = vmul.f32 %v2622, 0.035677407
        %v2632 = vmul.f32 %v2623, 0.035677407
        %v2633 = vmul.f32 %v2624, 0.035677407
        %v2634 = vmul.f32 %v2625, 0.035677407
        %v2635 = vadd.f32 %v2626, 0.7978846
        %v2636 = vadd.f32 %v2627, 0.7978846
        %v2637 = vadd.f32 %v2628, 0.7978846
        %v2638 = vadd.f32 %v2629, 0.7978846
        %v2639 = vadd.f32 %v2630, 0.7978846
        %v2640 = vadd.f32 %v2631, 0.7978846
        %v2641 = vadd.f32 %v2632, 0.7978846
        %v2642 = vadd.f32 %v2633, 0.7978846
        %v2643 = vadd.f32 %v2634, 0.7978846
        %v2644 = vmul.f32 %v2599, %v2635
        %v2645 = vmul.f32 %v2600, %v2636
        %v2646 = vmul.f32 %v2601, %v2637
        %v2647 = vmul.f32 %v2602, %v2638
        %v2648 = vmul.f32 %v2603, %v2639
        %v2649 = vmul.f32 %v2604, %v2640
        %v2650 = vmul.f32 %v2605, %v2641
        %v2651 = vmul.f32 %v2606, %v2642
        %v2652 = vmul.f32 %v2607, %v2643
        %v2653 = vtanh.pop %v2644
        %v2654 = vtanh.pop %v2645
        %v2655 = vtanh.pop %v2646
        %v2656 = vtanh.pop %v2647
        %v2657 = vtanh.pop %v2648
        %v2658 = vtanh.pop %v2649
        %v2659 = vtanh.pop %v2650
        %v2660 = vtanh.pop %v2651
        %v2661 = vtanh.pop %v2652
        %v2662 = vadd.f32 %v2653, 1.0
        %v2663 = vadd.f32 %v2654, 1.0
        %v2664 = vadd.f32 %v2655, 1.0
        %v2665 = vadd.f32 %v2656, 1.0
        %v2666 = vadd.f32 %v2657, 1.0
        %v2667 = vadd.f32 %v2658, 1.0
        %v2668 = vadd.f32 %v2659, 1.0
        %v2669 = vadd.f32 %v2660, 1.0
        %v2670 = vadd.f32 %v2661, 1.0
        %v2671 = vmul.f32 %v2608, %v2662
        %v2672 = vmul.f32 %v2609, %v2663
        %v2673 = vmul.f32 %v2610, %v2664
        %v2674 = vmul.f32 %v2611, %v2665
        %v2675 = vmul.f32 %v2612, %v2666
        %v2676 = vmul.f32 %v2613, %v2667
        %v2677 = vmul.f32 %v2614, %v2668
        %v2678 = vmul.f32 %v2615, %v2669
        %v2679 = vmul.f32 %v2616, %v2670
        %s2680 = sld [smem:[#allocation11]]
        %v2681 = vstv %s2680
        %s2682 = sld [smem:[#allocation11 + $0x1]]
        %v2683 = vstv %s2682
        %s2684 = sld [smem:[#allocation9]]
        %v2685 = vstv %s2684
        %v2686 = vmul.f32 %v2685, %v2671
        %v2687 = vmul.f32 %v2685, %v2672
        %v2688 = vmul.f32 %v2685, %v2673
        %v2689 = vmul.f32 %v2685, %v2674
        %v2690 = vmul.f32 %v2685, %v2675
        %v2691 = vmul.f32 %v2685, %v2676
        %v2692 = vmul.f32 %v2685, %v2677
        %v2693 = vmul.f32 %v2685, %v2678
        %v2694 = vadd.f32 %v2681, %v2686
        %v2695 = vadd.f32 %v2681, %v2687
        %v2696 = vadd.f32 %v2681, %v2688
        %v2697 = vadd.f32 %v2681, %v2689
        %v2698 = vadd.f32 %v2681, %v2690
        %v2699 = vadd.f32 %v2681, %v2691
        %v2700 = vadd.f32 %v2681, %v2692
        %v2701 = vadd.f32 %v2681, %v2693
        %s2702 = sld [smem:[#allocation9 + $0x19]]
        %v2703 = vstv %s2702
        %v2704 = vmul.f32 %v2703, %v2671
        %v2705 = vmul.f32 %v2703, %v2672
        %v2706 = vmul.f32 %v2703, %v2673
        %v2707 = vmul.f32 %v2703, %v2674
        %v2708 = vmul.f32 %v2703, %v2675
        %v2709 = vmul.f32 %v2703, %v2676
        %v2710 = vmul.f32 %v2703, %v2677
        %v2711 = vmul.f32 %v2703, %v2678
        %v2712 = vadd.f32 %v2683, %v2704
        %v2713 = vadd.f32 %v2683, %v2705
        %v2714 = vadd.f32 %v2683, %v2706
        %v2715 = vadd.f32 %v2683, %v2707
        %v2716 = vadd.f32 %v2683, %v2708
        %v2717 = vadd.f32 %v2683, %v2709
        %v2718 = vadd.f32 %v2683, %v2710
        %v2719 = vadd.f32 %v2683, %v2711
        %2720 = vrot.lane.b32.xlu0 %v2671, 127
        %v2721 = vpop.permute.xlu0 %2720
        %2722 = vrot.lane.b32.xlu0 %v2672, 127
        %v2723 = vpop.permute.xlu0 %2722
        %2724 = vrot.lane.b32.xlu0 %v2673, 127
        %v2725 = vpop.permute.xlu0 %2724
        %2726 = vrot.lane.b32.xlu0 %v2674, 127
        %v2727 = vpop.permute.xlu0 %2726
        %2728 = vrot.lane.b32.xlu0 %v2675, 127
        %v2729 = vpop.permute.xlu0 %2728
        %2730 = vrot.lane.b32.xlu0 %v2676, 127
        %v2731 = vpop.permute.xlu0 %2730
        %2732 = vrot.lane.b32.xlu0 %v2677, 127
        %v2733 = vpop.permute.xlu0 %2732
        %2734 = vrot.lane.b32.xlu0 %v2678, 127
        %v2735 = vpop.permute.xlu0 %2734
        %s2736 = sld [smem:[#allocation9 + $0x1]]
        %v2737 = vstv %s2736
        %v2738 = vmul.f32 %v2737, %v2721
        %v2739 = vmul.f32 %v2737, %v2723
        %v2740 = vmul.f32 %v2737, %v2725
        %v2741 = vmul.f32 %v2737, %v2727
        %v2742 = vmul.f32 %v2737, %v2729
        %v2743 = vmul.f32 %v2737, %v2731
        %v2744 = vmul.f32 %v2737, %v2733
        %v2745 = vmul.f32 %v2737, %v2735
        %v2746 = vadd.f32 %v2694, %v2738
        %v2747 = vadd.f32 %v2695, %v2739
        %v2748 = vadd.f32 %v2696, %v2740
        %v2749 = vadd.f32 %v2697, %v2741
        %v2750 = vadd.f32 %v2698, %v2742
        %v2751 = vadd.f32 %v2699, %v2743
        %v2752 = vadd.f32 %v2700, %v2744
        %v2753 = vadd.f32 %v2701, %v2745
        %s2754 = sld [smem:[#allocation9 + $0x1a]]
        %v2755 = vstv %s2754
        %v2756 = vmul.f32 %v2755, %v2721
        %v2757 = vmul.f32 %v2755, %v2723
        %v2758 = vmul.f32 %v2755, %v2725
        %v2759 = vmul.f32 %v2755, %v2727
        %v2760 = vmul.f32 %v2755, %v2729
        %v2761 = vmul.f32 %v2755, %v2731
        %v2762 = vmul.f32 %v2755, %v2733
        %v2763 = vmul.f32 %v2755, %v2735
        %v2764 = vadd.f32 %v2712, %v2756
        %v2765 = vadd.f32 %v2713, %v2757
        %v2766 = vadd.f32 %v2714, %v2758
        %v2767 = vadd.f32 %v2715, %v2759
        %v2768 = vadd.f32 %v2716, %v2760
        %v2769 = vadd.f32 %v2717, %v2761
        %v2770 = vadd.f32 %v2718, %v2762
        %v2771 = vadd.f32 %v2719, %v2763
        %2772 = vrot.lane.b32.xlu0 %v2671, 126
        %v2773 = vpop.permute.xlu0 %2772
        %2774 = vrot.lane.b32.xlu0 %v2672, 126
        %v2775 = vpop.permute.xlu0 %2774
        %2776 = vrot.lane.b32.xlu0 %v2673, 126
        %v2777 = vpop.permute.xlu0 %2776
        %2778 = vrot.lane.b32.xlu0 %v2674, 126
        %v2779 = vpop.permute.xlu0 %2778
        %2780 = vrot.lane.b32.xlu0 %v2675, 126
        %v2781 = vpop.permute.xlu0 %2780
        %2782 = vrot.lane.b32.xlu0 %v2676, 126
        %v2783 = vpop.permute.xlu0 %2782
        %2784 = vrot.lane.b32.xlu0 %v2677, 126
        %v2785 = vpop.permute.xlu0 %2784
        %2786 = vrot.lane.b32.xlu0 %v2678, 126
        %v2787 = vpop.permute.xlu0 %2786
        %s2788 = sld [smem:[#allocation9 + $0x2]]
        %v2789 = vstv %s2788
        %v2790 = vmul.f32 %v2789, %v2773
        %v2791 = vmul.f32 %v2789, %v2775
        %v2792 = vmul.f32 %v2789, %v2777
        %v2793 = vmul.f32 %v2789, %v2779
        %v2794 = vmul.f32 %v2789, %v2781
        %v2795 = vmul.f32 %v2789, %v2783
        %v2796 = vmul.f32 %v2789, %v2785
        %v2797 = vmul.f32 %v2789, %v2787
        %v2798 = vadd.f32 %v2746, %v2790
        %v2799 = vadd.f32 %v2747, %v2791
        %v2800 = vadd.f32 %v2748, %v2792
        %v2801 = vadd.f32 %v2749, %v2793
        %v2802 = vadd.f32 %v2750, %v2794
        %v2803 = vadd.f32 %v2751, %v2795
        %v2804 = vadd.f32 %v2752, %v2796
        %v2805 = vadd.f32 %v2753, %v2797
        %s2806 = sld [smem:[#allocation9 + $0x1b]]
        %v2807 = vstv %s2806
        %v2808 = vmul.f32 %v2807, %v2773
        %v2809 = vmul.f32 %v2807, %v2775
        %v2810 = vmul.f32 %v2807, %v2777
        %v2811 = vmul.f32 %v2807, %v2779
        %v2812 = vmul.f32 %v2807, %v2781
        %v2813 = vmul.f32 %v2807, %v2783
        %v2814 = vmul.f32 %v2807, %v2785
        %v2815 = vmul.f32 %v2807, %v2787
        %v2816 = vadd.f32 %v2764, %v2808
        %v2817 = vadd.f32 %v2765, %v2809
        %v2818 = vadd.f32 %v2766, %v2810
        %v2819 = vadd.f32 %v2767, %v2811
        %v2820 = vadd.f32 %v2768, %v2812
        %v2821 = vadd.f32 %v2769, %v2813
        %v2822 = vadd.f32 %v2770, %v2814
        %v2823 = vadd.f32 %v2771, %v2815
        %2824 = vrot.lane.b32.xlu0 %v2671, 125
        %v2825 = vpop.permute.xlu0 %2824
        %2826 = vrot.lane.b32.xlu0 %v2672, 125
        %v2827 = vpop.permute.xlu0 %2826
        %2828 = vrot.lane.b32.xlu0 %v2673, 125
        %v2829 = vpop.permute.xlu0 %2828
        %2830 = vrot.lane.b32.xlu0 %v2674, 125
        %v2831 = vpop.permute.xlu0 %2830
        %2832 = vrot.lane.b32.xlu0 %v2675, 125
        %v2833 = vpop.permute.xlu0 %2832
        %2834 = vrot.lane.b32.xlu0 %v2676, 125
        %v2835 = vpop.permute.xlu0 %2834
        %2836 = vrot.lane.b32.xlu0 %v2677, 125
        %v2837 = vpop.permute.xlu0 %2836
        %2838 = vrot.lane.b32.xlu0 %v2678, 125
        %v2839 = vpop.permute.xlu0 %2838
        %s2840 = sld [smem:[#allocation9 + $0x3]]
        %v2841 = vstv %s2840
        %v2842 = vmul.f32 %v2841, %v2825
        %v2843 = vmul.f32 %v2841, %v2827
        %v2844 = vmul.f32 %v2841, %v2829
        %v2845 = vmul.f32 %v2841, %v2831
        %v2846 = vmul.f32 %v2841, %v2833
        %v2847 = vmul.f32 %v2841, %v2835
        %v2848 = vmul.f32 %v2841, %v2837
        %v2849 = vmul.f32 %v2841, %v2839
        %v2850 = vadd.f32 %v2798, %v2842
        %v2851 = vadd.f32 %v2799, %v2843
        %v2852 = vadd.f32 %v2800, %v2844
        %v2853 = vadd.f32 %v2801, %v2845
        %v2854 = vadd.f32 %v2802, %v2846
        %v2855 = vadd.f32 %v2803, %v2847
        %v2856 = vadd.f32 %v2804, %v2848
        %v2857 = vadd.f32 %v2805, %v2849
        %s2858 = sld [smem:[#allocation9 + $0x1c]]
        %v2859 = vstv %s2858
        %v2860 = vmul.f32 %v2859, %v2825
        %v2861 = vmul.f32 %v2859, %v2827
        %v2862 = vmul.f32 %v2859, %v2829
        %v2863 = vmul.f32 %v2859, %v2831
        %v2864 = vmul.f32 %v2859, %v2833
        %v2865 = vmul.f32 %v2859, %v2835
        %v2866 = vmul.f32 %v2859, %v2837
        %v2867 = vmul.f32 %v2859, %v2839
        %v2868 = vadd.f32 %v2816, %v2860
        %v2869 = vadd.f32 %v2817, %v2861
        %v2870 = vadd.f32 %v2818, %v2862
        %v2871 = vadd.f32 %v2819, %v2863
        %v2872 = vadd.f32 %v2820, %v2864
        %v2873 = vadd.f32 %v2821, %v2865
        %v2874 = vadd.f32 %v2822, %v2866
        %v2875 = vadd.f32 %v2823, %v2867
        %2876 = vrot.lane.b32.xlu0 %v2671, 124
        %v2877 = vpop.permute.xlu0 %2876
        %2878 = vrot.lane.b32.xlu0 %v2672, 124
        %v2879 = vpop.permute.xlu0 %2878
        %2880 = vrot.lane.b32.xlu0 %v2673, 124
        %v2881 = vpop.permute.xlu0 %2880
        %2882 = vrot.lane.b32.xlu0 %v2674, 124
        %v2883 = vpop.permute.xlu0 %2882
        %2884 = vrot.lane.b32.xlu0 %v2675, 124
        %v2885 = vpop.permute.xlu0 %2884
        %2886 = vrot.lane.b32.xlu0 %v2676, 124
        %v2887 = vpop.permute.xlu0 %2886
        %2888 = vrot.lane.b32.xlu0 %v2677, 124
        %v2889 = vpop.permute.xlu0 %2888
        %2890 = vrot.lane.b32.xlu0 %v2678, 124
        %v2891 = vpop.permute.xlu0 %2890
        %s2892 = sld [smem:[#allocation9 + $0x4]]
        %v2893 = vstv %s2892
        %v2894 = vmul.f32 %v2893, %v2877
        %v2895 = vmul.f32 %v2893, %v2879
        %v2896 = vmul.f32 %v2893, %v2881
        %v2897 = vmul.f32 %v2893, %v2883
        %v2898 = vmul.f32 %v2893, %v2885
        %v2899 = vmul.f32 %v2893, %v2887
        %v2900 = vmul.f32 %v2893, %v2889
        %v2901 = vmul.f32 %v2893, %v2891
        %v2902 = vadd.f32 %v2850, %v2894
        %v2903 = vadd.f32 %v2851, %v2895
        %v2904 = vadd.f32 %v2852, %v2896
        %v2905 = vadd.f32 %v2853, %v2897
        %v2906 = vadd.f32 %v2854, %v2898
        %v2907 = vadd.f32 %v2855, %v2899
        %v2908 = vadd.f32 %v2856, %v2900
        %v2909 = vadd.f32 %v2857, %v2901
        %s2910 = sld [smem:[#allocation9 + $0x1d]]
        %v2911 = vstv %s2910
        %v2912 = vmul.f32 %v2911, %v2877
        %v2913 = vmul.f32 %v2911, %v2879
        %v2914 = vmul.f32 %v2911, %v2881
        %v2915 = vmul.f32 %v2911, %v2883
        %v2916 = vmul.f32 %v2911, %v2885
        %v2917 = vmul.f32 %v2911, %v2887
        %v2918 = vmul.f32 %v2911, %v2889
        %v2919 = vmul.f32 %v2911, %v2891
        %v2920 = vadd.f32 %v2868, %v2912
        %v2921 = vadd.f32 %v2869, %v2913
        %v2922 = vadd.f32 %v2870, %v2914
        %v2923 = vadd.f32 %v2871, %v2915
        %v2924 = vadd.f32 %v2872, %v2916
        %v2925 = vadd.f32 %v2873, %v2917
        %v2926 = vadd.f32 %v2874, %v2918
        %v2927 = vadd.f32 %v2875, %v2919
        %s2928 = sld [smem:[#allocation9 + $0x5]]
        %v2929 = vstv %s2928
        %v2930 = vmul.f32 %v2929, %v2671
        %v2931 = vmul.f32 %v2929, %v2672
        %v2932 = vmul.f32 %v2929, %v2673
        %v2933 = vmul.f32 %v2929, %v2674
        %v2934 = vmul.f32 %v2929, %v2675
        %v2935 = vmul.f32 %v2929, %v2676
        %v2936 = vmul.f32 %v2929, %v2677
        %v2937 = vmul.f32 %v2929, %v2678
        %v2938 = vmul.f32 %v2929, %v2679
        %v2948 = vrot.slane %v2930, 1
        %v2949 = vrot.slane %v2931, 1
        %v2950 = vsel %vm726, %v2948, %v2949
        %v2951 = vrot.slane %v2932, 1
        %v2952 = vsel %vm726, %v2949, %v2951
        %v2953 = vrot.slane %v2933, 1
        %v2954 = vsel %vm726, %v2951, %v2953
        %v2955 = vrot.slane %v2934, 1
        %v2956 = vsel %vm726, %v2953, %v2955
        %v2957 = vrot.slane %v2935, 1
        %v2958 = vsel %vm726, %v2955, %v2957
        %v2959 = vrot.slane %v2936, 1
        %v2960 = vsel %vm726, %v2957, %v2959
        %v2961 = vrot.slane %v2937, 1
        %v2962 = vsel %vm726, %v2959, %v2961
        %v2963 = vrot.slane %v2938, 1
        %v2964 = vsel %vm726, %v2961, %v2963
        %v2973 = vadd.f32 %v2902, %v2950
        %v2974 = vadd.f32 %v2903, %v2952
        %v2975 = vadd.f32 %v2904, %v2954
        %v2976 = vadd.f32 %v2905, %v2956
        %v2977 = vadd.f32 %v2906, %v2958
        %v2978 = vadd.f32 %v2907, %v2960
        %v2979 = vadd.f32 %v2908, %v2962
        %v2980 = vadd.f32 %v2909, %v2964
        %s2981 = sld [smem:[#allocation9 + $0x1e]]
        %v2982 = vstv %s2981
        %v2983 = vmul.f32 %v2982, %v2671
        %v2984 = vmul.f32 %v2982, %v2672
        %v2985 = vmul.f32 %v2982, %v2673
        %v2986 = vmul.f32 %v2982, %v2674
        %v2987 = vmul.f32 %v2982, %v2675
        %v2988 = vmul.f32 %v2982, %v2676
        %v2989 = vmul.f32 %v2982, %v2677
        %v2990 = vmul.f32 %v2982, %v2678
        %v2991 = vmul.f32 %v2982, %v2679
        %v3001 = vrot.slane %v2983, 1
        %v3002 = vrot.slane %v2984, 1
        %v3003 = vsel %vm726, %v3001, %v3002
        %v3004 = vrot.slane %v2985, 1
        %v3005 = vsel %vm726, %v3002, %v3004
        %v3006 = vrot.slane %v2986, 1
        %v3007 = vsel %vm726, %v3004, %v3006
        %v3008 = vrot.slane %v2987, 1
        %v3009 = vsel %vm726, %v3006, %v3008
        %v3010 = vrot.slane %v2988, 1
        %v3011 = vsel %vm726, %v3008, %v3010
        %v3012 = vrot.slane %v2989, 1
        %v3013 = vsel %vm726, %v3010, %v3012
        %v3014 = vrot.slane %v2990, 1
        %v3015 = vsel %vm726, %v3012, %v3014
        %v3016 = vrot.slane %v2991, 1
        %v3017 = vsel %vm726, %v3014, %v3016
        %v3026 = vadd.f32 %v2920, %v3003
        %v3027 = vadd.f32 %v2921, %v3005
        %v3028 = vadd.f32 %v2922, %v3007
        %v3029 = vadd.f32 %v2923, %v3009
        %v3030 = vadd.f32 %v2924, %v3011
        %v3031 = vadd.f32 %v2925, %v3013
        %v3032 = vadd.f32 %v2926, %v3015
        %v3033 = vadd.f32 %v2927, %v3017
        %v3043 = vrot.slane %v2671, 1
        %v3044 = vrot.slane %v2672, 1
        %v3045 = vsel %vm726, %v3043, %v3044
        %v3046 = vrot.slane %v2673, 1
        %v3047 = vsel %vm726, %v3044, %v3046
        %v3048 = vrot.slane %v2674, 1
        %v3049 = vsel %vm726, %v3046, %v3048
        %v3050 = vrot.slane %v2675, 1
        %v3051 = vsel %vm726, %v3048, %v3050
        %v3052 = vrot.slane %v2676, 1
        %v3053 = vsel %vm726, %v3050, %v3052
        %v3054 = vrot.slane %v2677, 1
        %v3055 = vsel %vm726, %v3052, %v3054
        %v3056 = vrot.slane %v2678, 1
        %v3057 = vsel %vm726, %v3054, %v3056
        %v3058 = vrot.slane %v2679, 1
        %v3059 = vsel %vm726, %v3056, %v3058
        %3068 = vrot.lane.b32.xlu0 %v3045, 127
        %v3069 = vpop.permute.xlu0 %3068
        %3070 = vrot.lane.b32.xlu0 %v3047, 127
        %v3071 = vpop.permute.xlu0 %3070
        %3072 = vrot.lane.b32.xlu0 %v3049, 127
        %v3073 = vpop.permute.xlu0 %3072
        %3074 = vrot.lane.b32.xlu0 %v3051, 127
        %v3075 = vpop.permute.xlu0 %3074
        %3076 = vrot.lane.b32.xlu0 %v3053, 127
        %v3077 = vpop.permute.xlu0 %3076
        %3078 = vrot.lane.b32.xlu0 %v3055, 127
        %v3079 = vpop.permute.xlu0 %3078
        %3080 = vrot.lane.b32.xlu0 %v3057, 127
        %v3081 = vpop.permute.xlu0 %3080
        %3082 = vrot.lane.b32.xlu0 %v3059, 127
        %v3083 = vpop.permute.xlu0 %3082
        %s3084 = sld [smem:[#allocation9 + $0x6]]
        %v3085 = vstv %s3084
        %v3086 = vmul.f32 %v3085, %v3069
        %v3087 = vmul.f32 %v3085, %v3071
        %v3088 = vmul.f32 %v3085, %v3073
        %v3089 = vmul.f32 %v3085, %v3075
        %v3090 = vmul.f32 %v3085, %v3077
        %v3091 = vmul.f32 %v3085, %v3079
        %v3092 = vmul.f32 %v3085, %v3081
        %v3093 = vmul.f32 %v3085, %v3083
        %v3094 = vadd.f32 %v2973, %v3086
        %v3095 = vadd.f32 %v2974, %v3087
        %v3096 = vadd.f32 %v2975, %v3088
        %v3097 = vadd.f32 %v2976, %v3089
        %v3098 = vadd.f32 %v2977, %v3090
        %v3099 = vadd.f32 %v2978, %v3091
        %v3100 = vadd.f32 %v2979, %v3092
        %v3101 = vadd.f32 %v2980, %v3093
        %s3102 = sld [smem:[#allocation9 + $0x1f]]
        %v3103 = vstv %s3102
        %v3104 = vmul.f32 %v3103, %v3069
        %v3105 = vmul.f32 %v3103, %v3071
        %v3106 = vmul.f32 %v3103, %v3073
        %v3107 = vmul.f32 %v3103, %v3075
        %v3108 = vmul.f32 %v3103, %v3077
        %v3109 = vmul.f32 %v3103, %v3079
        %v3110 = vmul.f32 %v3103, %v3081
        %v3111 = vmul.f32 %v3103, %v3083
        %v3112 = vadd.f32 %v3026, %v3104
        %v3113 = vadd.f32 %v3027, %v3105
        %v3114 = vadd.f32 %v3028, %v3106
        %v3115 = vadd.f32 %v3029, %v3107
        %v3116 = vadd.f32 %v3030, %v3108
        %v3117 = vadd.f32 %v3031, %v3109
        %v3118 = vadd.f32 %v3032, %v3110
        %v3119 = vadd.f32 %v3033, %v3111
        %3120 = vrot.lane.b32.xlu0 %v3045, 126
        %v3121 = vpop.permute.xlu0 %3120
        %3122 = vrot.lane.b32.xlu0 %v3047, 126
        %v3123 = vpop.permute.xlu0 %3122
        %3124 = vrot.lane.b32.xlu0 %v3049, 126
        %v3125 = vpop.permute.xlu0 %3124
        %3126 = vrot.lane.b32.xlu0 %v3051, 126
        %v3127 = vpop.permute.xlu0 %3126
        %3128 = vrot.lane.b32.xlu0 %v3053, 126
        %v3129 = vpop.permute.xlu0 %3128
        %3130 = vrot.lane.b32.xlu0 %v3055, 126
        %v3131 = vpop.permute.xlu0 %3130
        %3132 = vrot.lane.b32.xlu0 %v3057, 126
        %v3133 = vpop.permute.xlu0 %3132
        %3134 = vrot.lane.b32.xlu0 %v3059, 126
        %v3135 = vpop.permute.xlu0 %3134
        %s3136 = sld [smem:[#allocation9 + $0x7]]
        %v3137 = vstv %s3136
        %v3138 = vmul.f32 %v3137, %v3121
        %v3139 = vmul.f32 %v3137, %v3123
        %v3140 = vmul.f32 %v3137, %v3125
        %v3141 = vmul.f32 %v3137, %v3127
        %v3142 = vmul.f32 %v3137, %v3129
        %v3143 = vmul.f32 %v3137, %v3131
        %v3144 = vmul.f32 %v3137, %v3133
        %v3145 = vmul.f32 %v3137, %v3135
        %v3146 = vadd.f32 %v3094, %v3138
        %v3147 = vadd.f32 %v3095, %v3139
        %v3148 = vadd.f32 %v3096, %v3140
        %v3149 = vadd.f32 %v3097, %v3141
        %v3150 = vadd.f32 %v3098, %v3142
        %v3151 = vadd.f32 %v3099, %v3143
        %v3152 = vadd.f32 %v3100, %v3144
        %v3153 = vadd.f32 %v3101, %v3145
        %s3154 = sld [smem:[#allocation9 + $0x20]]
        %v3155 = vstv %s3154
        %v3156 = vmul.f32 %v3155, %v3121
        %v3157 = vmul.f32 %v3155, %v3123
        %v3158 = vmul.f32 %v3155, %v3125
        %v3159 = vmul.f32 %v3155, %v3127
        %v3160 = vmul.f32 %v3155, %v3129
        %v3161 = vmul.f32 %v3155, %v3131
        %v3162 = vmul.f32 %v3155, %v3133
        %v3163 = vmul.f32 %v3155, %v3135
        %v3164 = vadd.f32 %v3112, %v3156
        %v3165 = vadd.f32 %v3113, %v3157
        %v3166 = vadd.f32 %v3114, %v3158
        %v3167 = vadd.f32 %v3115, %v3159
        %v3168 = vadd.f32 %v3116, %v3160
        %v3169 = vadd.f32 %v3117, %v3161
        %v3170 = vadd.f32 %v3118, %v3162
        %v3171 = vadd.f32 %v3119, %v3163
        %3172 = vrot.lane.b32.xlu0 %v3045, 125
        %v3173 = vpop.permute.xlu0 %3172
        %3174 = vrot.lane.b32.xlu0 %v3047, 125
        %v3175 = vpop.permute.xlu0 %3174
        %3176 = vrot.lane.b32.xlu0 %v3049, 125
        %v3177 = vpop.permute.xlu0 %3176
        %3178 = vrot.lane.b32.xlu0 %v3051, 125
        %v3179 = vpop.permute.xlu0 %3178
        %3180 = vrot.lane.b32.xlu0 %v3053, 125
        %v3181 = vpop.permute.xlu0 %3180
        %3182 = vrot.lane.b32.xlu0 %v3055, 125
        %v3183 = vpop.permute.xlu0 %3182
        %3184 = vrot.lane.b32.xlu0 %v3057, 125
        %v3185 = vpop.permute.xlu0 %3184
        %3186 = vrot.lane.b32.xlu0 %v3059, 125
        %v3187 = vpop.permute.xlu0 %3186
        %s3188 = sld [smem:[#allocation9 + $0x8]]
        %v3189 = vstv %s3188
        %v3190 = vmul.f32 %v3189, %v3173
        %v3191 = vmul.f32 %v3189, %v3175
        %v3192 = vmul.f32 %v3189, %v3177
        %v3193 = vmul.f32 %v3189, %v3179
        %v3194 = vmul.f32 %v3189, %v3181
        %v3195 = vmul.f32 %v3189, %v3183
        %v3196 = vmul.f32 %v3189, %v3185
        %v3197 = vmul.f32 %v3189, %v3187
        %v3198 = vadd.f32 %v3146, %v3190
        %v3199 = vadd.f32 %v3147, %v3191
        %v3200 = vadd.f32 %v3148, %v3192
        %v3201 = vadd.f32 %v3149, %v3193
        %v3202 = vadd.f32 %v3150, %v3194
        %v3203 = vadd.f32 %v3151, %v3195
        %v3204 = vadd.f32 %v3152, %v3196
        %v3205 = vadd.f32 %v3153, %v3197
        %s3206 = sld [smem:[#allocation9 + $0x21]]
        %v3207 = vstv %s3206
        %v3208 = vmul.f32 %v3207, %v3173
        %v3209 = vmul.f32 %v3207, %v3175
        %v3210 = vmul.f32 %v3207, %v3177
        %v3211 = vmul.f32 %v3207, %v3179
        %v3212 = vmul.f32 %v3207, %v3181
        %v3213 = vmul.f32 %v3207, %v3183
        %v3214 = vmul.f32 %v3207, %v3185
        %v3215 = vmul.f32 %v3207, %v3187
        %v3216 = vadd.f32 %v3164, %v3208
        %v3217 = vadd.f32 %v3165, %v3209
        %v3218 = vadd.f32 %v3166, %v3210
        %v3219 = vadd.f32 %v3167, %v3211
        %v3220 = vadd.f32 %v3168, %v3212
        %v3221 = vadd.f32 %v3169, %v3213
        %v3222 = vadd.f32 %v3170, %v3214
        %v3223 = vadd.f32 %v3171, %v3215
        %3224 = vrot.lane.b32.xlu0 %v3045, 124
        %v3225 = vpop.permute.xlu0 %3224
        %3226 = vrot.lane.b32.xlu0 %v3047, 124
        %v3227 = vpop.permute.xlu0 %3226
        %3228 = vrot.lane.b32.xlu0 %v3049, 124
        %v3229 = vpop.permute.xlu0 %3228
        %3230 = vrot.lane.b32.xlu0 %v3051, 124
        %v3231 = vpop.permute.xlu0 %3230
        %3232 = vrot.lane.b32.xlu0 %v3053, 124
        %v3233 = vpop.permute.xlu0 %3232
        %3234 = vrot.lane.b32.xlu0 %v3055, 124
        %v3235 = vpop.permute.xlu0 %3234
        %3236 = vrot.lane.b32.xlu0 %v3057, 124
        %v3237 = vpop.permute.xlu0 %3236
        %3238 = vrot.lane.b32.xlu0 %v3059, 124
        %v3239 = vpop.permute.xlu0 %3238
        %s3240 = sld [smem:[#allocation9 + $0x9]]
        %v3241 = vstv %s3240
        %v3242 = vmul.f32 %v3241, %v3225
        %v3243 = vmul.f32 %v3241, %v3227
        %v3244 = vmul.f32 %v3241, %v3229
        %v3245 = vmul.f32 %v3241, %v3231
        %v3246 = vmul.f32 %v3241, %v3233
        %v3247 = vmul.f32 %v3241, %v3235
        %v3248 = vmul.f32 %v3241, %v3237
        %v3249 = vmul.f32 %v3241, %v3239
        %v3250 = vadd.f32 %v3198, %v3242
        %v3251 = vadd.f32 %v3199, %v3243
        %v3252 = vadd.f32 %v3200, %v3244
        %v3253 = vadd.f32 %v3201, %v3245
        %v3254 = vadd.f32 %v3202, %v3246
        %v3255 = vadd.f32 %v3203, %v3247
        %v3256 = vadd.f32 %v3204, %v3248
        %v3257 = vadd.f32 %v3205, %v3249
        %s3258 = sld [smem:[#allocation9 + $0x22]]
        %v3259 = vstv %s3258
        %v3260 = vmul.f32 %v3259, %v3225
        %v3261 = vmul.f32 %v3259, %v3227
        %v3262 = vmul.f32 %v3259, %v3229
        %v3263 = vmul.f32 %v3259, %v3231
        %v3264 = vmul.f32 %v3259, %v3233
        %v3265 = vmul.f32 %v3259, %v3235
        %v3266 = vmul.f32 %v3259, %v3237
        %v3267 = vmul.f32 %v3259, %v3239
        %v3268 = vadd.f32 %v3216, %v3260
        %v3269 = vadd.f32 %v3217, %v3261
        %v3270 = vadd.f32 %v3218, %v3262
        %v3271 = vadd.f32 %v3219, %v3263
        %v3272 = vadd.f32 %v3220, %v3264
        %v3273 = vadd.f32 %v3221, %v3265
        %v3274 = vadd.f32 %v3222, %v3266
        %v3275 = vadd.f32 %v3223, %v3267
        %s3276 = sld [smem:[#allocation9 + $0xa]]
        %v3277 = vstv %s3276
        %v3278 = vmul.f32 %v3277, %v2671
        %v3279 = vmul.f32 %v3277, %v2672
        %v3280 = vmul.f32 %v3277, %v2673
        %v3281 = vmul.f32 %v3277, %v2674
        %v3282 = vmul.f32 %v3277, %v2675
        %v3283 = vmul.f32 %v3277, %v2676
        %v3284 = vmul.f32 %v3277, %v2677
        %v3285 = vmul.f32 %v3277, %v2678
        %v3286 = vmul.f32 %v3277, %v2679
        %v3296 = vrot.slane %v3278, 2
        %v3297 = vrot.slane %v3279, 2
        %v3298 = vsel %vm922, %v3296, %v3297
        %v3299 = vrot.slane %v3280, 2
        %v3300 = vsel %vm922, %v3297, %v3299
        %v3301 = vrot.slane %v3281, 2
        %v3302 = vsel %vm922, %v3299, %v3301
        %v3303 = vrot.slane %v3282, 2
        %v3304 = vsel %vm922, %v3301, %v3303
        %v3305 = vrot.slane %v3283, 2
        %v3306 = vsel %vm922, %v3303, %v3305
        %v3307 = vrot.slane %v3284, 2
        %v3308 = vsel %vm922, %v3305, %v3307
        %v3309 = vrot.slane %v3285, 2
        %v3310 = vsel %vm922, %v3307, %v3309
        %v3311 = vrot.slane %v3286, 2
        %v3312 = vsel %vm922, %v3309, %v3311
        %v3321 = vadd.f32 %v3250, %v3298
        %v3322 = vadd.f32 %v3251, %v3300
        %v3323 = vadd.f32 %v3252, %v3302
        %v3324 = vadd.f32 %v3253, %v3304
        %v3325 = vadd.f32 %v3254, %v3306
        %v3326 = vadd.f32 %v3255, %v3308
        %v3327 = vadd.f32 %v3256, %v3310
        %v3328 = vadd.f32 %v3257, %v3312
        %s3329 = sld [smem:[#allocation9 + $0x23]]
        %v3330 = vstv %s3329
        %v3331 = vmul.f32 %v3330, %v2671
        %v3332 = vmul.f32 %v3330, %v2672
        %v3333 = vmul.f32 %v3330, %v2673
        %v3334 = vmul.f32 %v3330, %v2674
        %v3335 = vmul.f32 %v3330, %v2675
        %v3336 = vmul.f32 %v3330, %v2676
        %v3337 = vmul.f32 %v3330, %v2677
        %v3338 = vmul.f32 %v3330, %v2678
        %v3339 = vmul.f32 %v3330, %v2679
        %v3349 = vrot.slane %v3331, 2
        %v3350 = vrot.slane %v3332, 2
        %v3351 = vsel %vm922, %v3349, %v3350
        %v3352 = vrot.slane %v3333, 2
        %v3353 = vsel %vm922, %v3350, %v3352
        %v3354 = vrot.slane %v3334, 2
        %v3355 = vsel %vm922, %v3352, %v3354
        %v3356 = vrot.slane %v3335, 2
        %v3357 = vsel %vm922, %v3354, %v3356
        %v3358 = vrot.slane %v3336, 2
        %v3359 = vsel %vm922, %v3356, %v3358
        %v3360 = vrot.slane %v3337, 2
        %v3361 = vsel %vm922, %v3358, %v3360
        %v3362 = vrot.slane %v3338, 2
        %v3363 = vsel %vm922, %v3360, %v3362
        %v3364 = vrot.slane %v3339, 2
        %v3365 = vsel %vm922, %v3362, %v3364
        %v3374 = vadd.f32 %v3268, %v3351
        %v3375 = vadd.f32 %v3269, %v3353
        %v3376 = vadd.f32 %v3270, %v3355
        %v3377 = vadd.f32 %v3271, %v3357
        %v3378 = vadd.f32 %v3272, %v3359
        %v3379 = vadd.f32 %v3273, %v3361
        %v3380 = vadd.f32 %v3274, %v3363
        %v3381 = vadd.f32 %v3275, %v3365
        %v3382 = vrot.slane %v2671, 2
        %v3383 = vrot.slane %v2672, 2
        %v3384 = vsel %vm922, %v3382, %v3383
        %v3385 = vrot.slane %v2673, 2
        %v3386 = vsel %vm922, %v3383, %v3385
        %v3387 = vrot.slane %v2674, 2
        %v3388 = vsel %vm922, %v3385, %v3387
        %v3389 = vrot.slane %v2675, 2
        %v3390 = vsel %vm922, %v3387, %v3389
        %v3391 = vrot.slane %v2676, 2
        %v3392 = vsel %vm922, %v3389, %v3391
        %v3393 = vrot.slane %v2677, 2
        %v3394 = vsel %vm922, %v3391, %v3393
        %v3395 = vrot.slane %v2678, 2
        %v3396 = vsel %vm922, %v3393, %v3395
        %v3397 = vrot.slane %v2679, 2
        %v3398 = vsel %vm922, %v3395, %v3397
        %3407 = vrot.lane.b32.xlu0 %v3384, 127
        %v3408 = vpop.permute.xlu0 %3407
        %3409 = vrot.lane.b32.xlu0 %v3386, 127
        %v3410 = vpop.permute.xlu0 %3409
        %3411 = vrot.lane.b32.xlu0 %v3388, 127
        %v3412 = vpop.permute.xlu0 %3411
        %3413 = vrot.lane.b32.xlu0 %v3390, 127
        %v3414 = vpop.permute.xlu0 %3413
        %3415 = vrot.lane.b32.xlu0 %v3392, 127
        %v3416 = vpop.permute.xlu0 %3415
        %3417 = vrot.lane.b32.xlu0 %v3394, 127
        %v3418 = vpop.permute.xlu0 %3417
        %3419 = vrot.lane.b32.xlu0 %v3396, 127
        %v3420 = vpop.permute.xlu0 %3419
        %3421 = vrot.lane.b32.xlu0 %v3398, 127
        %v3422 = vpop.permute.xlu0 %3421
        %s3423 = sld [smem:[#allocation9 + $0xb]]
        %v3424 = vstv %s3423
        %v3425 = vmul.f32 %v3424, %v3408
        %v3426 = vmul.f32 %v3424, %v3410
        %v3427 = vmul.f32 %v3424, %v3412
        %v3428 = vmul.f32 %v3424, %v3414
        %v3429 = vmul.f32 %v3424, %v3416
        %v3430 = vmul.f32 %v3424, %v3418
        %v3431 = vmul.f32 %v3424, %v3420
        %v3432 = vmul.f32 %v3424, %v3422
        %v3433 = vadd.f32 %v3321, %v3425
        %v3434 = vadd.f32 %v3322, %v3426
        %v3435 = vadd.f32 %v3323, %v3427
        %v3436 = vadd.f32 %v3324, %v3428
        %v3437 = vadd.f32 %v3325, %v3429
        %v3438 = vadd.f32 %v3326, %v3430
        %v3439 = vadd.f32 %v3327, %v3431
        %v3440 = vadd.f32 %v3328, %v3432
        %s3441 = sld [smem:[#allocation9 + $0x24]]
        %v3442 = vstv %s3441
        %v3443 = vmul.f32 %v3442, %v3408
        %v3444 = vmul.f32 %v3442, %v3410
        %v3445 = vmul.f32 %v3442, %v3412
        %v3446 = vmul.f32 %v3442, %v3414
        %v3447 = vmul.f32 %v3442, %v3416
        %v3448 = vmul.f32 %v3442, %v3418
        %v3449 = vmul.f32 %v3442, %v3420
        %v3450 = vmul.f32 %v3442, %v3422
        %v3451 = vadd.f32 %v3374, %v3443
        %v3452 = vadd.f32 %v3375, %v3444
        %v3453 = vadd.f32 %v3376, %v3445
        %v3454 = vadd.f32 %v3377, %v3446
        %v3455 = vadd.f32 %v3378, %v3447
        %v3456 = vadd.f32 %v3379, %v3448
        %v3457 = vadd.f32 %v3380, %v3449
        %v3458 = vadd.f32 %v3381, %v3450
        %3459 = vrot.lane.b32.xlu0 %v3384, 126
        %v3460 = vpop.permute.xlu0 %3459
        %3461 = vrot.lane.b32.xlu0 %v3386, 126
        %v3462 = vpop.permute.xlu0 %3461
        %3463 = vrot.lane.b32.xlu0 %v3388, 126
        %v3464 = vpop.permute.xlu0 %3463
        %3465 = vrot.lane.b32.xlu0 %v3390, 126
        %v3466 = vpop.permute.xlu0 %3465
        %3467 = vrot.lane.b32.xlu0 %v3392, 126
        %v3468 = vpop.permute.xlu0 %3467
        %3469 = vrot.lane.b32.xlu0 %v3394, 126
        %v3470 = vpop.permute.xlu0 %3469
        %3471 = vrot.lane.b32.xlu0 %v3396, 126
        %v3472 = vpop.permute.xlu0 %3471
        %3473 = vrot.lane.b32.xlu0 %v3398, 126
        %v3474 = vpop.permute.xlu0 %3473
        %s3475 = sld [smem:[#allocation9 + $0xc]]
        %v3476 = vstv %s3475
        %v3477 = vmul.f32 %v3476, %v3460
        %v3478 = vmul.f32 %v3476, %v3462
        %v3479 = vmul.f32 %v3476, %v3464
        %v3480 = vmul.f32 %v3476, %v3466
        %v3481 = vmul.f32 %v3476, %v3468
        %v3482 = vmul.f32 %v3476, %v3470
        %v3483 = vmul.f32 %v3476, %v3472
        %v3484 = vmul.f32 %v3476, %v3474
        %v3485 = vadd.f32 %v3433, %v3477
        %v3486 = vadd.f32 %v3434, %v3478
        %v3487 = vadd.f32 %v3435, %v3479
        %v3488 = vadd.f32 %v3436, %v3480
        %v3489 = vadd.f32 %v3437, %v3481
        %v3490 = vadd.f32 %v3438, %v3482
        %v3491 = vadd.f32 %v3439, %v3483
        %v3492 = vadd.f32 %v3440, %v3484
        %s3493 = sld [smem:[#allocation9 + $0x25]]
        %v3494 = vstv %s3493
        %v3495 = vmul.f32 %v3494, %v3460
        %v3496 = vmul.f32 %v3494, %v3462
        %v3497 = vmul.f32 %v3494, %v3464
        %v3498 = vmul.f32 %v3494, %v3466
        %v3499 = vmul.f32 %v3494, %v3468
        %v3500 = vmul.f32 %v3494, %v3470
        %v3501 = vmul.f32 %v3494, %v3472
        %v3502 = vmul.f32 %v3494, %v3474
        %v3503 = vadd.f32 %v3451, %v3495
        %v3504 = vadd.f32 %v3452, %v3496
        %v3505 = vadd.f32 %v3453, %v3497
        %v3506 = vadd.f32 %v3454, %v3498
        %v3507 = vadd.f32 %v3455, %v3499
        %v3508 = vadd.f32 %v3456, %v3500
        %v3509 = vadd.f32 %v3457, %v3501
        %v3510 = vadd.f32 %v3458, %v3502
        %3511 = vrot.lane.b32.xlu0 %v3384, 125
        %v3512 = vpop.permute.xlu0 %3511
        %3513 = vrot.lane.b32.xlu0 %v3386, 125
        %v3514 = vpop.permute.xlu0 %3513
        %3515 = vrot.lane.b32.xlu0 %v3388, 125
        %v3516 = vpop.permute.xlu0 %3515
        %3517 = vrot.lane.b32.xlu0 %v3390, 125
        %v3518 = vpop.permute.xlu0 %3517
        %3519 = vrot.lane.b32.xlu0 %v3392, 125
        %v3520 = vpop.permute.xlu0 %3519
        %3521 = vrot.lane.b32.xlu0 %v3394, 125
        %v3522 = vpop.permute.xlu0 %3521
        %3523 = vrot.lane.b32.xlu0 %v3396, 125
        %v3524 = vpop.permute.xlu0 %3523
        %3525 = vrot.lane.b32.xlu0 %v3398, 125
        %v3526 = vpop.permute.xlu0 %3525
        %s3527 = sld [smem:[#allocation9 + $0xd]]
        %v3528 = vstv %s3527
        %v3529 = vmul.f32 %v3528, %v3512
        %v3530 = vmul.f32 %v3528, %v3514
        %v3531 = vmul.f32 %v3528, %v3516
        %v3532 = vmul.f32 %v3528, %v3518
        %v3533 = vmul.f32 %v3528, %v3520
        %v3534 = vmul.f32 %v3528, %v3522
        %v3535 = vmul.f32 %v3528, %v3524
        %v3536 = vmul.f32 %v3528, %v3526
        %v3537 = vadd.f32 %v3485, %v3529
        %v3538 = vadd.f32 %v3486, %v3530
        %v3539 = vadd.f32 %v3487, %v3531
        %v3540 = vadd.f32 %v3488, %v3532
        %v3541 = vadd.f32 %v3489, %v3533
        %v3542 = vadd.f32 %v3490, %v3534
        %v3543 = vadd.f32 %v3491, %v3535
        %v3544 = vadd.f32 %v3492, %v3536
        %s3545 = sld [smem:[#allocation9 + $0x26]]
        %v3546 = vstv %s3545
        %v3547 = vmul.f32 %v3546, %v3512
        %v3548 = vmul.f32 %v3546, %v3514
        %v3549 = vmul.f32 %v3546, %v3516
        %v3550 = vmul.f32 %v3546, %v3518
        %v3551 = vmul.f32 %v3546, %v3520
        %v3552 = vmul.f32 %v3546, %v3522
        %v3553 = vmul.f32 %v3546, %v3524
        %v3554 = vmul.f32 %v3546, %v3526
        %v3555 = vadd.f32 %v3503, %v3547
        %v3556 = vadd.f32 %v3504, %v3548
        %v3557 = vadd.f32 %v3505, %v3549
        %v3558 = vadd.f32 %v3506, %v3550
        %v3559 = vadd.f32 %v3507, %v3551
        %v3560 = vadd.f32 %v3508, %v3552
        %v3561 = vadd.f32 %v3509, %v3553
        %v3562 = vadd.f32 %v3510, %v3554
        %3563 = vrot.lane.b32.xlu0 %v3384, 124
        %v3564 = vpop.permute.xlu0 %3563
        %3565 = vrot.lane.b32.xlu0 %v3386, 124
        %v3566 = vpop.permute.xlu0 %3565
        %3567 = vrot.lane.b32.xlu0 %v3388, 124
        %v3568 = vpop.permute.xlu0 %3567
        %3569 = vrot.lane.b32.xlu0 %v3390, 124
        %v3570 = vpop.permute.xlu0 %3569
        %3571 = vrot.lane.b32.xlu0 %v3392, 124
        %v3572 = vpop.permute.xlu0 %3571
        %3573 = vrot.lane.b32.xlu0 %v3394, 124
        %v3574 = vpop.permute.xlu0 %3573
        %3575 = vrot.lane.b32.xlu0 %v3396, 124
        %v3576 = vpop.permute.xlu0 %3575
        %3577 = vrot.lane.b32.xlu0 %v3398, 124
        %v3578 = vpop.permute.xlu0 %3577
        %s3579 = sld [smem:[#allocation9 + $0xe]]
        %v3580 = vstv %s3579
        %v3581 = vmul.f32 %v3580, %v3564
        %v3582 = vmul.f32 %v3580, %v3566
        %v3583 = vmul.f32 %v3580, %v3568
        %v3584 = vmul.f32 %v3580, %v3570
        %v3585 = vmul.f32 %v3580, %v3572
        %v3586 = vmul.f32 %v3580, %v3574
        %v3587 = vmul.f32 %v3580, %v3576
        %v3588 = vmul.f32 %v3580, %v3578
        %v3589 = vadd.f32 %v3537, %v3581
        %v3590 = vadd.f32 %v3538, %v3582
        %v3591 = vadd.f32 %v3539, %v3583
        %v3592 = vadd.f32 %v3540, %v3584
        %v3593 = vadd.f32 %v3541, %v3585
        %v3594 = vadd.f32 %v3542, %v3586
        %v3595 = vadd.f32 %v3543, %v3587
        %v3596 = vadd.f32 %v3544, %v3588
        %s3597 = sld [smem:[#allocation9 + $0x27]]
        %v3598 = vstv %s3597
        %v3599 = vmul.f32 %v3598, %v3564
        %v3600 = vmul.f32 %v3598, %v3566
        %v3601 = vmul.f32 %v3598, %v3568
        %v3602 = vmul.f32 %v3598, %v3570
        %v3603 = vmul.f32 %v3598, %v3572
        %v3604 = vmul.f32 %v3598, %v3574
        %v3605 = vmul.f32 %v3598, %v3576
        %v3606 = vmul.f32 %v3598, %v3578
        %v3607 = vadd.f32 %v3555, %v3599
        %v3608 = vadd.f32 %v3556, %v3600
        %v3609 = vadd.f32 %v3557, %v3601
        %v3610 = vadd.f32 %v3558, %v3602
        %v3611 = vadd.f32 %v3559, %v3603
        %v3612 = vadd.f32 %v3560, %v3604
        %v3613 = vadd.f32 %v3561, %v3605
        %v3614 = vadd.f32 %v3562, %v3606
        %s3615 = sld [smem:[#allocation9 + $0xf]]
        %v3616 = vstv %s3615
        %v3617 = vmul.f32 %v3616, %v2671
        %v3618 = vmul.f32 %v3616, %v2672
        %v3619 = vmul.f32 %v3616, %v2673
        %v3620 = vmul.f32 %v3616, %v2674
        %v3621 = vmul.f32 %v3616, %v2675
        %v3622 = vmul.f32 %v3616, %v2676
        %v3623 = vmul.f32 %v3616, %v2677
        %v3624 = vmul.f32 %v3616, %v2678
        %v3625 = vmul.f32 %v3616, %v2679
        %vm3635 = vcmask 1044480
        %v3636 = vrot.slane %v3617, 3
        %v3637 = vrot.slane %v3618, 3
        %v3638 = vsel %vm3635, %v3636, %v3637
        %v3639 = vrot.slane %v3619, 3
        %v3640 = vsel %vm3635, %v3637, %v3639
        %v3641 = vrot.slane %v3620, 3
        %v3642 = vsel %vm3635, %v3639, %v3641
        %v3643 = vrot.slane %v3621, 3
        %v3644 = vsel %vm3635, %v3641, %v3643
        %v3645 = vrot.slane %v3622, 3
        %v3646 = vsel %vm3635, %v3643, %v3645
        %v3647 = vrot.slane %v3623, 3
        %v3648 = vsel %vm3635, %v3645, %v3647
        %v3649 = vrot.slane %v3624, 3
        %v3650 = vsel %vm3635, %v3647, %v3649
        %v3651 = vrot.slane %v3625, 3
        %v3652 = vsel %vm3635, %v3649, %v3651
        %v3661 = vadd.f32 %v3589, %v3638
        %v3662 = vadd.f32 %v3590, %v3640
        %v3663 = vadd.f32 %v3591, %v3642
        %v3664 = vadd.f32 %v3592, %v3644
        %v3665 = vadd.f32 %v3593, %v3646
        %v3666 = vadd.f32 %v3594, %v3648
        %v3667 = vadd.f32 %v3595, %v3650
        %v3668 = vadd.f32 %v3596, %v3652
        %s3669 = sld [smem:[#allocation9 + $0x28]]
        %v3670 = vstv %s3669
        %v3671 = vmul.f32 %v3670, %v2671
        %v3672 = vmul.f32 %v3670, %v2672
        %v3673 = vmul.f32 %v3670, %v2673
        %v3674 = vmul.f32 %v3670, %v2674
        %v3675 = vmul.f32 %v3670, %v2675
        %v3676 = vmul.f32 %v3670, %v2676
        %v3677 = vmul.f32 %v3670, %v2677
        %v3678 = vmul.f32 %v3670, %v2678
        %v3679 = vmul.f32 %v3670, %v2679
        %v3689 = vrot.slane %v3671, 3
        %v3690 = vrot.slane %v3672, 3
        %v3691 = vsel %vm3635, %v3689, %v3690
        %v3692 = vrot.slane %v3673, 3
        %v3693 = vsel %vm3635, %v3690, %v3692
        %v3694 = vrot.slane %v3674, 3
        %v3695 = vsel %vm3635, %v3692, %v3694
        %v3696 = vrot.slane %v3675, 3
        %v3697 = vsel %vm3635, %v3694, %v3696
        %v3698 = vrot.slane %v3676, 3
        %v3699 = vsel %vm3635, %v3696, %v3698
        %v3700 = vrot.slane %v3677, 3
        %v3701 = vsel %vm3635, %v3698, %v3700
        %v3702 = vrot.slane %v3678, 3
        %v3703 = vsel %vm3635, %v3700, %v3702
        %v3704 = vrot.slane %v3679, 3
        %v3705 = vsel %vm3635, %v3702, %v3704
        %v3714 = vadd.f32 %v3607, %v3691
        %v3715 = vadd.f32 %v3608, %v3693
        %v3716 = vadd.f32 %v3609, %v3695
        %v3717 = vadd.f32 %v3610, %v3697
        %v3718 = vadd.f32 %v3611, %v3699
        %v3719 = vadd.f32 %v3612, %v3701
        %v3720 = vadd.f32 %v3613, %v3703
        %v3721 = vadd.f32 %v3614, %v3705
        %v3722 = vrot.slane %v2671, 3
        %v3723 = vrot.slane %v2672, 3
        %v3724 = vsel %vm3635, %v3722, %v3723
        %v3725 = vrot.slane %v2673, 3
        %v3726 = vsel %vm3635, %v3723, %v3725
        %v3727 = vrot.slane %v2674, 3
        %v3728 = vsel %vm3635, %v3725, %v3727
        %v3729 = vrot.slane %v2675, 3
        %v3730 = vsel %vm3635, %v3727, %v3729
        %v3731 = vrot.slane %v2676, 3
        %v3732 = vsel %vm3635, %v3729, %v3731
        %v3733 = vrot.slane %v2677, 3
        %v3734 = vsel %vm3635, %v3731, %v3733
        %v3735 = vrot.slane %v2678, 3
        %v3736 = vsel %vm3635, %v3733, %v3735
        %v3737 = vrot.slane %v2679, 3
        %v3738 = vsel %vm3635, %v3735, %v3737
        %3747 = vrot.lane.b32.xlu0 %v3724, 127
        %v3748 = vpop.permute.xlu0 %3747
        %3749 = vrot.lane.b32.xlu0 %v3726, 127
        %v3750 = vpop.permute.xlu0 %3749
        %3751 = vrot.lane.b32.xlu0 %v3728, 127
        %v3752 = vpop.permute.xlu0 %3751
        %3753 = vrot.lane.b32.xlu0 %v3730, 127
        %v3754 = vpop.permute.xlu0 %3753
        %3755 = vrot.lane.b32.xlu0 %v3732, 127
        %v3756 = vpop.permute.xlu0 %3755
        %3757 = vrot.lane.b32.xlu0 %v3734, 127
        %v3758 = vpop.permute.xlu0 %3757
        %3759 = vrot.lane.b32.xlu0 %v3736, 127
        %v3760 = vpop.permute.xlu0 %3759
        %3761 = vrot.lane.b32.xlu0 %v3738, 127
        %v3762 = vpop.permute.xlu0 %3761
        %s3763 = sld [smem:[#allocation9 + $0x10]]
        %v3764 = vstv %s3763
        %v3765 = vmul.f32 %v3764, %v3748
        %v3766 = vmul.f32 %v3764, %v3750
        %v3767 = vmul.f32 %v3764, %v3752
        %v3768 = vmul.f32 %v3764, %v3754
        %v3769 = vmul.f32 %v3764, %v3756
        %v3770 = vmul.f32 %v3764, %v3758
        %v3771 = vmul.f32 %v3764, %v3760
        %v3772 = vmul.f32 %v3764, %v3762
        %v3773 = vadd.f32 %v3661, %v3765
        %v3774 = vadd.f32 %v3662, %v3766
        %v3775 = vadd.f32 %v3663, %v3767
        %v3776 = vadd.f32 %v3664, %v3768
        %v3777 = vadd.f32 %v3665, %v3769
        %v3778 = vadd.f32 %v3666, %v3770
        %v3779 = vadd.f32 %v3667, %v3771
        %v3780 = vadd.f32 %v3668, %v3772
        %s3781 = sld [smem:[#allocation9 + $0x29]]
        %v3782 = vstv %s3781
        %v3783 = vmul.f32 %v3782, %v3748
        %v3784 = vmul.f32 %v3782, %v3750
        %v3785 = vmul.f32 %v3782, %v3752
        %v3786 = vmul.f32 %v3782, %v3754
        %v3787 = vmul.f32 %v3782, %v3756
        %v3788 = vmul.f32 %v3782, %v3758
        %v3789 = vmul.f32 %v3782, %v3760
        %v3790 = vmul.f32 %v3782, %v3762
        %v3791 = vadd.f32 %v3714, %v3783
        %v3792 = vadd.f32 %v3715, %v3784
        %v3793 = vadd.f32 %v3716, %v3785
        %v3794 = vadd.f32 %v3717, %v3786
        %v3795 = vadd.f32 %v3718, %v3787
        %v3796 = vadd.f32 %v3719, %v3788
        %v3797 = vadd.f32 %v3720, %v3789
        %v3798 = vadd.f32 %v3721, %v3790
        %3799 = vrot.lane.b32.xlu0 %v3724, 126
        %v3800 = vpop.permute.xlu0 %3799
        %3801 = vrot.lane.b32.xlu0 %v3726, 126
        %v3802 = vpop.permute.xlu0 %3801
        %3803 = vrot.lane.b32.xlu0 %v3728, 126
        %v3804 = vpop.permute.xlu0 %3803
        %3805 = vrot.lane.b32.xlu0 %v3730, 126
        %v3806 = vpop.permute.xlu0 %3805
        %3807 = vrot.lane.b32.xlu0 %v3732, 126
        %v3808 = vpop.permute.xlu0 %3807
        %3809 = vrot.lane.b32.xlu0 %v3734, 126
        %v3810 = vpop.permute.xlu0 %3809
        %3811 = vrot.lane.b32.xlu0 %v3736, 126
        %v3812 = vpop.permute.xlu0 %3811
        %3813 = vrot.lane.b32.xlu0 %v3738, 126
        %v3814 = vpop.permute.xlu0 %3813
        %s3815 = sld [smem:[#allocation9 + $0x11]]
        %v3816 = vstv %s3815
        %v3817 = vmul.f32 %v3816, %v3800
        %v3818 = vmul.f32 %v3816, %v3802
        %v3819 = vmul.f32 %v3816, %v3804
        %v3820 = vmul.f32 %v3816, %v3806
        %v3821 = vmul.f32 %v3816, %v3808
        %v3822 = vmul.f32 %v3816, %v3810
        %v3823 = vmul.f32 %v3816, %v3812
        %v3824 = vmul.f32 %v3816, %v3814
        %v3825 = vadd.f32 %v3773, %v3817
        %v3826 = vadd.f32 %v3774, %v3818
        %v3827 = vadd.f32 %v3775, %v3819
        %v3828 = vadd.f32 %v3776, %v3820
        %v3829 = vadd.f32 %v3777, %v3821
        %v3830 = vadd.f32 %v3778, %v3822
        %v3831 = vadd.f32 %v3779, %v3823
        %v3832 = vadd.f32 %v3780, %v3824
        %s3833 = sld [smem:[#allocation9 + $0x2a]]
        %v3834 = vstv %s3833
        %v3835 = vmul.f32 %v3834, %v3800
        %v3836 = vmul.f32 %v3834, %v3802
        %v3837 = vmul.f32 %v3834, %v3804
        %v3838 = vmul.f32 %v3834, %v3806
        %v3839 = vmul.f32 %v3834, %v3808
        %v3840 = vmul.f32 %v3834, %v3810
        %v3841 = vmul.f32 %v3834, %v3812
        %v3842 = vmul.f32 %v3834, %v3814
        %v3843 = vadd.f32 %v3791, %v3835
        %v3844 = vadd.f32 %v3792, %v3836
        %v3845 = vadd.f32 %v3793, %v3837
        %v3846 = vadd.f32 %v3794, %v3838
        %v3847 = vadd.f32 %v3795, %v3839
        %v3848 = vadd.f32 %v3796, %v3840
        %v3849 = vadd.f32 %v3797, %v3841
        %v3850 = vadd.f32 %v3798, %v3842
        %3851 = vrot.lane.b32.xlu0 %v3724, 125
        %v3852 = vpop.permute.xlu0 %3851
        %3853 = vrot.lane.b32.xlu0 %v3726, 125
        %v3854 = vpop.permute.xlu0 %3853
        %3855 = vrot.lane.b32.xlu0 %v3728, 125
        %v3856 = vpop.permute.xlu0 %3855
        %3857 = vrot.lane.b32.xlu0 %v3730, 125
        %v3858 = vpop.permute.xlu0 %3857
        %3859 = vrot.lane.b32.xlu0 %v3732, 125
        %v3860 = vpop.permute.xlu0 %3859
        %3861 = vrot.lane.b32.xlu0 %v3734, 125
        %v3862 = vpop.permute.xlu0 %3861
        %3863 = vrot.lane.b32.xlu0 %v3736, 125
        %v3864 = vpop.permute.xlu0 %3863
        %3865 = vrot.lane.b32.xlu0 %v3738, 125
        %v3866 = vpop.permute.xlu0 %3865
        %s3867 = sld [smem:[#allocation9 + $0x12]]
        %v3868 = vstv %s3867
        %v3869 = vmul.f32 %v3868, %v3852
        %v3870 = vmul.f32 %v3868, %v3854
        %v3871 = vmul.f32 %v3868, %v3856
        %v3872 = vmul.f32 %v3868, %v3858
        %v3873 = vmul.f32 %v3868, %v3860
        %v3874 = vmul.f32 %v3868, %v3862
        %v3875 = vmul.f32 %v3868, %v3864
        %v3876 = vmul.f32 %v3868, %v3866
        %v3877 = vadd.f32 %v3825, %v3869
        %v3878 = vadd.f32 %v3826, %v3870
        %v3879 = vadd.f32 %v3827, %v3871
        %v3880 = vadd.f32 %v3828, %v3872
        %v3881 = vadd.f32 %v3829, %v3873
        %v3882 = vadd.f32 %v3830, %v3874
        %v3883 = vadd.f32 %v3831, %v3875
        %v3884 = vadd.f32 %v3832, %v3876
        %s3885 = sld [smem:[#allocation9 + $0x2b]]
        %v3886 = vstv %s3885
        %v3887 = vmul.f32 %v3886, %v3852
        %v3888 = vmul.f32 %v3886, %v3854
        %v3889 = vmul.f32 %v3886, %v3856
        %v3890 = vmul.f32 %v3886, %v3858
        %v3891 = vmul.f32 %v3886, %v3860
        %v3892 = vmul.f32 %v3886, %v3862
        %v3893 = vmul.f32 %v3886, %v3864
        %v3894 = vmul.f32 %v3886, %v3866
        %v3895 = vadd.f32 %v3843, %v3887
        %v3896 = vadd.f32 %v3844, %v3888
        %v3897 = vadd.f32 %v3845, %v3889
        %v3898 = vadd.f32 %v3846, %v3890
        %v3899 = vadd.f32 %v3847, %v3891
        %v3900 = vadd.f32 %v3848, %v3892
        %v3901 = vadd.f32 %v3849, %v3893
        %v3902 = vadd.f32 %v3850, %v3894
        %3903 = vrot.lane.b32.xlu0 %v3724, 124
        %v3904 = vpop.permute.xlu0 %3903
        %3905 = vrot.lane.b32.xlu0 %v3726, 124
        %v3906 = vpop.permute.xlu0 %3905
        %3907 = vrot.lane.b32.xlu0 %v3728, 124
        %v3908 = vpop.permute.xlu0 %3907
        %3909 = vrot.lane.b32.xlu0 %v3730, 124
        %v3910 = vpop.permute.xlu0 %3909
        %3911 = vrot.lane.b32.xlu0 %v3732, 124
        %v3912 = vpop.permute.xlu0 %3911
        %3913 = vrot.lane.b32.xlu0 %v3734, 124
        %v3914 = vpop.permute.xlu0 %3913
        %3915 = vrot.lane.b32.xlu0 %v3736, 124
        %v3916 = vpop.permute.xlu0 %3915
        %3917 = vrot.lane.b32.xlu0 %v3738, 124
        %v3918 = vpop.permute.xlu0 %3917
        %s3919 = sld [smem:[#allocation9 + $0x13]]
        %v3920 = vstv %s3919
        %v3921 = vmul.f32 %v3920, %v3904
        %v3922 = vmul.f32 %v3920, %v3906
        %v3923 = vmul.f32 %v3920, %v3908
        %v3924 = vmul.f32 %v3920, %v3910
        %v3925 = vmul.f32 %v3920, %v3912
        %v3926 = vmul.f32 %v3920, %v3914
        %v3927 = vmul.f32 %v3920, %v3916
        %v3928 = vmul.f32 %v3920, %v3918
        %v3929 = vadd.f32 %v3877, %v3921
        %v3930 = vadd.f32 %v3878, %v3922
        %v3931 = vadd.f32 %v3879, %v3923
        %v3932 = vadd.f32 %v3880, %v3924
        %v3933 = vadd.f32 %v3881, %v3925
        %v3934 = vadd.f32 %v3882, %v3926
        %v3935 = vadd.f32 %v3883, %v3927
        %v3936 = vadd.f32 %v3884, %v3928
        %s3937 = sld [smem:[#allocation9 + $0x2c]]
        %v3938 = vstv %s3937
        %v3939 = vmul.f32 %v3938, %v3904
        %v3940 = vmul.f32 %v3938, %v3906
        %v3941 = vmul.f32 %v3938, %v3908
        %v3942 = vmul.f32 %v3938, %v3910
        %v3943 = vmul.f32 %v3938, %v3912
        %v3944 = vmul.f32 %v3938, %v3914
        %v3945 = vmul.f32 %v3938, %v3916
        %v3946 = vmul.f32 %v3938, %v3918
        %v3947 = vadd.f32 %v3895, %v3939
        %v3948 = vadd.f32 %v3896, %v3940
        %v3949 = vadd.f32 %v3897, %v3941
        %v3950 = vadd.f32 %v3898, %v3942
        %v3951 = vadd.f32 %v3899, %v3943
        %v3952 = vadd.f32 %v3900, %v3944
        %v3953 = vadd.f32 %v3901, %v3945
        %v3954 = vadd.f32 %v3902, %v3946
        %s3955 = sld [smem:[#allocation9 + $0x14]]
        %v3956 = vstv %s3955
        %v3957 = vmul.f32 %v3956, %v2671
        %v3958 = vmul.f32 %v3956, %v2672
        %v3959 = vmul.f32 %v3956, %v2673
        %v3960 = vmul.f32 %v3956, %v2674
        %v3961 = vmul.f32 %v3956, %v2675
        %v3962 = vmul.f32 %v3956, %v2676
        %v3963 = vmul.f32 %v3956, %v2677
        %v3964 = vmul.f32 %v3956, %v2678
        %v3965 = vmul.f32 %v3956, %v2679
        %vm3975 = vcmask 1043456
        %v3976 = vrot.slane %v3957, 4
        %v3977 = vrot.slane %v3958, 4
        %v3978 = vsel %vm3975, %v3976, %v3977
        %v3979 = vrot.slane %v3959, 4
        %v3980 = vsel %vm3975, %v3977, %v3979
        %v3981 = vrot.slane %v3960, 4
        %v3982 = vsel %vm3975, %v3979, %v3981
        %v3983 = vrot.slane %v3961, 4
        %v3984 = vsel %vm3975, %v3981, %v3983
        %v3985 = vrot.slane %v3962, 4
        %v3986 = vsel %vm3975, %v3983, %v3985
        %v3987 = vrot.slane %v3963, 4
        %v3988 = vsel %vm3975, %v3985, %v3987
        %v3989 = vrot.slane %v3964, 4
        %v3990 = vsel %vm3975, %v3987, %v3989
        %v3991 = vrot.slane %v3965, 4
        %v3992 = vsel %vm3975, %v3989, %v3991
        %v4001 = vadd.f32 %v3929, %v3978
        %v4002 = vadd.f32 %v3930, %v3980
        %v4003 = vadd.f32 %v3931, %v3982
        %v4004 = vadd.f32 %v3932, %v3984
        %v4005 = vadd.f32 %v3933, %v3986
        %v4006 = vadd.f32 %v3934, %v3988
        %v4007 = vadd.f32 %v3935, %v3990
        %v4008 = vadd.f32 %v3936, %v3992
        %s4009 = sld [smem:[#allocation9 + $0x2d]]
        %v4010 = vstv %s4009
        %v4011 = vmul.f32 %v4010, %v2671
        %v4012 = vmul.f32 %v4010, %v2672
        %v4013 = vmul.f32 %v4010, %v2673
        %v4014 = vmul.f32 %v4010, %v2674
        %v4015 = vmul.f32 %v4010, %v2675
        %v4016 = vmul.f32 %v4010, %v2676
        %v4017 = vmul.f32 %v4010, %v2677
        %v4018 = vmul.f32 %v4010, %v2678
        %v4019 = vmul.f32 %v4010, %v2679
        %v4029 = vrot.slane %v4011, 4
        %v4030 = vrot.slane %v4012, 4
        %v4031 = vsel %vm3975, %v4029, %v4030
        %v4032 = vrot.slane %v4013, 4
        %v4033 = vsel %vm3975, %v4030, %v4032
        %v4034 = vrot.slane %v4014, 4
        %v4035 = vsel %vm3975, %v4032, %v4034
        %v4036 = vrot.slane %v4015, 4
        %v4037 = vsel %vm3975, %v4034, %v4036
        %v4038 = vrot.slane %v4016, 4
        %v4039 = vsel %vm3975, %v4036, %v4038
        %v4040 = vrot.slane %v4017, 4
        %v4041 = vsel %vm3975, %v4038, %v4040
        %v4042 = vrot.slane %v4018, 4
        %v4043 = vsel %vm3975, %v4040, %v4042
        %v4044 = vrot.slane %v4019, 4
        %v4045 = vsel %vm3975, %v4042, %v4044
        %v4054 = vadd.f32 %v3947, %v4031
        %v4055 = vadd.f32 %v3948, %v4033
        %v4056 = vadd.f32 %v3949, %v4035
        %v4057 = vadd.f32 %v3950, %v4037
        %v4058 = vadd.f32 %v3951, %v4039
        %v4059 = vadd.f32 %v3952, %v4041
        %v4060 = vadd.f32 %v3953, %v4043
        %v4061 = vadd.f32 %v3954, %v4045
        %v4062 = vrot.slane %v2671, 4
        %v4063 = vrot.slane %v2672, 4
        %v4064 = vsel %vm3975, %v4062, %v4063
        %v4065 = vrot.slane %v2673, 4
        %v4066 = vsel %vm3975, %v4063, %v4065
        %v4067 = vrot.slane %v2674, 4
        %v4068 = vsel %vm3975, %v4065, %v4067
        %v4069 = vrot.slane %v2675, 4
        %v4070 = vsel %vm3975, %v4067, %v4069
        %v4071 = vrot.slane %v2676, 4
        %v4072 = vsel %vm3975, %v4069, %v4071
        %v4073 = vrot.slane %v2677, 4
        %v4074 = vsel %vm3975, %v4071, %v4073
        %v4075 = vrot.slane %v2678, 4
        %v4076 = vsel %vm3975, %v4073, %v4075
        %v4077 = vrot.slane %v2679, 4
        %v4078 = vsel %vm3975, %v4075, %v4077
        %4087 = vrot.lane.b32.xlu0 %v4064, 127
        %v4088 = vpop.permute.xlu0 %4087
        %4089 = vrot.lane.b32.xlu0 %v4066, 127
        %v4090 = vpop.permute.xlu0 %4089
        %4091 = vrot.lane.b32.xlu0 %v4068, 127
        %v4092 = vpop.permute.xlu0 %4091
        %4093 = vrot.lane.b32.xlu0 %v4070, 127
        %v4094 = vpop.permute.xlu0 %4093
        %4095 = vrot.lane.b32.xlu0 %v4072, 127
        %v4096 = vpop.permute.xlu0 %4095
        %4097 = vrot.lane.b32.xlu0 %v4074, 127
        %v4098 = vpop.permute.xlu0 %4097
        %4099 = vrot.lane.b32.xlu0 %v4076, 127
        %v4100 = vpop.permute.xlu0 %4099
        %4101 = vrot.lane.b32.xlu0 %v4078, 127
        %v4102 = vpop.permute.xlu0 %4101
        %s4103 = sld [smem:[#allocation9 + $0x15]]
        %v4104 = vstv %s4103
        %v4105 = vmul.f32 %v4104, %v4088
        %v4106 = vmul.f32 %v4104, %v4090
        %v4107 = vmul.f32 %v4104, %v4092
        %v4108 = vmul.f32 %v4104, %v4094
        %v4109 = vmul.f32 %v4104, %v4096
        %v4110 = vmul.f32 %v4104, %v4098
        %v4111 = vmul.f32 %v4104, %v4100
        %v4112 = vmul.f32 %v4104, %v4102
        %v4113 = vadd.f32 %v4001, %v4105
        %v4114 = vadd.f32 %v4002, %v4106
        %v4115 = vadd.f32 %v4003, %v4107
        %v4116 = vadd.f32 %v4004, %v4108
        %v4117 = vadd.f32 %v4005, %v4109
        %v4118 = vadd.f32 %v4006, %v4110
        %v4119 = vadd.f32 %v4007, %v4111
        %v4120 = vadd.f32 %v4008, %v4112
        %s4121 = sld [smem:[#allocation9 + $0x2e]]
        %v4122 = vstv %s4121
        %v4123 = vmul.f32 %v4122, %v4088
        %v4124 = vmul.f32 %v4122, %v4090
        %v4125 = vmul.f32 %v4122, %v4092
        %v4126 = vmul.f32 %v4122, %v4094
        %v4127 = vmul.f32 %v4122, %v4096
        %v4128 = vmul.f32 %v4122, %v4098
        %v4129 = vmul.f32 %v4122, %v4100
        %v4130 = vmul.f32 %v4122, %v4102
        %v4131 = vadd.f32 %v4054, %v4123
        %v4132 = vadd.f32 %v4055, %v4124
        %v4133 = vadd.f32 %v4056, %v4125
        %v4134 = vadd.f32 %v4057, %v4126
        %v4135 = vadd.f32 %v4058, %v4127
        %v4136 = vadd.f32 %v4059, %v4128
        %v4137 = vadd.f32 %v4060, %v4129
        %v4138 = vadd.f32 %v4061, %v4130
        %4139 = vrot.lane.b32.xlu0 %v4064, 126
        %v4140 = vpop.permute.xlu0 %4139
        %4141 = vrot.lane.b32.xlu0 %v4066, 126
        %v4142 = vpop.permute.xlu0 %4141
        %4143 = vrot.lane.b32.xlu0 %v4068, 126
        %v4144 = vpop.permute.xlu0 %4143
        %4145 = vrot.lane.b32.xlu0 %v4070, 126
        %v4146 = vpop.permute.xlu0 %4145
        %4147 = vrot.lane.b32.xlu0 %v4072, 126
        %v4148 = vpop.permute.xlu0 %4147
        %4149 = vrot.lane.b32.xlu0 %v4074, 126
        %v4150 = vpop.permute.xlu0 %4149
        %4151 = vrot.lane.b32.xlu0 %v4076, 126
        %v4152 = vpop.permute.xlu0 %4151
        %4153 = vrot.lane.b32.xlu0 %v4078, 126
        %v4154 = vpop.permute.xlu0 %4153
        %s4155 = sld [smem:[#allocation9 + $0x16]]
        %v4156 = vstv %s4155
        %v4157 = vmul.f32 %v4156, %v4140
        %v4158 = vmul.f32 %v4156, %v4142
        %v4159 = vmul.f32 %v4156, %v4144
        %v4160 = vmul.f32 %v4156, %v4146
        %v4161 = vmul.f32 %v4156, %v4148
        %v4162 = vmul.f32 %v4156, %v4150
        %v4163 = vmul.f32 %v4156, %v4152
        %v4164 = vmul.f32 %v4156, %v4154
        %v4165 = vadd.f32 %v4113, %v4157
        %v4166 = vadd.f32 %v4114, %v4158
        %v4167 = vadd.f32 %v4115, %v4159
        %v4168 = vadd.f32 %v4116, %v4160
        %v4169 = vadd.f32 %v4117, %v4161
        %v4170 = vadd.f32 %v4118, %v4162
        %v4171 = vadd.f32 %v4119, %v4163
        %v4172 = vadd.f32 %v4120, %v4164
        %s4173 = sld [smem:[#allocation9 + $0x2f]]
        %v4174 = vstv %s4173
        %v4175 = vmul.f32 %v4174, %v4140
        %v4176 = vmul.f32 %v4174, %v4142
        %v4177 = vmul.f32 %v4174, %v4144
        %v4178 = vmul.f32 %v4174, %v4146
        %v4179 = vmul.f32 %v4174, %v4148
        %v4180 = vmul.f32 %v4174, %v4150
        %v4181 = vmul.f32 %v4174, %v4152
        %v4182 = vmul.f32 %v4174, %v4154
        %v4183 = vadd.f32 %v4131, %v4175
        %v4184 = vadd.f32 %v4132, %v4176
        %v4185 = vadd.f32 %v4133, %v4177
        %v4186 = vadd.f32 %v4134, %v4178
        %v4187 = vadd.f32 %v4135, %v4179
        %v4188 = vadd.f32 %v4136, %v4180
        %v4189 = vadd.f32 %v4137, %v4181
        %v4190 = vadd.f32 %v4138, %v4182
        %4191 = vrot.lane.b32.xlu0 %v4064, 125
        %v4192 = vpop.permute.xlu0 %4191
        %4193 = vrot.lane.b32.xlu0 %v4066, 125
        %v4194 = vpop.permute.xlu0 %4193
        %4195 = vrot.lane.b32.xlu0 %v4068, 125
        %v4196 = vpop.permute.xlu0 %4195
        %4197 = vrot.lane.b32.xlu0 %v4070, 125
        %v4198 = vpop.permute.xlu0 %4197
        %4199 = vrot.lane.b32.xlu0 %v4072, 125
        %v4200 = vpop.permute.xlu0 %4199
        %4201 = vrot.lane.b32.xlu0 %v4074, 125
        %v4202 = vpop.permute.xlu0 %4201
        %4203 = vrot.lane.b32.xlu0 %v4076, 125
        %v4204 = vpop.permute.xlu0 %4203
        %4205 = vrot.lane.b32.xlu0 %v4078, 125
        %v4206 = vpop.permute.xlu0 %4205
        %s4207 = sld [smem:[#allocation9 + $0x17]]
        %v4208 = vstv %s4207
        %v4209 = vmul.f32 %v4208, %v4192
        %v4210 = vmul.f32 %v4208, %v4194
        %v4211 = vmul.f32 %v4208, %v4196
        %v4212 = vmul.f32 %v4208, %v4198
        %v4213 = vmul.f32 %v4208, %v4200
        %v4214 = vmul.f32 %v4208, %v4202
        %v4215 = vmul.f32 %v4208, %v4204
        %v4216 = vmul.f32 %v4208, %v4206
        %v4217 = vadd.f32 %v4165, %v4209
        %v4218 = vadd.f32 %v4166, %v4210
        %v4219 = vadd.f32 %v4167, %v4211
        %v4220 = vadd.f32 %v4168, %v4212
        %v4221 = vadd.f32 %v4169, %v4213
        %v4222 = vadd.f32 %v4170, %v4214
        %v4223 = vadd.f32 %v4171, %v4215
        %v4224 = vadd.f32 %v4172, %v4216
        %s4225 = sld [smem:[#allocation9 + $0x30]]
        %v4226 = vstv %s4225
        %v4227 = vmul.f32 %v4226, %v4192
        %v4228 = vmul.f32 %v4226, %v4194
        %v4229 = vmul.f32 %v4226, %v4196
        %v4230 = vmul.f32 %v4226, %v4198
        %v4231 = vmul.f32 %v4226, %v4200
        %v4232 = vmul.f32 %v4226, %v4202
        %v4233 = vmul.f32 %v4226, %v4204
        %v4234 = vmul.f32 %v4226, %v4206
        %v4235 = vadd.f32 %v4183, %v4227
        %v4236 = vadd.f32 %v4184, %v4228
        %v4237 = vadd.f32 %v4185, %v4229
        %v4238 = vadd.f32 %v4186, %v4230
        %v4239 = vadd.f32 %v4187, %v4231
        %v4240 = vadd.f32 %v4188, %v4232
        %v4241 = vadd.f32 %v4189, %v4233
        %v4242 = vadd.f32 %v4190, %v4234
        %4243 = vrot.lane.b32.xlu0 %v4064, 124
        %v4244 = vpop.permute.xlu0 %4243
        %4245 = vrot.lane.b32.xlu0 %v4066, 124
        %v4246 = vpop.permute.xlu0 %4245
        %4247 = vrot.lane.b32.xlu0 %v4068, 124
        %v4248 = vpop.permute.xlu0 %4247
        %4249 = vrot.lane.b32.xlu0 %v4070, 124
        %v4250 = vpop.permute.xlu0 %4249
        %4251 = vrot.lane.b32.xlu0 %v4072, 124
        %v4252 = vpop.permute.xlu0 %4251
        %4253 = vrot.lane.b32.xlu0 %v4074, 124
        %v4254 = vpop.permute.xlu0 %4253
        %4255 = vrot.lane.b32.xlu0 %v4076, 124
        %v4256 = vpop.permute.xlu0 %4255
        %4257 = vrot.lane.b32.xlu0 %v4078, 124
        %v4258 = vpop.permute.xlu0 %4257
        %s4259 = sld [smem:[#allocation9 + $0x18]]
        %v4260 = vstv %s4259
        %v4261 = vmul.f32 %v4260, %v4244
        %v4262 = vmul.f32 %v4260, %v4246
        %v4263 = vmul.f32 %v4260, %v4248
        %v4264 = vmul.f32 %v4260, %v4250
        %v4265 = vmul.f32 %v4260, %v4252
        %v4266 = vmul.f32 %v4260, %v4254
        %v4267 = vmul.f32 %v4260, %v4256
        %v4268 = vmul.f32 %v4260, %v4258
        %v4269 = vadd.f32 %v4217, %v4261
        %v4270 = vadd.f32 %v4218, %v4262
        %v4271 = vadd.f32 %v4219, %v4263
        %v4272 = vadd.f32 %v4220, %v4264
        %v4273 = vadd.f32 %v4221, %v4265
        %v4274 = vadd.f32 %v4222, %v4266
        %v4275 = vadd.f32 %v4223, %v4267
        %v4276 = vadd.f32 %v4224, %v4268
        %s4277 = sld [smem:[#allocation9 + $0x31]]
        %v4278 = vstv %s4277
        %v4279 = vmul.f32 %v4278, %v4244
        %v4280 = vmul.f32 %v4278, %v4246
        %v4281 = vmul.f32 %v4278, %v4248
        %v4282 = vmul.f32 %v4278, %v4250
        %v4283 = vmul.f32 %v4278, %v4252
        %v4284 = vmul.f32 %v4278, %v4254
        %v4285 = vmul.f32 %v4278, %v4256
        %v4286 = vmul.f32 %v4278, %v4258
        %v4287 = vadd.f32 %v4235, %v4279
        %v4288 = vadd.f32 %v4236, %v4280
        %v4289 = vadd.f32 %v4237, %v4281
        %v4290 = vadd.f32 %v4238, %v4282
        %v4291 = vadd.f32 %v4239, %v4283
        %v4292 = vadd.f32 %v4240, %v4284
        %v4293 = vadd.f32 %v4241, %v4285
        %v4294 = vadd.f32 %v4242, %v4286
        %4295 = vst [vmem:[%s284] sm:$0xff] %v4269
        %4296 = vst [vmem:[%s284 + $0x8] sm:$0xff] %v4270
        %4297 = vst [vmem:[%s284 + $0x10] sm:$0xff] %v4271
        %4298 = vst [vmem:[%s284 + $0x18] sm:$0xff] %v4272
        %4299 = vst [vmem:[%s284 + $0x20] sm:$0xff] %v4273
        %4300 = vst [vmem:[%s284 + $0x28] sm:$0xff] %v4274
        %4301 = vst [vmem:[%s284 + $0x30] sm:$0xff] %v4275
        %4302 = vst [vmem:[%s284 + $0x38] sm:$0xff] %v4276
        %s4303 = scalar_lea.vmem %s284, 64 [#allocation12]
        %4304 = vst [vmem:[%s4303] sm:$0xff] %v4287
        %4305 = vst [vmem:[%s4303 + $0x8] sm:$0xff] %v4288
        %4306 = vst [vmem:[%s4303 + $0x10] sm:$0xff] %v4289
        %4307 = vst [vmem:[%s4303 + $0x18] sm:$0xff] %v4290
        %4308 = vst [vmem:[%s4303 + $0x20] sm:$0xff] %v4291
        %4309 = vst [vmem:[%s4303 + $0x28] sm:$0xff] %v4292
        %4310 = vst [vmem:[%s4303 + $0x30] sm:$0xff] %v4293
        %4311 = vst [vmem:[%s4303 + $0x38] sm:$0xff] %v4294
        %s4312 = sand.u32 %s143, 1
        %s4313 = scalar_lea.sflag [#allocation6], %s4312
        %s4314 = sand.u32 %s143, 1
        %s4315 = smul.addr %s4314, 128
        %s4316 = scalar_lea.vmem [#allocation12], %s4315
        // Predicated region
        $region57: #{model_forward_padded.1} parent=39 // pred_check
          %p4317 = pneg %p153
        $region58: #{model_forward_padded.1} parent=39 // pred_check_branch
          %4319 = sbr.rel (%p4317) target = $region60
        $region59: #{model_forward_padded.1} parent=39 // pred_region
          %4321 = vsyncadd %s4313, 0
          %s4322 = smul.addr %s25, 16
          %s4323 = smul.addr %s4322, 8
          %s4324 = scalar_lea.hbm %s5, %s4323
          %s4325 = sshll.u32 %s4316, 4
          %s4326 = int_to_ptr.vmem [resolvable:$true] %s4325
          %s4327 = sshll.u32 %s4324, 4
          %s4328 = int_to_ptr.hbm [resolvable:$true] %s4327
          %4333 = dma.vmem_to_hbm [thread:$0]  %s4326, 2048, %s4328, %s4313, 128, 128, 8
        $region60: #{model_forward_padded.1} parent=39 // pred_fallthru
          _
      $region40: #{model_forward_padded.1} parent=5 // pred_fallthru
        _
      %p4334 = scmp.le.s32.totalorder 2, %s20
      // Predicated region
      $region61: #{model_forward_padded.1} parent=5 // pred_check
        %p4335 = pneg %p4334
      $region62: #{model_forward_padded.1} parent=5 // pred_check_branch
        %4337 = sbr.rel (%p4335) target = $region64
      $region63: #{model_forward_padded.1} parent=5 // pred_region
        %s4338 = ssub.s32 %s20, 2
        // Predicated region
        $region65: #{model_forward_padded.1} parent=63 // pred_check
          %p4339 = pneg %p159
        $region66: #{model_forward_padded.1} parent=63 // pred_check_branch
          %4341 = sbr.rel (%p4339) target = $region68
        $region67: #{model_forward_padded.1} parent=63 // pred_region
          %s4342 = sand.u32 %s144, 1
          %s4343 = scalar_lea.sflag [#allocation6], %s4342
          %s4344 = sand.u32 %s144, 1
          %s4345 = smul.addr %s4344, 128
          %s4346 = scalar_lea.vmem [#allocation12], %s4345
          %4348 = dma.done %s4343, 2048
        $region68: #{model_forward_padded.1} parent=63 // pred_fallthru
          _
      $region64: #{model_forward_padded.1} parent=5 // pred_fallthru
        _
    $region6: #{model_forward_padded.1} parent=1 // loop_footer
      %s24 = sadd.s32 1, %s20
    $region7: #{model_forward_padded.1} parent=1 // loop_footer_branch
      %19 = sbr.rel target = $region3
    $region8: #{model_forward_padded.1} parent=1 // loop_exit
      _
    %4349 = vsyncpa [#allocation5], 1
    %s4350 = scalar_lea.sflag [#allocation5], 1
    %4351 = vsyncpa %s4350, 1
    %4352 = vsyncpa [#allocation6], 1
    %s4353 = scalar_lea.sflag [#allocation6], 1
    %4354 = vsyncpa %s4353, 1
    %4355 = vsyncpa [#allocation7], 1
    %s4356 = scalar_lea.sflag [#allocation7], 1
    %4357 = vsyncpa %s4356, 1
    %4358 = vsyncpa [#allocation10], 1

</llo_original>
